<compile_context>
chip_gen: v6e
topology: v6e:2x2x1
jax: 0.10.0
libtpu: 0.0.40
codegen_flags: <defaults>
</compile_context>

<pallas_src>
import numpy as np
import jax
import jax.numpy as jnp
from jax.experimental import pallas as pl
from jax.experimental.pallas import tpu as pltpu


def _interp_matrix(n):
    """(2n, n) PyTorch-style bilinear 2x upsample matrix (align_corners=False).

    Row o holds the source weights for output position o:
      src = max((o + 0.5)/2 - 0.5, 0), j0 = floor(src), j1 = min(j0+1, n-1).
    Weights are in {0.0, 0.25, 0.75, 1.0} (exactly representable).
    """
    m = np.zeros((2 * n, n), dtype=np.float32)
    for o in range(2 * n):
        s = max((o + 0.5) / 2.0 - 0.5, 0.0)
        j0 = int(np.floor(s))
        j1 = min(j0 + 1, n - 1)
        frac = s - j0
        m[o, j0] += 1.0 - frac
        m[o, j1] += frac
    return m


def _pick_block_planes(nc, h, w, itemsize=4, vmem_budget_bytes=8 * 1024 * 1024):
    """Channels-per-grid-step: big enough to amortize per-step overhead, small
    enough that the double-buffered (input + output) tiles stay well inside the
    default scoped VMEM limit on every TPU generation, and leaving >= 2 grid
    steps so megacore (v7x: 2 TCs) can split the parallel axis."""
    per_plane = 2 * (h * w + 4 * h * w) * itemsize   # in + out, double-buffered
    cap = max(1, vmem_budget_bytes // per_plane)
    cap = min(cap, 8)                                # bounded in-kernel unroll
    if nc >= 2:
        cap = min(cap, max(1, nc // 2))              # keep >= 2 grid steps
    tb = 1
    for d in range(1, cap + 1):                      # largest divisor of nc <= cap
        if nc % d == 0:
            tb = d
    return tb


def _up2_kernel(a_ref, b_ref, x_ref, o_ref):
    # a_ref: (2H, H)  b_ref: (W, 2W)  x_ref: (TB, H, W)  o_ref: (TB, 2H, 2W)
    a = a_ref[...]
    b = b_ref[...]
    tb = x_ref.shape[0]
    for i in range(tb):                               # static unroll, tb <= 8
        x = x_ref[i].astype(jnp.float32)              # (H, W)
        # Column interpolation + column-parity interleave on the MXU.
        t = jnp.dot(x, b,
                    precision=jax.lax.Precision.HIGHEST,
                    preferred_element_type=jnp.float32)       # (H, 2W)
        # Row interpolation + row-parity interleave on the MXU.
        y = jnp.dot(a, t,
                    precision=jax.lax.Precision.HIGHEST,
                    preferred_element_type=jnp.float32)       # (2H, 2W)
        o_ref[i] = y.astype(o_ref.dtype)


def interpolate_bilinear_x2(x):
    """x: (N, C, H, W) float32 -> (N, C, 2H, 2W) float32."""
    N, C, H, W = x.shape
    NC = N * C
    x_flat = x.reshape(NC, H, W)

    a_row = jnp.asarray(_interp_matrix(H))            # (2H, H)
    b_col = jnp.asarray(_interp_matrix(W).T)          # (W, 2W)

    tb = _pick_block_planes(NC, H, W, itemsize=4)
    grid = (NC // tb,)

    flops = int(NC * (2 * H * W * (2 * W) + 2 * (2 * H) * H * (2 * W)))
    bytes_accessed = int(NC * 5 * H * W * x.dtype.itemsize
                         + (a_row.size + b_col.size) * 4)

    out = pl.pallas_call(
        _up2_kernel,
        out_shape=jax.ShapeDtypeStruct((NC, 2 * H, 2 * W), x.dtype),
        grid=grid,
        in_specs=[
            pl.BlockSpec((2 * H, H), lambda i: (0, 0)),        # A (resident)
            pl.BlockSpec((W, 2 * W), lambda i: (0, 0)),        # B (resident)
            pl.BlockSpec((tb, H, W), lambda i: (i, 0, 0)),     # input planes
        ],
        out_specs=pl.BlockSpec((tb, 2 * H, 2 * W), lambda i: (i, 0, 0)),
        compiler_params=pltpu.CompilerParams(
            dimension_semantics=("parallel",)),
        cost_estimate=pl.CostEstimate(
            flops=flops, transcendentals=0, bytes_accessed=bytes_accessed),
    )(a_row, b_col, x_flat)

    # Pure metadata reshape (row-major bitcast) back to NCHW.
    return out.reshape(N, C, 2 * H, 2 * W)


def _reference_numpy(x):
    # Direct per-pixel PyTorch-style bilinear (align_corners=False) reference.
    x = np.asarray(x, dtype=np.float64)
    N, C, H, W = x.shape
    Ho, Wo = 2 * H, 2 * W
    out = np.zeros((N, C, Ho, Wo), dtype=np.float64)
    for yo in range(Ho):
        sy = max((yo + 0.5) / 2.0 - 0.5, 0.0)
        y0 = int(np.floor(sy))
        y1 = min(y0 + 1, H - 1)
        ly = sy - y0
        for xo in range(Wo):
            sx = max((xo + 0.5) / 2.0 - 0.5, 0.0)
            x0 = int(np.floor(sx))
            x1 = min(x0 + 1, W - 1)
            lx = sx - x0
            out[:, :, yo, xo] = (
                (1 - ly) * (1 - lx) * x[:, :, y0, x0]
                + (1 - ly) * lx * x[:, :, y0, x1]
                + ly * (1 - lx) * x[:, :, y1, x0]
                + ly * lx * x[:, :, y1, x1]
            )
    return out.astype(np.float32)


if __name__ == "__main__":
    key = jax.random.PRNGKey(0)
    N, C, H, W = 2, 4, 16, 16
    x = jax.random.normal(key, (N, C, H, W), dtype=jnp.float32)

    fn = jax.jit(interpolate_bilinear_x2)
    y = jax.block_until_ready(fn(x))

    assert y.shape == (N, C, 2 * H, 2 * W), y.shape

    y_ref = _reference_numpy(np.asarray(x))
    # With Precision.HIGHEST the observed error is ~1e-6; tolerance is kept a
    # bit looser only to be robust across MXU f32 precision modes.
    np.testing.assert_allclose(np.asarray(y), y_ref, rtol=1e-3, atol=1e-3)

    print("KERNEL_OK")
</pallas_src>

<mosaic_0001>
module attributes {stable_mosaic.version = 11 : i64} {
  func.func @_up2_kernel(%arg0: i32, %arg1: memref<32x16xf32, #tpu.memory_space<vmem>>, %arg2: memref<16x32xf32, #tpu.memory_space<vmem>>, %arg3: memref<4x16x16xf32, #tpu.memory_space<vmem>>, %arg4: memref<4x32x32xf32, #tpu.memory_space<vmem>>) attributes {dimension_semantics = [#tpu.dimension_semantics<parallel>], iteration_bounds = array<i64: 2>, scalar_prefetch = 0 : i64, scratch_operands = 0 : i64, tpu.core_type = #tpu.core_type<tc>, window_params = [{pipeline_mode = #tpu.pipeline_mode<synchronous>, transform_indices = @transform_0, window_bounds = array<i64: 32, 16>}, {pipeline_mode = #tpu.pipeline_mode<synchronous>, transform_indices = @transform_1, window_bounds = array<i64: 16, 32>}, {transform_indices = @transform_2, window_bounds = array<i64: 4, 16, 16>}, {transform_indices = @transform_3, window_bounds = array<i64: 4, 32, 32>}]} {
    %c0 = arith.constant 0 : index
    %c0_0 = arith.constant 0 : index
    %0 = vector.load %arg1[%c0, %c0_0] : memref<32x16xf32, #tpu.memory_space<vmem>>, vector<32x16xf32>
    %c0_1 = arith.constant 0 : index
    %c0_2 = arith.constant 0 : index
    %1 = vector.load %arg2[%c0_1, %c0_2] : memref<16x32xf32, #tpu.memory_space<vmem>>, vector<16x32xf32>
    %c0_3 = arith.constant 0 : index
    %c0_4 = arith.constant 0 : index
    %c0_5 = arith.constant 0 : index
    %2 = vector.load %arg3[%c0_3, %c0_4, %c0_5] : memref<4x16x16xf32, #tpu.memory_space<vmem>>, vector<1x16x16xf32>
    %3 = vector.shape_cast %2 : vector<1x16x16xf32> to vector<16x16xf32>
    %cst = arith.constant dense<0.000000e+00> : vector<16x32xf32>
    %4 = tpu.matmul %3, %1, %cst {dimension_numbers = #tpu.dot_dimension_numbers<[1], [0], [0], [1], [0, 0, 1, 1], [], []>, precision = #tpu.contract_precision<fp32>} : vector<16x16xf32>, vector<16x32xf32>, vector<16x32xf32> -> vector<16x32xf32>
    %cst_6 = arith.constant dense<0.000000e+00> : vector<32x32xf32>
    %5 = tpu.matmul %0, %4, %cst_6 {dimension_numbers = #tpu.dot_dimension_numbers<[1], [0], [0], [1], [0, 0, 1, 1], [], []>, precision = #tpu.contract_precision<fp32>} : vector<32x16xf32>, vector<16x32xf32>, vector<32x32xf32> -> vector<32x32xf32>
    %c0_7 = arith.constant 0 : index
    %c0_8 = arith.constant 0 : index
    %c0_9 = arith.constant 0 : index
    %6 = vector.load %arg4[%c0_7, %c0_8, %c0_9] : memref<4x32x32xf32, #tpu.memory_space<vmem>>, vector<1x32x32xf32>
    %7 = vector.shape_cast %6 : vector<1x32x32xf32> to vector<32x32xf32>
    %8 = vector.shape_cast %5 : vector<32x32xf32> to vector<1x32x32xf32>
    tpu.vector_store %arg4[%c0_7, %c0_8, %c0_9], %8 {strides = array<i32>} : memref<4x32x32xf32, #tpu.memory_space<vmem>>, vector<1x32x32xf32>,
    %c1 = arith.constant 1 : index
    %c0_10 = arith.constant 0 : index
    %c0_11 = arith.constant 0 : index
    %9 = vector.load %arg3[%c1, %c0_10, %c0_11] : memref<4x16x16xf32, #tpu.memory_space<vmem>>, vector<1x16x16xf32>
    %10 = vector.shape_cast %9 : vector<1x16x16xf32> to vector<16x16xf32>
    %cst_12 = arith.constant dense<0.000000e+00> : vector<16x32xf32>
    %11 = tpu.matmul %10, %1, %cst_12 {dimension_numbers = #tpu.dot_dimension_numbers<[1], [0], [0], [1], [0, 0, 1, 1], [], []>, precision = #tpu.contract_precision<fp32>} : vector<16x16xf32>, vector<16x32xf32>, vector<16x32xf32> -> vector<16x32xf32>
    %cst_13 = arith.constant dense<0.000000e+00> : vector<32x32xf32>
    %12 = tpu.matmul %0, %11, %cst_13 {dimension_numbers = #tpu.dot_dimension_numbers<[1], [0], [0], [1], [0, 0, 1, 1], [], []>, precision = #tpu.contract_precision<fp32>} : vector<32x16xf32>, vector<16x32xf32>, vector<32x32xf32> -> vector<32x32xf32>
    %c1_14 = arith.constant 1 : index
    %c0_15 = arith.constant 0 : index
    %c0_16 = arith.constant 0 : index
    %13 = vector.load %arg4[%c1_14, %c0_15, %c0_16] : memref<4x32x32xf32, #tpu.memory_space<vmem>>, vector<1x32x32xf32>
    %14 = vector.shape_cast %13 : vector<1x32x32xf32> to vector<32x32xf32>
    %15 = vector.shape_cast %12 : vector<32x32xf32> to vector<1x32x32xf32>
    tpu.vector_store %arg4[%c1_14, %c0_15, %c0_16], %15 {strides = array<i32>} : memref<4x32x32xf32, #tpu.memory_space<vmem>>, vector<1x32x32xf32>,
    %c2 = arith.constant 2 : index
    %c0_17 = arith.constant 0 : index
    %c0_18 = arith.constant 0 : index
    %16 = vector.load %arg3[%c2, %c0_17, %c0_18] : memref<4x16x16xf32, #tpu.memory_space<vmem>>, vector<1x16x16xf32>
    %17 = vector.shape_cast %16 : vector<1x16x16xf32> to vector<16x16xf32>
    %cst_19 = arith.constant dense<0.000000e+00> : vector<16x32xf32>
    %18 = tpu.matmul %17, %1, %cst_19 {dimension_numbers = #tpu.dot_dimension_numbers<[1], [0], [0], [1], [0, 0, 1, 1], [], []>, precision = #tpu.contract_precision<fp32>} : vector<16x16xf32>, vector<16x32xf32>, vector<16x32xf32> -> vector<16x32xf32>
    %cst_20 = arith.constant dense<0.000000e+00> : vector<32x32xf32>
    %19 = tpu.matmul %0, %18, %cst_20 {dimension_numbers = #tpu.dot_dimension_numbers<[1], [0], [0], [1], [0, 0, 1, 1], [], []>, precision = #tpu.contract_precision<fp32>} : vector<32x16xf32>, vector<16x32xf32>, vector<32x32xf32> -> vector<32x32xf32>
    %c2_21 = arith.constant 2 : index
    %c0_22 = arith.constant 0 : index
    %c0_23 = arith.constant 0 : index
    %20 = vector.load %arg4[%c2_21, %c0_22, %c0_23] : memref<4x32x32xf32, #tpu.memory_space<vmem>>, vector<1x32x32xf32>
    %21 = vector.shape_cast %20 : vector<1x32x32xf32> to vector<32x32xf32>
    %22 = vector.shape_cast %19 : vector<32x32xf32> to vector<1x32x32xf32>
    tpu.vector_store %arg4[%c2_21, %c0_22, %c0_23], %22 {strides = array<i32>} : memref<4x32x32xf32, #tpu.memory_space<vmem>>, vector<1x32x32xf32>,
    %c3 = arith.constant 3 : index
    %c0_24 = arith.constant 0 : index
    %c0_25 = arith.constant 0 : index
    %23 = vector.load %arg3[%c3, %c0_24, %c0_25] : memref<4x16x16xf32, #tpu.memory_space<vmem>>, vector<1x16x16xf32>
    %24 = vector.shape_cast %23 : vector<1x16x16xf32> to vector<16x16xf32>
    %cst_26 = arith.constant dense<0.000000e+00> : vector<16x32xf32>
    %25 = tpu.matmul %24, %1, %cst_26 {dimension_numbers = #tpu.dot_dimension_numbers<[1], [0], [0], [1], [0, 0, 1, 1], [], []>, precision = #tpu.contract_precision<fp32>} : vector<16x16xf32>, vector<16x32xf32>, vector<16x32xf32> -> vector<16x32xf32>
    %cst_27 = arith.constant dense<0.000000e+00> : vector<32x32xf32>
    %26 = tpu.matmul %0, %25, %cst_27 {dimension_numbers = #tpu.dot_dimension_numbers<[1], [0], [0], [1], [0, 0, 1, 1], [], []>, precision = #tpu.contract_precision<fp32>} : vector<32x16xf32>, vector<16x32xf32>, vector<32x32xf32> -> vector<32x32xf32>
    %c3_28 = arith.constant 3 : index
    %c0_29 = arith.constant 0 : index
    %c0_30 = arith.constant 0 : index
    %27 = vector.load %arg4[%c3_28, %c0_29, %c0_30] : memref<4x32x32xf32, #tpu.memory_space<vmem>>, vector<1x32x32xf32>
    %28 = vector.shape_cast %27 : vector<1x32x32xf32> to vector<32x32xf32>
    %29 = vector.shape_cast %26 : vector<32x32xf32> to vector<1x32x32xf32>
    tpu.vector_store %arg4[%c3_28, %c0_29, %c0_30], %29 {strides = array<i32>} : memref<4x32x32xf32, #tpu.memory_space<vmem>>, vector<1x32x32xf32>,
    return
  }
  func.func @transform_0(%arg0: i32) -> (i32, i32) {
    %c0_i32 = arith.constant 0 : i32
    %c0_i32_0 = arith.constant 0 : i32
    %c0_i32_1 = arith.constant 0 : i32
    return %c0_i32, %c0_i32_0 : i32, i32
  }
  func.func @transform_1(%arg0: i32) -> (i32, i32) {
    %c0_i32 = arith.constant 0 : i32
    %c0_i32_0 = arith.constant 0 : i32
    %c0_i32_1 = arith.constant 0 : i32
    return %c0_i32, %c0_i32_0 : i32, i32
  }
  func.func @transform_2(%arg0: i32) -> (i32, i32, i32) {
    %c0_i32 = arith.constant 0 : i32
    %c0_i32_0 = arith.constant 0 : i32
    %c0_i32_1 = arith.constant 0 : i32
    return %arg0, %c0_i32, %c0_i32_0 : i32, i32, i32
  }
  func.func @transform_3(%arg0: i32) -> (i32, i32, i32) {
    %c0_i32 = arith.constant 0 : i32
    %c0_i32_0 = arith.constant 0 : i32
    %c0_i32_1 = arith.constant 0 : i32
    return %arg0, %c0_i32, %c0_i32_0 : i32, i32, i32
  }
}

</mosaic_0001>

<llo_original>
// kernel: interpolate_bilinear_x2.1
$region0: #{interpolate_bilinear_x2.1}
  #allocation0 [shape = 'u32[]', space=smem, size = 0x4, offset = 0x4, fixed_abs, tag = 'smem constant byte address 0x4 - core index']
  #allocation1 [shape = 'u32[144,128]{1,0:T(1,128)}', space=vmem, size = 0x12000, scoped, tag = 'internal scratch']
  %s0 = inlined_call_operand.hbm [shape: f32[32,16], index: 0, kind: input, shape index: {}]
  %s1 = inlined_call_operand.hbm [shape: f32[16,32], index: 1, kind: input, shape index: {}]
  %s2 = inlined_call_operand.hbm [shape: f32[8,16,16], index: 2, kind: input, shape index: {}]
  %s3 = inlined_call_operand.hbm [shape: f32[8,32,32], index: 3, kind: output, shape index: {}]
  %s4 = sld [smem:[#allocation0]]
  $region57: #{interpolate_bilinear_x2.1} parent=0
    _
  %s6 = ssub.s32 1, %s4
  %s7 = scalar_select 0, %s6, %s4
  $region1: #{interpolate_bilinear_x2.1} parent=0
    #allocation2 [shape = 'u8[16384]{0}', space=vmem, size = 0x4000, scoped, tag = 'input window, operand 0, single buffered']
    #allocation3 [shape = 's32[2]{0}', space=sflag, size = 0x8, scoped, tag = 'scoped memory for interpolate_bilinear_x2.1']
    #allocation4 [shape = 's32[2]{0}', space=sflag, size = 0x8, scoped, tag = 'scoped memory for interpolate_bilinear_x2.1']
    #allocation5 [shape = 'u8[8192]{0}', space=vmem, size = 0x2000, scoped, tag = 'input window, operand 1, single buffered']
    #allocation6 [shape = 's32[1]{0}', space=sflag, size = 0x4, scoped, tag = 'scoped memory for interpolate_bilinear_x2.1']
    #allocation7 [shape = 'u8[65536]{0}', space=vmem, size = 0x10000, scoped, tag = 'input window, operand 2']
    #allocation8 [shape = 'u8[131072]{0}', space=vmem, size = 0x20000, scoped, tag = 'output window, operand 0']
    %8 = vsyncpa [#allocation3], 0
    %9 = vsyncpa [#allocation6], 0
    %10 = vsyncpa [#allocation4], 0
    %s11 = scalar_lea.sflag [#allocation4], 1
    %12 = vsyncpa %s11, 0
    loop: start=0, step=1, limit=4
    $region2: #{interpolate_bilinear_x2.1} parent=1 // loop_pre_header
      _
    $region3: #{interpolate_bilinear_x2.1} parent=1 // loop_header
      %s14 = sphi 0, %s18
      %p15 = scmp.ge.s32.totalorder %s14, 4
      %s22 = sphi 0, %s22
      %s24 = sphi 0, %s22
      %s25 = sphi 0, %s24
      %s39 = sphi 0, %s25
      %s43 = sphi 0, %s43
      %s45 = sphi 0, %s43
      %s46 = sphi 0, %s45
      %s60 = sphi 0, %s46
      %s66 = sphi 0, %s68
      %s69 = sphi 0, %s66
      %s70 = sphi 0, %s69
      %s86 = sphi 0, %s70
      %s92 = sphi 0, %s94
      %s95 = sphi 0, %s92
      %s96 = sphi 0, %s95
      %s112 = sphi 0, %s96
    $region4: #{interpolate_bilinear_x2.1} parent=1 // loop_header_branch
      %17 = sbr.rel (%p15) target = $region8
    $region5: #{interpolate_bilinear_x2.1} parent=1 // loop_body
      %s19 = ssub.s32 %s14, 1
      %s20 = ssub.s32 %s14, 2
      %s21 = sadd.s32 %s14, 1
      %s23 = sadd.s32 %s22, 1
      %p26 = scmp.eq.s32.totalorder %s14, 1
      %p27 = scmp.ne.s32.totalorder %s22, %s24
      %p28 = scmp.eq.s32.totalorder %s14, 0
      %p29 = por %p27, %p28
      %p30 = scmp.ne.s32.totalorder %s22, %s24
      %p31 = scmp.eq.s32.totalorder %s19, 1
      %p32 = por %p30, %p31
      %p33 = scmp.ne.s32.totalorder %s24, %s25
      %p34 = scmp.eq.s32.totalorder %s19, 0
      %p35 = por %p33, %p34
      %p36 = scmp.ne.s32.totalorder %s24, %s25
      %p37 = scmp.eq.s32.totalorder %s20, 1
      %p38 = por %p36, %p37
      %p40 = scmp.ne.s32.totalorder %s25, %s39
      %p41 = scmp.eq.s32.totalorder %s20, 0
      %p42 = por %p40, %p41
      %s44 = sadd.s32 %s43, 1
      %p47 = scmp.eq.s32.totalorder %s14, 1
      %p48 = scmp.ne.s32.totalorder %s43, %s45
      %p49 = scmp.eq.s32.totalorder %s14, 0
      %p50 = por %p48, %p49
      %p51 = scmp.ne.s32.totalorder %s43, %s45
      %p52 = scmp.eq.s32.totalorder %s19, 1
      %p53 = por %p51, %p52
      %p54 = scmp.ne.s32.totalorder %s45, %s46
      %p55 = scmp.eq.s32.totalorder %s19, 0
      %p56 = por %p54, %p55
      %p57 = scmp.ne.s32.totalorder %s45, %s46
      %p58 = scmp.eq.s32.totalorder %s20, 1
      %p59 = por %p57, %p58
      %p61 = scmp.ne.s32.totalorder %s46, %s60
      %p62 = scmp.eq.s32.totalorder %s20, 0
      %p63 = por %p61, %p62
      %s64 = ssub.s32 %s14, %s21
      %p65 = scmp.eq.s32.totalorder %s64, 0
      %s67 = sadd.s32 %s66, 1
      %s68 = scalar_select %p65, %s66, %s67
      %p71 = pneg %p65
      %p72 = scmp.eq.s32.totalorder %s14, 1
      %p73 = por %p71, %p72
      %p74 = scmp.ne.s32.totalorder %s66, %s69
      %p75 = scmp.eq.s32.totalorder %s14, 0
      %p76 = por %p74, %p75
      %p77 = scmp.ne.s32.totalorder %s66, %s69
      %p78 = scmp.eq.s32.totalorder %s19, 1
      %p79 = por %p77, %p78
      %p80 = scmp.ne.s32.totalorder %s69, %s70
      %p81 = scmp.eq.s32.totalorder %s19, 0
      %p82 = por %p80, %p81
      %p83 = scmp.ne.s32.totalorder %s69, %s70
      %p84 = scmp.eq.s32.totalorder %s20, 1
      %p85 = por %p83, %p84
      %p87 = scmp.ne.s32.totalorder %s70, %s86
      %p88 = scmp.eq.s32.totalorder %s20, 0
      %p89 = por %p87, %p88
      %s90 = ssub.s32 %s14, %s21
      %p91 = scmp.eq.s32.totalorder %s90, 0
      %s93 = sadd.s32 %s92, 1
      %s94 = scalar_select %p91, %s92, %s93
      %p97 = pneg %p91
      %p98 = scmp.eq.s32.totalorder %s14, 1
      %p99 = por %p97, %p98
      %p100 = scmp.ne.s32.totalorder %s92, %s95
      %p101 = scmp.eq.s32.totalorder %s14, 0
      %p102 = por %p100, %p101
      %p103 = scmp.ne.s32.totalorder %s92, %s95
      %p104 = scmp.eq.s32.totalorder %s19, 1
      %p105 = por %p103, %p104
      %p106 = scmp.ne.s32.totalorder %s95, %s96
      %p107 = scmp.eq.s32.totalorder %s19, 0
      %p108 = por %p106, %p107
      %p109 = scmp.ne.s32.totalorder %s95, %s96
      %p110 = scmp.eq.s32.totalorder %s20, 1
      %p111 = por %p109, %p110
      %p113 = scmp.ne.s32.totalorder %s96, %s112
      %p114 = scmp.eq.s32.totalorder %s20, 0
      %p115 = por %p113, %p114
      %p116 = scmp.le.s32.totalorder 1, %s14
      %p117 = scmp.lt.s32.totalorder %s14, 3
      %p118 = pnand %p116, %p117
      %p119 = pneg %p118
      // Predicated region
      $region9: #{interpolate_bilinear_x2.1} parent=5 // pred_check
        _
      $region10: #{interpolate_bilinear_x2.1} parent=5 // pred_check_branch
        %121 = sbr.rel (%p118) target = $region12
      $region11: #{interpolate_bilinear_x2.1} parent=5 // pred_region
        %s122 = ssub.s32 %s14, 1
        // Predicated region
        $region13: #{interpolate_bilinear_x2.1} parent=11 // pred_check
          %p123 = pneg %p35
        $region14: #{interpolate_bilinear_x2.1} parent=11 // pred_check_branch
          %125 = sbr.rel (%p123) target = $region16
        $region15: #{interpolate_bilinear_x2.1} parent=11 // pred_region
          %s127 = ssub.s32 512, 512
          %128 = vsyncadd [#allocation3], %s127
          %s129 = sshll.u32 [#allocation2], 4
          %s130 = int_to_ptr.vmem [resolvable:$true] %s129
          %135 = dma.hbm_to_vmem [thread:$0]  %s0, 512, %s130, [#allocation3], 128, 128, 8
        $region16: #{interpolate_bilinear_x2.1} parent=11 // pred_fallthru
          _
        // Predicated region
        $region17: #{interpolate_bilinear_x2.1} parent=11 // pred_check
          %p136 = pneg %p56
        $region18: #{interpolate_bilinear_x2.1} parent=11 // pred_check_branch
          %138 = sbr.rel (%p136) target = $region20
        $region19: #{interpolate_bilinear_x2.1} parent=11 // pred_region
          %s140 = ssub.s32 256, 256
          %141 = vsyncadd [#allocation6], %s140
          %s142 = sshll.u32 [#allocation5], 4
          %s143 = int_to_ptr.vmem [resolvable:$true] %s142
          %148 = dma.hbm_to_vmem [thread:$0]  %s1, 256, %s143, [#allocation6], 128, 128, 8
        $region20: #{interpolate_bilinear_x2.1} parent=11 // pred_fallthru
          _
      $region12: #{interpolate_bilinear_x2.1} parent=5 // pred_fallthru
        _
      %p149 = scmp.lt.s32.totalorder %s14, 2
      // Predicated region
      $region21: #{interpolate_bilinear_x2.1} parent=5 // pred_check
        %p150 = pneg %p149
      $region22: #{interpolate_bilinear_x2.1} parent=5 // pred_check_branch
        %152 = sbr.rel (%p150) target = $region24
      $region23: #{interpolate_bilinear_x2.1} parent=5 // pred_region
        // Predicated region
        $region25: #{interpolate_bilinear_x2.1} parent=23 // pred_check
          %p153 = pneg %p76
        $region26: #{interpolate_bilinear_x2.1} parent=23 // pred_check_branch
          %155 = sbr.rel (%p153) target = $region28
        $region27: #{interpolate_bilinear_x2.1} parent=23 // pred_region
          %s156 = sand.u32 %s14, 1
          %s157 = scalar_lea.sflag [#allocation3], %s156
          %s158 = sand.u32 %s66, 1
          %s159 = smul.addr %s158, 64
          %s160 = scalar_lea.vmem [#allocation7], %s159
          %s161 = smul.u32 4, %s14
          %s163 = ssub.s32 1024, 1024
          %164 = vsyncadd %s157, %s163
          %s165 = smul.addr %s161, 2
          %s166 = smul.addr %s165, 128
          %s167 = scalar_lea.hbm %s2, %s166
          %s168 = sshll.u32 %s160, 4
          %s169 = int_to_ptr.vmem [resolvable:$true] %s168
          %174 = dma.hbm_to_vmem [thread:$0]  %s167, 1024, %s169, %s157, 128, 128, 8
        $region28: #{interpolate_bilinear_x2.1} parent=23 // pred_fallthru
          _
      $region24: #{interpolate_bilinear_x2.1} parent=5 // pred_fallthru
        _
      %p175 = scmp.le.s32.totalorder 1, %s14
      %p176 = scmp.lt.s32.totalorder %s14, 3
      %p177 = pnand %p175, %p176
      %p178 = pneg %p177
      // Predicated region
      $region29: #{interpolate_bilinear_x2.1} parent=5 // pred_check
        _
      $region30: #{interpolate_bilinear_x2.1} parent=5 // pred_check_branch
        %180 = sbr.rel (%p177) target = $region32
      $region31: #{interpolate_bilinear_x2.1} parent=5 // pred_region
        %s181 = ssub.s32 %s14, 1
        // Predicated region
        $region33: #{interpolate_bilinear_x2.1} parent=31 // pred_check
          %p182 = pneg %p35
        $region34: #{interpolate_bilinear_x2.1} parent=31 // pred_check_branch
          %184 = sbr.rel (%p182) target = $region36
        $region35: #{interpolate_bilinear_x2.1} parent=31 // pred_region
          %185 = dma.done [#allocation3], 512
        $region36: #{interpolate_bilinear_x2.1} parent=31 // pred_fallthru
          _
        // Predicated region
        $region37: #{interpolate_bilinear_x2.1} parent=31 // pred_check
          %p186 = pneg %p56
        $region38: #{interpolate_bilinear_x2.1} parent=31 // pred_check_branch
          %188 = sbr.rel (%p186) target = $region40
        $region39: #{interpolate_bilinear_x2.1} parent=31 // pred_region
          %189 = dma.done [#allocation6], 256
        $region40: #{interpolate_bilinear_x2.1} parent=31 // pred_fallthru
          _
        %s190 = sand.u32 %s19, 1
        %s191 = scalar_lea.sflag [#allocation3], %s190
        %s192 = sand.u32 %s69, 1
        %s193 = smul.addr %s192, 64
        %s194 = scalar_lea.vmem [#allocation7], %s193
        // Predicated region
        $region41: #{interpolate_bilinear_x2.1} parent=31 // pred_check
          %p195 = pneg %p82
        $region42: #{interpolate_bilinear_x2.1} parent=31 // pred_check_branch
          %197 = sbr.rel (%p195) target = $region44
        $region43: #{interpolate_bilinear_x2.1} parent=31 // pred_region
          %198 = dma.done %s191, 1024
        $region44: #{interpolate_bilinear_x2.1} parent=31 // pred_fallthru
          _
        %p199 = pneg %p35
        %p200 = pneg %p32
        %p201 = pneg %p56
        %p202 = pneg %p53
        %s203 = sand.u32 %s19, 1
        %s204 = scalar_lea.sflag [#allocation3], %s203
        %s205 = sand.u32 %s69, 1
        %s206 = smul.addr %s205, 64
        %s207 = scalar_lea.vmem [#allocation7], %s206
        %p208 = pneg %p82
        %p209 = pneg %p79
        %p210 = pneg %p108
        %p211 = pneg %p105
        %s212 = sand.u32 %s95, 1
        %s213 = scalar_lea.sflag [#allocation4], %s212
        %s214 = sand.u32 %s95, 1
        %s215 = smul.addr %s214, 128
        %s216 = scalar_lea.vmem [#allocation8], %s215
        %s217 = smul.u32 4, %s19
        %s218 = smul.u32 4, %s19
        %v219 = vld [vmem:[#allocation2] sm:$0xff]
        %v220 = vld [vmem:[#allocation2 + $0x8] sm:$0xff]
        %v221 = vld [vmem:[#allocation2 + $0x10] sm:$0xff]
        %v222 = vld [vmem:[#allocation2 + $0x18] sm:$0xff]
        %v223 = vld [vmem:[#allocation5] sm:$0xff]
        %v224 = vld [vmem:[#allocation5 + $0x8] sm:$0xff]
        %v225 = vld [vmem:[%s194] sm:$0xff]
        %v226 = vld [vmem:[%s194 + $0x8] sm:$0xff]
        %vm227 = vcmask 130048
        %v229 = vsel %vm227, %v225, 0
        %v232 = vsel %vm227, %v226, 0
        %234 = vmatprep.subr.mxu0 0.0
        %235 = vmatpush1.msra.mxu0 0.0
        %236 = vmatprep.subr.mxu0 0.0
        %237 = vmatpush1.msra.mxu0 0.0
        %238 = vmatprep.subr.mxu0 0.0
        %239 = vmatpush1.msra.mxu0 0.0
        %240 = vmatprep.subr.mxu0 0.0
        %241 = vmatpush1.msra.mxu0 0.0
        %242 = vmatprep.subr.mxu0 0.0
        %243 = vmatpush1.msra.mxu0 0.0
        %244 = vmatprep.subr.mxu0 0.0
        %245 = vmatpush1.msra.mxu0 0.0
        %246 = vmatprep.subr.mxu0 0.0
        %247 = vmatpush1.msra.mxu0 0.0
        %248 = vmatprep.subr.mxu0 0.0
        %249 = vmatpush1.msra.mxu0 0.0
        %250 = vmatprep.subr.mxu0 0.0
        %251 = vmatpush1.msra.mxu0 0.0
        %252 = vmatprep.subr.mxu0 0.0
        %253 = vmatpush1.msra.mxu0 0.0
        %254 = vmatprep.subr.mxu0 0.0
        %255 = vmatpush1.msra.mxu0 0.0
        %256 = vmatprep.subr.mxu0 0.0
        %257 = vmatpush1.msra.mxu0 0.0
        %258 = vmatprep.subr.mxu0 0.0
        %259 = vmatpush1.msra.mxu0 0.0
        %260 = vmatprep.subr.mxu0 0.0
        %261 = vmatpush1.msra.mxu0 0.0
        %262 = vmatprep.subr.mxu0 0.0
        %v263 = vand.u32 %v224, 4294901760
        %264 = vmatpush1.msra.mxu0 %v263
        %265 = vmatprep.subr.mxu0 0.0
        %v266 = vand.u32 %v223, 4294901760
        %267 = vmatpush1.msra.mxu0 %v266
        %268 = vmatprep.subr.mxu0 0.0
        %269 = vmatpush2.msra.mxu0 0.0
        %270 = vmatprep.subr.mxu0 0.0
        %271 = vmatpush2.msra.mxu0 0.0
        %272 = vmatprep.subr.mxu0 0.0
        %273 = vmatpush2.msra.mxu0 0.0
        %274 = vmatprep.subr.mxu0 0.0
        %275 = vmatpush2.msra.mxu0 0.0
        %276 = vmatprep.subr.mxu0 0.0
        %277 = vmatpush2.msra.mxu0 0.0
        %278 = vmatprep.subr.mxu0 0.0
        %279 = vmatpush2.msra.mxu0 0.0
        %280 = vmatprep.subr.mxu0 0.0
        %281 = vmatpush2.msra.mxu0 0.0
        %282 = vmatprep.subr.mxu0 0.0
        %283 = vmatpush2.msra.mxu0 0.0
        %284 = vmatprep.subr.mxu0 0.0
        %285 = vmatpush2.msra.mxu0 0.0
        %286 = vmatprep.subr.mxu0 0.0
        %287 = vmatpush2.msra.mxu0 0.0
        %288 = vmatprep.subr.mxu0 0.0
        %289 = vmatpush2.msra.mxu0 0.0
        %290 = vmatprep.subr.mxu0 0.0
        %291 = vmatpush2.msra.mxu0 0.0
        %292 = vmatprep.subr.mxu0 0.0
        %293 = vmatpush2.msra.mxu0 0.0
        %294 = vmatprep.subr.mxu0 0.0
        %295 = vmatpush2.msra.mxu0 0.0
        %296 = vmatprep.subr.mxu0 0.0
        %297 = vmatpush2.msra.mxu0 0.0
        %298 = vmatprep.subr.mxu0 0.0
        %299 = vmatpush2.msra.mxu0 0.0
        %300 = vmatprep.mubr.f32.mxu0 0.0
        %v301 = vand.u32 %v229, 4294901760
        %v302 = vsub.f32 %v229, %v301
        %v303 = vand.u32 %v302, 4294901760
        %v304 = vsub.f32 %v302, %v303
        %v305 = vand.u32 %v304, 4294901760
        %306 = vmatmul.mubr.f32.gmra.mxu0 %v305
        %v307 = vpop.f32.mrf.mxu0
        %v308 = vadd.f32 0.0, %v307
        %v309 = vpop.f32.mrf.mxu0
        %310 = vmatprep.mubr.f32.mxu0 0.0
        %v311 = vand.u32 %v232, 4294901760
        %v312 = vsub.f32 %v232, %v311
        %v313 = vand.u32 %v312, 4294901760
        %v314 = vsub.f32 %v312, %v313
        %v315 = vand.u32 %v314, 4294901760
        %316 = vmatmul.mubr.f32.gmra.mxu0 %v315
        %v317 = vpop.f32.mrf.mxu0
        %v318 = vadd.f32 0.0, %v317
        %v319 = vpop.f32.mrf.mxu0
        %320 = vdwg.mxu0
        %321 = vmatprep.subr.mxu0 0.0
        %322 = vmatpush1.msra.mxu0 0.0
        %323 = vmatprep.subr.mxu0 0.0
        %324 = vmatpush1.msra.mxu0 0.0
        %325 = vmatprep.subr.mxu0 0.0
        %326 = vmatpush1.msra.mxu0 0.0
        %327 = vmatprep.subr.mxu0 0.0
        %328 = vmatpush1.msra.mxu0 0.0
        %329 = vmatprep.subr.mxu0 0.0
        %330 = vmatpush1.msra.mxu0 0.0
        %331 = vmatprep.subr.mxu0 0.0
        %332 = vmatpush1.msra.mxu0 0.0
        %333 = vmatprep.subr.mxu0 0.0
        %334 = vmatpush1.msra.mxu0 0.0
        %335 = vmatprep.subr.mxu0 0.0
        %336 = vmatpush1.msra.mxu0 0.0
        %337 = vmatprep.subr.mxu0 0.0
        %338 = vmatpush1.msra.mxu0 0.0
        %339 = vmatprep.subr.mxu0 0.0
        %340 = vmatpush1.msra.mxu0 0.0
        %341 = vmatprep.subr.mxu0 0.0
        %342 = vmatpush1.msra.mxu0 0.0
        %343 = vmatprep.subr.mxu0 0.0
        %344 = vmatpush1.msra.mxu0 0.0
        %345 = vmatprep.subr.mxu0 0.0
        %346 = vmatpush1.msra.mxu0 0.0
        %347 = vmatprep.subr.mxu0 0.0
        %348 = vmatpush1.msra.mxu0 0.0
        %349 = vmatprep.subr.mxu0 0.0
        %v350 = vand.u32 %v224, 4294901760
        %v351 = vsub.f32 %v224, %v350
        %v352 = vand.u32 %v351, 4294901760
        %v353 = vsub.f32 %v351, %v352
        %v354 = vand.u32 %v353, 4294901760
        %355 = vmatpush1.msra.mxu0 %v354
        %356 = vmatprep.subr.mxu0 0.0
        %v357 = vand.u32 %v223, 4294901760
        %v358 = vsub.f32 %v223, %v357
        %v359 = vand.u32 %v358, 4294901760
        %v360 = vsub.f32 %v358, %v359
        %v361 = vand.u32 %v360, 4294901760
        %362 = vmatpush1.msra.mxu0 %v361
        %363 = vmatprep.subr.mxu0 0.0
        %364 = vmatpush2.msra.mxu0 0.0
        %365 = vmatprep.subr.mxu0 0.0
        %366 = vmatpush2.msra.mxu0 0.0
        %367 = vmatprep.subr.mxu0 0.0
        %368 = vmatpush2.msra.mxu0 0.0
        %369 = vmatprep.subr.mxu0 0.0
        %370 = vmatpush2.msra.mxu0 0.0
        %371 = vmatprep.subr.mxu0 0.0
        %372 = vmatpush2.msra.mxu0 0.0
        %373 = vmatprep.subr.mxu0 0.0
        %374 = vmatpush2.msra.mxu0 0.0
        %375 = vmatprep.subr.mxu0 0.0
        %376 = vmatpush2.msra.mxu0 0.0
        %377 = vmatprep.subr.mxu0 0.0
        %378 = vmatpush2.msra.mxu0 0.0
        %379 = vmatprep.subr.mxu0 0.0
        %380 = vmatpush2.msra.mxu0 0.0
        %381 = vmatprep.subr.mxu0 0.0
        %382 = vmatpush2.msra.mxu0 0.0
        %383 = vmatprep.subr.mxu0 0.0
        %384 = vmatpush2.msra.mxu0 0.0
        %385 = vmatprep.subr.mxu0 0.0
        %386 = vmatpush2.msra.mxu0 0.0
        %387 = vmatprep.subr.mxu0 0.0
        %388 = vmatpush2.msra.mxu0 0.0
        %389 = vmatprep.subr.mxu0 0.0
        %390 = vmatpush2.msra.mxu0 0.0
        %391 = vmatprep.subr.mxu0 0.0
        %392 = vmatpush2.msra.mxu0 0.0
        %393 = vmatprep.subr.mxu0 0.0
        %394 = vmatpush2.msra.mxu0 0.0
        %395 = vmatprep.mubr.f32.mxu0 0.0
        %v396 = vand.u32 %v229, 4294901760
        %397 = vmatmul.mubr.f32.gmra.mxu0 %v396
        %v398 = vpop.f32.mrf.mxu0
        %v399 = vadd.f32 %v308, %v398
        %v400 = vpop.f32.mrf.mxu0
        %401 = vmatprep.mubr.f32.mxu0 0.0
        %v402 = vand.u32 %v232, 4294901760
        %403 = vmatmul.mubr.f32.gmra.mxu0 %v402
        %v404 = vpop.f32.mrf.mxu0
        %v405 = vadd.f32 %v318, %v404
        %v406 = vpop.f32.mrf.mxu0
        %407 = vdwg.mxu0
        %408 = vmatprep.subr.mxu0 0.0
        %409 = vmatpush1.msra.mxu0 0.0
        %410 = vmatprep.subr.mxu0 0.0
        %411 = vmatpush1.msra.mxu0 0.0
        %412 = vmatprep.subr.mxu0 0.0
        %413 = vmatpush1.msra.mxu0 0.0
        %414 = vmatprep.subr.mxu0 0.0
        %415 = vmatpush1.msra.mxu0 0.0
        %416 = vmatprep.subr.mxu0 0.0
        %417 = vmatpush1.msra.mxu0 0.0
        %418 = vmatprep.subr.mxu0 0.0
        %419 = vmatpush1.msra.mxu0 0.0
        %420 = vmatprep.subr.mxu0 0.0
        %421 = vmatpush1.msra.mxu0 0.0
        %422 = vmatprep.subr.mxu0 0.0
        %423 = vmatpush1.msra.mxu0 0.0
        %424 = vmatprep.subr.mxu0 0.0
        %425 = vmatpush1.msra.mxu0 0.0
        %426 = vmatprep.subr.mxu0 0.0
        %427 = vmatpush1.msra.mxu0 0.0
        %428 = vmatprep.subr.mxu0 0.0
        %429 = vmatpush1.msra.mxu0 0.0
        %430 = vmatprep.subr.mxu0 0.0
        %431 = vmatpush1.msra.mxu0 0.0
        %432 = vmatprep.subr.mxu0 0.0
        %433 = vmatpush1.msra.mxu0 0.0
        %434 = vmatprep.subr.mxu0 0.0
        %435 = vmatpush1.msra.mxu0 0.0
        %436 = vmatprep.subr.mxu0 0.0
        %v437 = vand.u32 %v224, 4294901760
        %v438 = vsub.f32 %v224, %v437
        %439 = vmatpush1.msra.mxu0 %v438
        %440 = vmatprep.subr.mxu0 0.0
        %v441 = vand.u32 %v223, 4294901760
        %v442 = vsub.f32 %v223, %v441
        %443 = vmatpush1.msra.mxu0 %v442
        %444 = vmatprep.subr.mxu0 0.0
        %445 = vmatpush2.msra.mxu0 0.0
        %446 = vmatprep.subr.mxu0 0.0
        %447 = vmatpush2.msra.mxu0 0.0
        %448 = vmatprep.subr.mxu0 0.0
        %449 = vmatpush2.msra.mxu0 0.0
        %450 = vmatprep.subr.mxu0 0.0
        %451 = vmatpush2.msra.mxu0 0.0
        %452 = vmatprep.subr.mxu0 0.0
        %453 = vmatpush2.msra.mxu0 0.0
        %454 = vmatprep.subr.mxu0 0.0
        %455 = vmatpush2.msra.mxu0 0.0
        %456 = vmatprep.subr.mxu0 0.0
        %457 = vmatpush2.msra.mxu0 0.0
        %458 = vmatprep.subr.mxu0 0.0
        %459 = vmatpush2.msra.mxu0 0.0
        %460 = vmatprep.subr.mxu0 0.0
        %461 = vmatpush2.msra.mxu0 0.0
        %462 = vmatprep.subr.mxu0 0.0
        %463 = vmatpush2.msra.mxu0 0.0
        %464 = vmatprep.subr.mxu0 0.0
        %465 = vmatpush2.msra.mxu0 0.0
        %466 = vmatprep.subr.mxu0 0.0
        %467 = vmatpush2.msra.mxu0 0.0
        %468 = vmatprep.subr.mxu0 0.0
        %469 = vmatpush2.msra.mxu0 0.0
        %470 = vmatprep.subr.mxu0 0.0
        %471 = vmatpush2.msra.mxu0 0.0
        %472 = vmatprep.subr.mxu0 0.0
        %473 = vmatpush2.msra.mxu0 0.0
        %474 = vmatprep.subr.mxu0 0.0
        %475 = vmatpush2.msra.mxu0 0.0
        %476 = vmatprep.mubr.f32.mxu0 0.0
        %v477 = vand.u32 %v229, 4294901760
        %v478 = vsub.f32 %v229, %v477
        %479 = vmatmul.mubr.f32.gmra.mxu0 %v478
        %v480 = vpop.f32.mrf.mxu0
        %v481 = vadd.f32 %v399, %v480
        %v482 = vpop.f32.mrf.mxu0
        %483 = vmatprep.mubr.f32.mxu0 0.0
        %v484 = vand.u32 %v232, 4294901760
        %v485 = vsub.f32 %v232, %v484
        %486 = vmatmul.mubr.f32.gmra.mxu0 %v485
        %v487 = vpop.f32.mrf.mxu0
        %v488 = vadd.f32 %v405, %v487
        %v489 = vpop.f32.mrf.mxu0
        %490 = vdwg.mxu0
        %491 = vmatprep.subr.mxu0 0.0
        %492 = vmatpush1.msra.mxu0 0.0
        %493 = vmatprep.subr.mxu0 0.0
        %494 = vmatpush1.msra.mxu0 0.0
        %495 = vmatprep.subr.mxu0 0.0
        %496 = vmatpush1.msra.mxu0 0.0
        %497 = vmatprep.subr.mxu0 0.0
        %498 = vmatpush1.msra.mxu0 0.0
        %499 = vmatprep.subr.mxu0 0.0
        %500 = vmatpush1.msra.mxu0 0.0
        %501 = vmatprep.subr.mxu0 0.0
        %502 = vmatpush1.msra.mxu0 0.0
        %503 = vmatprep.subr.mxu0 0.0
        %504 = vmatpush1.msra.mxu0 0.0
        %505 = vmatprep.subr.mxu0 0.0
        %506 = vmatpush1.msra.mxu0 0.0
        %507 = vmatprep.subr.mxu0 0.0
        %508 = vmatpush1.msra.mxu0 0.0
        %509 = vmatprep.subr.mxu0 0.0
        %510 = vmatpush1.msra.mxu0 0.0
        %511 = vmatprep.subr.mxu0 0.0
        %512 = vmatpush1.msra.mxu0 0.0
        %513 = vmatprep.subr.mxu0 0.0
        %514 = vmatpush1.msra.mxu0 0.0
        %515 = vmatprep.subr.mxu0 0.0
        %516 = vmatpush1.msra.mxu0 0.0
        %517 = vmatprep.subr.mxu0 0.0
        %518 = vmatpush1.msra.mxu0 0.0
        %519 = vmatprep.subr.mxu0 0.0
        %v520 = vand.u32 %v224, 4294901760
        %521 = vmatpush1.msra.mxu0 %v520
        %522 = vmatprep.subr.mxu0 0.0
        %v523 = vand.u32 %v223, 4294901760
        %524 = vmatpush1.msra.mxu0 %v523
        %525 = vmatprep.subr.mxu0 0.0
        %526 = vmatpush2.msra.mxu0 0.0
        %527 = vmatprep.subr.mxu0 0.0
        %528 = vmatpush2.msra.mxu0 0.0
        %529 = vmatprep.subr.mxu0 0.0
        %530 = vmatpush2.msra.mxu0 0.0
        %531 = vmatprep.subr.mxu0 0.0
        %532 = vmatpush2.msra.mxu0 0.0
        %533 = vmatprep.subr.mxu0 0.0
        %534 = vmatpush2.msra.mxu0 0.0
        %535 = vmatprep.subr.mxu0 0.0
        %536 = vmatpush2.msra.mxu0 0.0
        %537 = vmatprep.subr.mxu0 0.0
        %538 = vmatpush2.msra.mxu0 0.0
        %539 = vmatprep.subr.mxu0 0.0
        %540 = vmatpush2.msra.mxu0 0.0
        %541 = vmatprep.subr.mxu0 0.0
        %542 = vmatpush2.msra.mxu0 0.0
        %543 = vmatprep.subr.mxu0 0.0
        %544 = vmatpush2.msra.mxu0 0.0
        %545 = vmatprep.subr.mxu0 0.0
        %546 = vmatpush2.msra.mxu0 0.0
        %547 = vmatprep.subr.mxu0 0.0
        %548 = vmatpush2.msra.mxu0 0.0
        %549 = vmatprep.subr.mxu0 0.0
        %550 = vmatpush2.msra.mxu0 0.0
        %551 = vmatprep.subr.mxu0 0.0
        %552 = vmatpush2.msra.mxu0 0.0
        %553 = vmatprep.subr.mxu0 0.0
        %554 = vmatpush2.msra.mxu0 0.0
        %555 = vmatprep.subr.mxu0 0.0
        %556 = vmatpush2.msra.mxu0 0.0
        %557 = vmatprep.mubr.f32.mxu0 0.0
        %v558 = vand.u32 %v229, 4294901760
        %v559 = vsub.f32 %v229, %v558
        %v560 = vand.u32 %v559, 4294901760
        %561 = vmatmul.mubr.f32.gmra.mxu0 %v560
        %v562 = vpop.f32.mrf.mxu0
        %v563 = vadd.f32 %v481, %v562
        %v564 = vpop.f32.mrf.mxu0
        %565 = vmatprep.mubr.f32.mxu0 0.0
        %v566 = vand.u32 %v232, 4294901760
        %v567 = vsub.f32 %v232, %v566
        %v568 = vand.u32 %v567, 4294901760
        %569 = vmatmul.mubr.f32.gmra.mxu0 %v568
        %v570 = vpop.f32.mrf.mxu0
        %v571 = vadd.f32 %v488, %v570
        %v572 = vpop.f32.mrf.mxu0
        %573 = vdwg.mxu0
        %574 = vmatprep.subr.mxu0 0.0
        %575 = vmatpush1.msra.mxu0 0.0
        %576 = vmatprep.subr.mxu0 0.0
        %577 = vmatpush1.msra.mxu0 0.0
        %578 = vmatprep.subr.mxu0 0.0
        %579 = vmatpush1.msra.mxu0 0.0
        %580 = vmatprep.subr.mxu0 0.0
        %581 = vmatpush1.msra.mxu0 0.0
        %582 = vmatprep.subr.mxu0 0.0
        %583 = vmatpush1.msra.mxu0 0.0
        %584 = vmatprep.subr.mxu0 0.0
        %585 = vmatpush1.msra.mxu0 0.0
        %586 = vmatprep.subr.mxu0 0.0
        %587 = vmatpush1.msra.mxu0 0.0
        %588 = vmatprep.subr.mxu0 0.0
        %589 = vmatpush1.msra.mxu0 0.0
        %590 = vmatprep.subr.mxu0 0.0
        %591 = vmatpush1.msra.mxu0 0.0
        %592 = vmatprep.subr.mxu0 0.0
        %593 = vmatpush1.msra.mxu0 0.0
        %594 = vmatprep.subr.mxu0 0.0
        %595 = vmatpush1.msra.mxu0 0.0
        %596 = vmatprep.subr.mxu0 0.0
        %597 = vmatpush1.msra.mxu0 0.0
        %598 = vmatprep.subr.mxu0 0.0
        %599 = vmatpush1.msra.mxu0 0.0
        %600 = vmatprep.subr.mxu0 0.0
        %601 = vmatpush1.msra.mxu0 0.0
        %602 = vmatprep.subr.mxu0 0.0
        %v603 = vand.u32 %v224, 4294901760
        %v604 = vsub.f32 %v224, %v603
        %v605 = vand.u32 %v604, 4294901760
        %606 = vmatpush1.msra.mxu0 %v605
        %607 = vmatprep.subr.mxu0 0.0
        %v608 = vand.u32 %v223, 4294901760
        %v609 = vsub.f32 %v223, %v608
        %v610 = vand.u32 %v609, 4294901760
        %611 = vmatpush1.msra.mxu0 %v610
        %612 = vmatprep.subr.mxu0 0.0
        %613 = vmatpush2.msra.mxu0 0.0
        %614 = vmatprep.subr.mxu0 0.0
        %615 = vmatpush2.msra.mxu0 0.0
        %616 = vmatprep.subr.mxu0 0.0
        %617 = vmatpush2.msra.mxu0 0.0
        %618 = vmatprep.subr.mxu0 0.0
        %619 = vmatpush2.msra.mxu0 0.0
        %620 = vmatprep.subr.mxu0 0.0
        %621 = vmatpush2.msra.mxu0 0.0
        %622 = vmatprep.subr.mxu0 0.0
        %623 = vmatpush2.msra.mxu0 0.0
        %624 = vmatprep.subr.mxu0 0.0
        %625 = vmatpush2.msra.mxu0 0.0
        %626 = vmatprep.subr.mxu0 0.0
        %627 = vmatpush2.msra.mxu0 0.0
        %628 = vmatprep.subr.mxu0 0.0
        %629 = vmatpush2.msra.mxu0 0.0
        %630 = vmatprep.subr.mxu0 0.0
        %631 = vmatpush2.msra.mxu0 0.0
        %632 = vmatprep.subr.mxu0 0.0
        %633 = vmatpush2.msra.mxu0 0.0
        %634 = vmatprep.subr.mxu0 0.0
        %635 = vmatpush2.msra.mxu0 0.0
        %636 = vmatprep.subr.mxu0 0.0
        %637 = vmatpush2.msra.mxu0 0.0
        %638 = vmatprep.subr.mxu0 0.0
        %639 = vmatpush2.msra.mxu0 0.0
        %640 = vmatprep.subr.mxu0 0.0
        %641 = vmatpush2.msra.mxu0 0.0
        %642 = vmatprep.subr.mxu0 0.0
        %643 = vmatpush2.msra.mxu0 0.0
        %644 = vmatprep.mubr.f32.mxu0 0.0
        %v645 = vand.u32 %v229, 4294901760
        %646 = vmatmul.mubr.f32.gmra.mxu0 %v645
        %v647 = vpop.f32.mrf.mxu0
        %v648 = vadd.f32 %v563, %v647
        %v649 = vpop.f32.mrf.mxu0
        %650 = vmatprep.mubr.f32.mxu0 0.0
        %v651 = vand.u32 %v232, 4294901760
        %652 = vmatmul.mubr.f32.gmra.mxu0 %v651
        %v653 = vpop.f32.mrf.mxu0
        %v654 = vadd.f32 %v571, %v653
        %v655 = vpop.f32.mrf.mxu0
        %656 = vdwg.mxu0
        %657 = vmatprep.subr.mxu0 0.0
        %658 = vmatpush1.msra.mxu0 0.0
        %659 = vmatprep.subr.mxu0 0.0
        %660 = vmatpush1.msra.mxu0 0.0
        %661 = vmatprep.subr.mxu0 0.0
        %662 = vmatpush1.msra.mxu0 0.0
        %663 = vmatprep.subr.mxu0 0.0
        %664 = vmatpush1.msra.mxu0 0.0
        %665 = vmatprep.subr.mxu0 0.0
        %666 = vmatpush1.msra.mxu0 0.0
        %667 = vmatprep.subr.mxu0 0.0
        %668 = vmatpush1.msra.mxu0 0.0
        %669 = vmatprep.subr.mxu0 0.0
        %670 = vmatpush1.msra.mxu0 0.0
        %671 = vmatprep.subr.mxu0 0.0
        %672 = vmatpush1.msra.mxu0 0.0
        %673 = vmatprep.subr.mxu0 0.0
        %674 = vmatpush1.msra.mxu0 0.0
        %675 = vmatprep.subr.mxu0 0.0
        %676 = vmatpush1.msra.mxu0 0.0
        %677 = vmatprep.subr.mxu0 0.0
        %678 = vmatpush1.msra.mxu0 0.0
        %679 = vmatprep.subr.mxu0 0.0
        %680 = vmatpush1.msra.mxu0 0.0
        %681 = vmatprep.subr.mxu0 0.0
        %682 = vmatpush1.msra.mxu0 0.0
        %683 = vmatprep.subr.mxu0 0.0
        %684 = vmatpush1.msra.mxu0 0.0
        %685 = vmatprep.subr.mxu0 0.0
        %v686 = vand.u32 %v224, 4294901760
        %687 = vmatpush1.msra.mxu0 %v686
        %688 = vmatprep.subr.mxu0 0.0
        %v689 = vand.u32 %v223, 4294901760
        %690 = vmatpush1.msra.mxu0 %v689
        %691 = vmatprep.subr.mxu0 0.0
        %692 = vmatpush2.msra.mxu0 0.0
        %693 = vmatprep.subr.mxu0 0.0
        %694 = vmatpush2.msra.mxu0 0.0
        %695 = vmatprep.subr.mxu0 0.0
        %696 = vmatpush2.msra.mxu0 0.0
        %697 = vmatprep.subr.mxu0 0.0
        %698 = vmatpush2.msra.mxu0 0.0
        %699 = vmatprep.subr.mxu0 0.0
        %700 = vmatpush2.msra.mxu0 0.0
        %701 = vmatprep.subr.mxu0 0.0
        %702 = vmatpush2.msra.mxu0 0.0
        %703 = vmatprep.subr.mxu0 0.0
        %704 = vmatpush2.msra.mxu0 0.0
        %705 = vmatprep.subr.mxu0 0.0
        %706 = vmatpush2.msra.mxu0 0.0
        %707 = vmatprep.subr.mxu0 0.0
        %708 = vmatpush2.msra.mxu0 0.0
        %709 = vmatprep.subr.mxu0 0.0
        %710 = vmatpush2.msra.mxu0 0.0
        %711 = vmatprep.subr.mxu0 0.0
        %712 = vmatpush2.msra.mxu0 0.0
        %713 = vmatprep.subr.mxu0 0.0
        %714 = vmatpush2.msra.mxu0 0.0
        %715 = vmatprep.subr.mxu0 0.0
        %716 = vmatpush2.msra.mxu0 0.0
        %717 = vmatprep.subr.mxu0 0.0
        %718 = vmatpush2.msra.mxu0 0.0
        %719 = vmatprep.subr.mxu0 0.0
        %720 = vmatpush2.msra.mxu0 0.0
        %721 = vmatprep.subr.mxu0 0.0
        %722 = vmatpush2.msra.mxu0 0.0
        %723 = vmatprep.mubr.f32.mxu0 0.0
        %v724 = vand.u32 %v229, 4294901760
        %725 = vmatmul.mubr.f32.gmra.mxu0 %v724
        %v726 = vpop.f32.mrf.mxu0
        %v727 = vadd.f32 %v648, %v726
        %v728 = vpop.f32.mrf.mxu0
        %729 = vmatprep.mubr.f32.mxu0 0.0
        %v730 = vand.u32 %v232, 4294901760
        %731 = vmatmul.mubr.f32.gmra.mxu0 %v730
        %v732 = vpop.f32.mrf.mxu0
        %v733 = vadd.f32 %v654, %v732
        %v734 = vpop.f32.mrf.mxu0
        %735 = vdwg.mxu0
        %v737 = vsel %vm227, %v219, 0
        %v740 = vsel %vm227, %v220, 0
        %v743 = vsel %vm227, %v221, 0
        %v746 = vsel %vm227, %v222, 0
        %748 = vmatprep.subr.mxu0 0.0
        %749 = vmatpush1.msra.mxu0 0.0
        %750 = vmatprep.subr.mxu0 0.0
        %751 = vmatpush1.msra.mxu0 0.0
        %752 = vmatprep.subr.mxu0 0.0
        %753 = vmatpush1.msra.mxu0 0.0
        %754 = vmatprep.subr.mxu0 0.0
        %755 = vmatpush1.msra.mxu0 0.0
        %756 = vmatprep.subr.mxu0 0.0
        %757 = vmatpush1.msra.mxu0 0.0
        %758 = vmatprep.subr.mxu0 0.0
        %759 = vmatpush1.msra.mxu0 0.0
        %760 = vmatprep.subr.mxu0 0.0
        %761 = vmatpush1.msra.mxu0 0.0
        %762 = vmatprep.subr.mxu0 0.0
        %763 = vmatpush1.msra.mxu0 0.0
        %764 = vmatprep.subr.mxu0 0.0
        %765 = vmatpush1.msra.mxu0 0.0
        %766 = vmatprep.subr.mxu0 0.0
        %767 = vmatpush1.msra.mxu0 0.0
        %768 = vmatprep.subr.mxu0 0.0
        %769 = vmatpush1.msra.mxu0 0.0
        %770 = vmatprep.subr.mxu0 0.0
        %771 = vmatpush1.msra.mxu0 0.0
        %772 = vmatprep.subr.mxu0 0.0
        %773 = vmatpush1.msra.mxu0 0.0
        %774 = vmatprep.subr.mxu0 0.0
        %775 = vmatpush1.msra.mxu0 0.0
        %776 = vmatprep.subr.mxu0 0.0
        %v777 = vand.u32 %v733, 4294901760
        %778 = vmatpush1.msra.mxu0 %v777
        %779 = vmatprep.subr.mxu0 0.0
        %v780 = vand.u32 %v727, 4294901760
        %781 = vmatpush1.msra.mxu0 %v780
        %782 = vmatprep.subr.mxu0 0.0
        %783 = vmatpush2.msra.mxu0 0.0
        %784 = vmatprep.subr.mxu0 0.0
        %785 = vmatpush2.msra.mxu0 0.0
        %786 = vmatprep.subr.mxu0 0.0
        %787 = vmatpush2.msra.mxu0 0.0
        %788 = vmatprep.subr.mxu0 0.0
        %789 = vmatpush2.msra.mxu0 0.0
        %790 = vmatprep.subr.mxu0 0.0
        %791 = vmatpush2.msra.mxu0 0.0
        %792 = vmatprep.subr.mxu0 0.0
        %793 = vmatpush2.msra.mxu0 0.0
        %794 = vmatprep.subr.mxu0 0.0
        %795 = vmatpush2.msra.mxu0 0.0
        %796 = vmatprep.subr.mxu0 0.0
        %797 = vmatpush2.msra.mxu0 0.0
        %798 = vmatprep.subr.mxu0 0.0
        %799 = vmatpush2.msra.mxu0 0.0
        %800 = vmatprep.subr.mxu0 0.0
        %801 = vmatpush2.msra.mxu0 0.0
        %802 = vmatprep.subr.mxu0 0.0
        %803 = vmatpush2.msra.mxu0 0.0
        %804 = vmatprep.subr.mxu0 0.0
        %805 = vmatpush2.msra.mxu0 0.0
        %806 = vmatprep.subr.mxu0 0.0
        %807 = vmatpush2.msra.mxu0 0.0
        %808 = vmatprep.subr.mxu0 0.0
        %809 = vmatpush2.msra.mxu0 0.0
        %810 = vmatprep.subr.mxu0 0.0
        %811 = vmatpush2.msra.mxu0 0.0
        %812 = vmatprep.subr.mxu0 0.0
        %813 = vmatpush2.msra.mxu0 0.0
        %814 = vmatprep.mubr.f32.mxu0 0.0
        %v815 = vand.u32 %v737, 4294901760
        %v816 = vsub.f32 %v737, %v815
        %v817 = vand.u32 %v816, 4294901760
        %v818 = vsub.f32 %v816, %v817
        %v819 = vand.u32 %v818, 4294901760
        %820 = vmatmul.mubr.f32.gmra.mxu0 %v819
        %v821 = vpop.f32.mrf.mxu0
        %v822 = vadd.f32 0.0, %v821
        %v823 = vpop.f32.mrf.mxu0
        %824 = vmatprep.mubr.f32.mxu0 0.0
        %v825 = vand.u32 %v740, 4294901760
        %v826 = vsub.f32 %v740, %v825
        %v827 = vand.u32 %v826, 4294901760
        %v828 = vsub.f32 %v826, %v827
        %v829 = vand.u32 %v828, 4294901760
        %830 = vmatmul.mubr.f32.gmra.mxu0 %v829
        %v831 = vpop.f32.mrf.mxu0
        %v832 = vadd.f32 0.0, %v831
        %v833 = vpop.f32.mrf.mxu0
        %834 = vmatprep.mubr.f32.mxu0 0.0
        %v835 = vand.u32 %v743, 4294901760
        %v836 = vsub.f32 %v743, %v835
        %v837 = vand.u32 %v836, 4294901760
        %v838 = vsub.f32 %v836, %v837
        %v839 = vand.u32 %v838, 4294901760
        %840 = vmatmul.mubr.f32.gmra.mxu0 %v839
        %v841 = vpop.f32.mrf.mxu0
        %v842 = vadd.f32 0.0, %v841
        %v843 = vpop.f32.mrf.mxu0
        %844 = vmatprep.mubr.f32.mxu0 0.0
        %v845 = vand.u32 %v746, 4294901760
        %v846 = vsub.f32 %v746, %v845
        %v847 = vand.u32 %v846, 4294901760
        %v848 = vsub.f32 %v846, %v847
        %v849 = vand.u32 %v848, 4294901760
        %850 = vmatmul.mubr.f32.gmra.mxu0 %v849
        %v851 = vpop.f32.mrf.mxu0
        %v852 = vadd.f32 0.0, %v851
        %v853 = vpop.f32.mrf.mxu0
        %854 = vdwg.mxu0
        %855 = vmatprep.subr.mxu0 0.0
        %856 = vmatpush1.msra.mxu0 0.0
        %857 = vmatprep.subr.mxu0 0.0
        %858 = vmatpush1.msra.mxu0 0.0
        %859 = vmatprep.subr.mxu0 0.0
        %860 = vmatpush1.msra.mxu0 0.0
        %861 = vmatprep.subr.mxu0 0.0
        %862 = vmatpush1.msra.mxu0 0.0
        %863 = vmatprep.subr.mxu0 0.0
        %864 = vmatpush1.msra.mxu0 0.0
        %865 = vmatprep.subr.mxu0 0.0
        %866 = vmatpush1.msra.mxu0 0.0
        %867 = vmatprep.subr.mxu0 0.0
        %868 = vmatpush1.msra.mxu0 0.0
        %869 = vmatprep.subr.mxu0 0.0
        %870 = vmatpush1.msra.mxu0 0.0
        %871 = vmatprep.subr.mxu0 0.0
        %872 = vmatpush1.msra.mxu0 0.0
        %873 = vmatprep.subr.mxu0 0.0
        %874 = vmatpush1.msra.mxu0 0.0
        %875 = vmatprep.subr.mxu0 0.0
        %876 = vmatpush1.msra.mxu0 0.0
        %877 = vmatprep.subr.mxu0 0.0
        %878 = vmatpush1.msra.mxu0 0.0
        %879 = vmatprep.subr.mxu0 0.0
        %880 = vmatpush1.msra.mxu0 0.0
        %881 = vmatprep.subr.mxu0 0.0
        %882 = vmatpush1.msra.mxu0 0.0
        %883 = vmatprep.subr.mxu0 0.0
        %v884 = vand.u32 %v733, 4294901760
        %v885 = vsub.f32 %v733, %v884
        %v886 = vand.u32 %v885, 4294901760
        %v887 = vsub.f32 %v885, %v886
        %v888 = vand.u32 %v887, 4294901760
        %889 = vmatpush1.msra.mxu0 %v888
        %890 = vmatprep.subr.mxu0 0.0
        %v891 = vand.u32 %v727, 4294901760
        %v892 = vsub.f32 %v727, %v891
        %v893 = vand.u32 %v892, 4294901760
        %v894 = vsub.f32 %v892, %v893
        %v895 = vand.u32 %v894, 4294901760
        %896 = vmatpush1.msra.mxu0 %v895
        %897 = vmatprep.subr.mxu0 0.0
        %898 = vmatpush2.msra.mxu0 0.0
        %899 = vmatprep.subr.mxu0 0.0
        %900 = vmatpush2.msra.mxu0 0.0
        %901 = vmatprep.subr.mxu0 0.0
        %902 = vmatpush2.msra.mxu0 0.0
        %903 = vmatprep.subr.mxu0 0.0
        %904 = vmatpush2.msra.mxu0 0.0
        %905 = vmatprep.subr.mxu0 0.0
        %906 = vmatpush2.msra.mxu0 0.0
        %907 = vmatprep.subr.mxu0 0.0
        %908 = vmatpush2.msra.mxu0 0.0
        %909 = vmatprep.subr.mxu0 0.0
        %910 = vmatpush2.msra.mxu0 0.0
        %911 = vmatprep.subr.mxu0 0.0
        %912 = vmatpush2.msra.mxu0 0.0
        %913 = vmatprep.subr.mxu0 0.0
        %914 = vmatpush2.msra.mxu0 0.0
        %915 = vmatprep.subr.mxu0 0.0
        %916 = vmatpush2.msra.mxu0 0.0
        %917 = vmatprep.subr.mxu0 0.0
        %918 = vmatpush2.msra.mxu0 0.0
        %919 = vmatprep.subr.mxu0 0.0
        %920 = vmatpush2.msra.mxu0 0.0
        %921 = vmatprep.subr.mxu0 0.0
        %922 = vmatpush2.msra.mxu0 0.0
        %923 = vmatprep.subr.mxu0 0.0
        %924 = vmatpush2.msra.mxu0 0.0
        %925 = vmatprep.subr.mxu0 0.0
        %926 = vmatpush2.msra.mxu0 0.0
        %927 = vmatprep.subr.mxu0 0.0
        %928 = vmatpush2.msra.mxu0 0.0
        %929 = vmatprep.mubr.f32.mxu0 0.0
        %v930 = vand.u32 %v737, 4294901760
        %931 = vmatmul.mubr.f32.gmra.mxu0 %v930
        %v932 = vpop.f32.mrf.mxu0
        %v933 = vadd.f32 %v822, %v932
        %v934 = vpop.f32.mrf.mxu0
        %935 = vmatprep.mubr.f32.mxu0 0.0
        %v936 = vand.u32 %v740, 4294901760
        %937 = vmatmul.mubr.f32.gmra.mxu0 %v936
        %v938 = vpop.f32.mrf.mxu0
        %v939 = vadd.f32 %v832, %v938
        %v940 = vpop.f32.mrf.mxu0
        %941 = vmatprep.mubr.f32.mxu0 0.0
        %v942 = vand.u32 %v743, 4294901760
        %943 = vmatmul.mubr.f32.gmra.mxu0 %v942
        %v944 = vpop.f32.mrf.mxu0
        %v945 = vadd.f32 %v842, %v944
        %v946 = vpop.f32.mrf.mxu0
        %947 = vmatprep.mubr.f32.mxu0 0.0
        %v948 = vand.u32 %v746, 4294901760
        %949 = vmatmul.mubr.f32.gmra.mxu0 %v948
        %v950 = vpop.f32.mrf.mxu0
        %v951 = vadd.f32 %v852, %v950
        %v952 = vpop.f32.mrf.mxu0
        %953 = vdwg.mxu0
        %954 = vmatprep.subr.mxu0 0.0
        %955 = vmatpush1.msra.mxu0 0.0
        %956 = vmatprep.subr.mxu0 0.0
        %957 = vmatpush1.msra.mxu0 0.0
        %958 = vmatprep.subr.mxu0 0.0
        %959 = vmatpush1.msra.mxu0 0.0
        %960 = vmatprep.subr.mxu0 0.0
        %961 = vmatpush1.msra.mxu0 0.0
        %962 = vmatprep.subr.mxu0 0.0
        %963 = vmatpush1.msra.mxu0 0.0
        %964 = vmatprep.subr.mxu0 0.0
        %965 = vmatpush1.msra.mxu0 0.0
        %966 = vmatprep.subr.mxu0 0.0
        %967 = vmatpush1.msra.mxu0 0.0
        %968 = vmatprep.subr.mxu0 0.0
        %969 = vmatpush1.msra.mxu0 0.0
        %970 = vmatprep.subr.mxu0 0.0
        %971 = vmatpush1.msra.mxu0 0.0
        %972 = vmatprep.subr.mxu0 0.0
        %973 = vmatpush1.msra.mxu0 0.0
        %974 = vmatprep.subr.mxu0 0.0
        %975 = vmatpush1.msra.mxu0 0.0
        %976 = vmatprep.subr.mxu0 0.0
        %977 = vmatpush1.msra.mxu0 0.0
        %978 = vmatprep.subr.mxu0 0.0
        %979 = vmatpush1.msra.mxu0 0.0
        %980 = vmatprep.subr.mxu0 0.0
        %981 = vmatpush1.msra.mxu0 0.0
        %982 = vmatprep.subr.mxu0 0.0
        %v983 = vand.u32 %v733, 4294901760
        %v984 = vsub.f32 %v733, %v983
        %985 = vmatpush1.msra.mxu0 %v984
        %986 = vmatprep.subr.mxu0 0.0
        %v987 = vand.u32 %v727, 4294901760
        %v988 = vsub.f32 %v727, %v987
        %989 = vmatpush1.msra.mxu0 %v988
        %990 = vmatprep.subr.mxu0 0.0
        %991 = vmatpush2.msra.mxu0 0.0
        %992 = vmatprep.subr.mxu0 0.0
        %993 = vmatpush2.msra.mxu0 0.0
        %994 = vmatprep.subr.mxu0 0.0
        %995 = vmatpush2.msra.mxu0 0.0
        %996 = vmatprep.subr.mxu0 0.0
        %997 = vmatpush2.msra.mxu0 0.0
        %998 = vmatprep.subr.mxu0 0.0
        %999 = vmatpush2.msra.mxu0 0.0
        %1000 = vmatprep.subr.mxu0 0.0
        %1001 = vmatpush2.msra.mxu0 0.0
        %1002 = vmatprep.subr.mxu0 0.0
        %1003 = vmatpush2.msra.mxu0 0.0
        %1004 = vmatprep.subr.mxu0 0.0
        %1005 = vmatpush2.msra.mxu0 0.0
        %1006 = vmatprep.subr.mxu0 0.0
        %1007 = vmatpush2.msra.mxu0 0.0
        %1008 = vmatprep.subr.mxu0 0.0
        %1009 = vmatpush2.msra.mxu0 0.0
        %1010 = vmatprep.subr.mxu0 0.0
        %1011 = vmatpush2.msra.mxu0 0.0
        %1012 = vmatprep.subr.mxu0 0.0
        %1013 = vmatpush2.msra.mxu0 0.0
        %1014 = vmatprep.subr.mxu0 0.0
        %1015 = vmatpush2.msra.mxu0 0.0
        %1016 = vmatprep.subr.mxu0 0.0
        %1017 = vmatpush2.msra.mxu0 0.0
        %1018 = vmatprep.subr.mxu0 0.0
        %1019 = vmatpush2.msra.mxu0 0.0
        %1020 = vmatprep.subr.mxu0 0.0
        %1021 = vmatpush2.msra.mxu0 0.0
        %1022 = vmatprep.mubr.f32.mxu0 0.0
        %v1023 = vand.u32 %v737, 4294901760
        %v1024 = vsub.f32 %v737, %v1023
        %1025 = vmatmul.mubr.f32.gmra.mxu0 %v1024
        %v1026 = vpop.f32.mrf.mxu0
        %v1027 = vadd.f32 %v933, %v1026
        %v1028 = vpop.f32.mrf.mxu0
        %1029 = vmatprep.mubr.f32.mxu0 0.0
        %v1030 = vand.u32 %v740, 4294901760
        %v1031 = vsub.f32 %v740, %v1030
        %1032 = vmatmul.mubr.f32.gmra.mxu0 %v1031
        %v1033 = vpop.f32.mrf.mxu0
        %v1034 = vadd.f32 %v939, %v1033
        %v1035 = vpop.f32.mrf.mxu0
        %1036 = vmatprep.mubr.f32.mxu0 0.0
        %v1037 = vand.u32 %v743, 4294901760
        %v1038 = vsub.f32 %v743, %v1037
        %1039 = vmatmul.mubr.f32.gmra.mxu0 %v1038
        %v1040 = vpop.f32.mrf.mxu0
        %v1041 = vadd.f32 %v945, %v1040
        %v1042 = vpop.f32.mrf.mxu0
        %1043 = vmatprep.mubr.f32.mxu0 0.0
        %v1044 = vand.u32 %v746, 4294901760
        %v1045 = vsub.f32 %v746, %v1044
        %1046 = vmatmul.mubr.f32.gmra.mxu0 %v1045
        %v1047 = vpop.f32.mrf.mxu0
        %v1048 = vadd.f32 %v951, %v1047
        %v1049 = vpop.f32.mrf.mxu0
        %1050 = vdwg.mxu0
        %1051 = vmatprep.subr.mxu0 0.0
        %1052 = vmatpush1.msra.mxu0 0.0
        %1053 = vmatprep.subr.mxu0 0.0
        %1054 = vmatpush1.msra.mxu0 0.0
        %1055 = vmatprep.subr.mxu0 0.0
        %1056 = vmatpush1.msra.mxu0 0.0
        %1057 = vmatprep.subr.mxu0 0.0
        %1058 = vmatpush1.msra.mxu0 0.0
        %1059 = vmatprep.subr.mxu0 0.0
        %1060 = vmatpush1.msra.mxu0 0.0
        %1061 = vmatprep.subr.mxu0 0.0
        %1062 = vmatpush1.msra.mxu0 0.0
        %1063 = vmatprep.subr.mxu0 0.0
        %1064 = vmatpush1.msra.mxu0 0.0
        %1065 = vmatprep.subr.mxu0 0.0
        %1066 = vmatpush1.msra.mxu0 0.0
        %1067 = vmatprep.subr.mxu0 0.0
        %1068 = vmatpush1.msra.mxu0 0.0
        %1069 = vmatprep.subr.mxu0 0.0
        %1070 = vmatpush1.msra.mxu0 0.0
        %1071 = vmatprep.subr.mxu0 0.0
        %1072 = vmatpush1.msra.mxu0 0.0
        %1073 = vmatprep.subr.mxu0 0.0
        %1074 = vmatpush1.msra.mxu0 0.0
        %1075 = vmatprep.subr.mxu0 0.0
        %1076 = vmatpush1.msra.mxu0 0.0
        %1077 = vmatprep.subr.mxu0 0.0
        %1078 = vmatpush1.msra.mxu0 0.0
        %1079 = vmatprep.subr.mxu0 0.0
        %v1080 = vand.u32 %v733, 4294901760
        %1081 = vmatpush1.msra.mxu0 %v1080
        %1082 = vmatprep.subr.mxu0 0.0
        %v1083 = vand.u32 %v727, 4294901760
        %1084 = vmatpush1.msra.mxu0 %v1083
        %1085 = vmatprep.subr.mxu0 0.0
        %1086 = vmatpush2.msra.mxu0 0.0
        %1087 = vmatprep.subr.mxu0 0.0
        %1088 = vmatpush2.msra.mxu0 0.0
        %1089 = vmatprep.subr.mxu0 0.0
        %1090 = vmatpush2.msra.mxu0 0.0
        %1091 = vmatprep.subr.mxu0 0.0
        %1092 = vmatpush2.msra.mxu0 0.0
        %1093 = vmatprep.subr.mxu0 0.0
        %1094 = vmatpush2.msra.mxu0 0.0
        %1095 = vmatprep.subr.mxu0 0.0
        %1096 = vmatpush2.msra.mxu0 0.0
        %1097 = vmatprep.subr.mxu0 0.0
        %1098 = vmatpush2.msra.mxu0 0.0
        %1099 = vmatprep.subr.mxu0 0.0
        %1100 = vmatpush2.msra.mxu0 0.0
        %1101 = vmatprep.subr.mxu0 0.0
        %1102 = vmatpush2.msra.mxu0 0.0
        %1103 = vmatprep.subr.mxu0 0.0
        %1104 = vmatpush2.msra.mxu0 0.0
        %1105 = vmatprep.subr.mxu0 0.0
        %1106 = vmatpush2.msra.mxu0 0.0
        %1107 = vmatprep.subr.mxu0 0.0
        %1108 = vmatpush2.msra.mxu0 0.0
        %1109 = vmatprep.subr.mxu0 0.0
        %1110 = vmatpush2.msra.mxu0 0.0
        %1111 = vmatprep.subr.mxu0 0.0
        %1112 = vmatpush2.msra.mxu0 0.0
        %1113 = vmatprep.subr.mxu0 0.0
        %1114 = vmatpush2.msra.mxu0 0.0
        %1115 = vmatprep.subr.mxu0 0.0
        %1116 = vmatpush2.msra.mxu0 0.0
        %1117 = vmatprep.mubr.f32.mxu0 0.0
        %v1118 = vand.u32 %v737, 4294901760
        %v1119 = vsub.f32 %v737, %v1118
        %v1120 = vand.u32 %v1119, 4294901760
        %1121 = vmatmul.mubr.f32.gmra.mxu0 %v1120
        %v1122 = vpop.f32.mrf.mxu0
        %v1123 = vadd.f32 %v1027, %v1122
        %v1124 = vpop.f32.mrf.mxu0
        %1125 = vmatprep.mubr.f32.mxu0 0.0
        %v1126 = vand.u32 %v740, 4294901760
        %v1127 = vsub.f32 %v740, %v1126
        %v1128 = vand.u32 %v1127, 4294901760
        %1129 = vmatmul.mubr.f32.gmra.mxu0 %v1128
        %v1130 = vpop.f32.mrf.mxu0
        %v1131 = vadd.f32 %v1034, %v1130
        %v1132 = vpop.f32.mrf.mxu0
        %1133 = vmatprep.mubr.f32.mxu0 0.0
        %v1134 = vand.u32 %v743, 4294901760
        %v1135 = vsub.f32 %v743, %v1134
        %v1136 = vand.u32 %v1135, 4294901760
        %1137 = vmatmul.mubr.f32.gmra.mxu0 %v1136
        %v1138 = vpop.f32.mrf.mxu0
        %v1139 = vadd.f32 %v1041, %v1138
        %v1140 = vpop.f32.mrf.mxu0
        %1141 = vmatprep.mubr.f32.mxu0 0.0
        %v1142 = vand.u32 %v746, 4294901760
        %v1143 = vsub.f32 %v746, %v1142
        %v1144 = vand.u32 %v1143, 4294901760
        %1145 = vmatmul.mubr.f32.gmra.mxu0 %v1144
        %v1146 = vpop.f32.mrf.mxu0
        %v1147 = vadd.f32 %v1048, %v1146
        %v1148 = vpop.f32.mrf.mxu0
        %1149 = vdwg.mxu0
        %1150 = vmatprep.subr.mxu0 0.0
        %1151 = vmatpush1.msra.mxu0 0.0
        %1152 = vmatprep.subr.mxu0 0.0
        %1153 = vmatpush1.msra.mxu0 0.0
        %1154 = vmatprep.subr.mxu0 0.0
        %1155 = vmatpush1.msra.mxu0 0.0
        %1156 = vmatprep.subr.mxu0 0.0
        %1157 = vmatpush1.msra.mxu0 0.0
        %1158 = vmatprep.subr.mxu0 0.0
        %1159 = vmatpush1.msra.mxu0 0.0
        %1160 = vmatprep.subr.mxu0 0.0
        %1161 = vmatpush1.msra.mxu0 0.0
        %1162 = vmatprep.subr.mxu0 0.0
        %1163 = vmatpush1.msra.mxu0 0.0
        %1164 = vmatprep.subr.mxu0 0.0
        %1165 = vmatpush1.msra.mxu0 0.0
        %1166 = vmatprep.subr.mxu0 0.0
        %1167 = vmatpush1.msra.mxu0 0.0
        %1168 = vmatprep.subr.mxu0 0.0
        %1169 = vmatpush1.msra.mxu0 0.0
        %1170 = vmatprep.subr.mxu0 0.0
        %1171 = vmatpush1.msra.mxu0 0.0
        %1172 = vmatprep.subr.mxu0 0.0
        %1173 = vmatpush1.msra.mxu0 0.0
        %1174 = vmatprep.subr.mxu0 0.0
        %1175 = vmatpush1.msra.mxu0 0.0
        %1176 = vmatprep.subr.mxu0 0.0
        %1177 = vmatpush1.msra.mxu0 0.0
        %1178 = vmatprep.subr.mxu0 0.0
        %v1179 = vand.u32 %v733, 4294901760
        %v1180 = vsub.f32 %v733, %v1179
        %v1181 = vand.u32 %v1180, 4294901760
        %1182 = vmatpush1.msra.mxu0 %v1181
        %1183 = vmatprep.subr.mxu0 0.0
        %v1184 = vand.u32 %v727, 4294901760
        %v1185 = vsub.f32 %v727, %v1184
        %v1186 = vand.u32 %v1185, 4294901760
        %1187 = vmatpush1.msra.mxu0 %v1186
        %1188 = vmatprep.subr.mxu0 0.0
        %1189 = vmatpush2.msra.mxu0 0.0
        %1190 = vmatprep.subr.mxu0 0.0
        %1191 = vmatpush2.msra.mxu0 0.0
        %1192 = vmatprep.subr.mxu0 0.0
        %1193 = vmatpush2.msra.mxu0 0.0
        %1194 = vmatprep.subr.mxu0 0.0
        %1195 = vmatpush2.msra.mxu0 0.0
        %1196 = vmatprep.subr.mxu0 0.0
        %1197 = vmatpush2.msra.mxu0 0.0
        %1198 = vmatprep.subr.mxu0 0.0
        %1199 = vmatpush2.msra.mxu0 0.0
        %1200 = vmatprep.subr.mxu0 0.0
        %1201 = vmatpush2.msra.mxu0 0.0
        %1202 = vmatprep.subr.mxu0 0.0
        %1203 = vmatpush2.msra.mxu0 0.0
        %1204 = vmatprep.subr.mxu0 0.0
        %1205 = vmatpush2.msra.mxu0 0.0
        %1206 = vmatprep.subr.mxu0 0.0
        %1207 = vmatpush2.msra.mxu0 0.0
        %1208 = vmatprep.subr.mxu0 0.0
        %1209 = vmatpush2.msra.mxu0 0.0
        %1210 = vmatprep.subr.mxu0 0.0
        %1211 = vmatpush2.msra.mxu0 0.0
        %1212 = vmatprep.subr.mxu0 0.0
        %1213 = vmatpush2.msra.mxu0 0.0
        %1214 = vmatprep.subr.mxu0 0.0
        %1215 = vmatpush2.msra.mxu0 0.0
        %1216 = vmatprep.subr.mxu0 0.0
        %1217 = vmatpush2.msra.mxu0 0.0
        %1218 = vmatprep.subr.mxu0 0.0
        %1219 = vmatpush2.msra.mxu0 0.0
        %1220 = vmatprep.mubr.f32.mxu0 0.0
        %v1221 = vand.u32 %v737, 4294901760
        %1222 = vmatmul.mubr.f32.gmra.mxu0 %v1221
        %v1223 = vpop.f32.mrf.mxu0
        %v1224 = vadd.f32 %v1123, %v1223
        %v1225 = vpop.f32.mrf.mxu0
        %1226 = vmatprep.mubr.f32.mxu0 0.0
        %v1227 = vand.u32 %v740, 4294901760
        %1228 = vmatmul.mubr.f32.gmra.mxu0 %v1227
        %v1229 = vpop.f32.mrf.mxu0
        %v1230 = vadd.f32 %v1131, %v1229
        %v1231 = vpop.f32.mrf.mxu0
        %1232 = vmatprep.mubr.f32.mxu0 0.0
        %v1233 = vand.u32 %v743, 4294901760
        %1234 = vmatmul.mubr.f32.gmra.mxu0 %v1233
        %v1235 = vpop.f32.mrf.mxu0
        %v1236 = vadd.f32 %v1139, %v1235
        %v1237 = vpop.f32.mrf.mxu0
        %1238 = vmatprep.mubr.f32.mxu0 0.0
        %v1239 = vand.u32 %v746, 4294901760
        %1240 = vmatmul.mubr.f32.gmra.mxu0 %v1239
        %v1241 = vpop.f32.mrf.mxu0
        %v1242 = vadd.f32 %v1147, %v1241
        %v1243 = vpop.f32.mrf.mxu0
        %1244 = vdwg.mxu0
        %1245 = vmatprep.subr.mxu0 0.0
        %1246 = vmatpush1.msra.mxu0 0.0
        %1247 = vmatprep.subr.mxu0 0.0
        %1248 = vmatpush1.msra.mxu0 0.0
        %1249 = vmatprep.subr.mxu0 0.0
        %1250 = vmatpush1.msra.mxu0 0.0
        %1251 = vmatprep.subr.mxu0 0.0
        %1252 = vmatpush1.msra.mxu0 0.0
        %1253 = vmatprep.subr.mxu0 0.0
        %1254 = vmatpush1.msra.mxu0 0.0
        %1255 = vmatprep.subr.mxu0 0.0
        %1256 = vmatpush1.msra.mxu0 0.0
        %1257 = vmatprep.subr.mxu0 0.0
        %1258 = vmatpush1.msra.mxu0 0.0
        %1259 = vmatprep.subr.mxu0 0.0
        %1260 = vmatpush1.msra.mxu0 0.0
        %1261 = vmatprep.subr.mxu0 0.0
        %1262 = vmatpush1.msra.mxu0 0.0
        %1263 = vmatprep.subr.mxu0 0.0
        %1264 = vmatpush1.msra.mxu0 0.0
        %1265 = vmatprep.subr.mxu0 0.0
        %1266 = vmatpush1.msra.mxu0 0.0
        %1267 = vmatprep.subr.mxu0 0.0
        %1268 = vmatpush1.msra.mxu0 0.0
        %1269 = vmatprep.subr.mxu0 0.0
        %1270 = vmatpush1.msra.mxu0 0.0
        %1271 = vmatprep.subr.mxu0 0.0
        %1272 = vmatpush1.msra.mxu0 0.0
        %1273 = vmatprep.subr.mxu0 0.0
        %v1274 = vand.u32 %v733, 4294901760
        %1275 = vmatpush1.msra.mxu0 %v1274
        %1276 = vmatprep.subr.mxu0 0.0
        %v1277 = vand.u32 %v727, 4294901760
        %1278 = vmatpush1.msra.mxu0 %v1277
        %1279 = vmatprep.subr.mxu0 0.0
        %1280 = vmatpush2.msra.mxu0 0.0
        %1281 = vmatprep.subr.mxu0 0.0
        %1282 = vmatpush2.msra.mxu0 0.0
        %1283 = vmatprep.subr.mxu0 0.0
        %1284 = vmatpush2.msra.mxu0 0.0
        %1285 = vmatprep.subr.mxu0 0.0
        %1286 = vmatpush2.msra.mxu0 0.0
        %1287 = vmatprep.subr.mxu0 0.0
        %1288 = vmatpush2.msra.mxu0 0.0
        %1289 = vmatprep.subr.mxu0 0.0
        %1290 = vmatpush2.msra.mxu0 0.0
        %1291 = vmatprep.subr.mxu0 0.0
        %1292 = vmatpush2.msra.mxu0 0.0
        %1293 = vmatprep.subr.mxu0 0.0
        %1294 = vmatpush2.msra.mxu0 0.0
        %1295 = vmatprep.subr.mxu0 0.0
        %1296 = vmatpush2.msra.mxu0 0.0
        %1297 = vmatprep.subr.mxu0 0.0
        %1298 = vmatpush2.msra.mxu0 0.0
        %1299 = vmatprep.subr.mxu0 0.0
        %1300 = vmatpush2.msra.mxu0 0.0
        %1301 = vmatprep.subr.mxu0 0.0
        %1302 = vmatpush2.msra.mxu0 0.0
        %1303 = vmatprep.subr.mxu0 0.0
        %1304 = vmatpush2.msra.mxu0 0.0
        %1305 = vmatprep.subr.mxu0 0.0
        %1306 = vmatpush2.msra.mxu0 0.0
        %1307 = vmatprep.subr.mxu0 0.0
        %1308 = vmatpush2.msra.mxu0 0.0
        %1309 = vmatprep.subr.mxu0 0.0
        %1310 = vmatpush2.msra.mxu0 0.0
        %1311 = vmatprep.mubr.f32.mxu0 0.0
        %v1312 = vand.u32 %v737, 4294901760
        %1313 = vmatmul.mubr.f32.gmra.mxu0 %v1312
        %v1314 = vpop.f32.mrf.mxu0
        %v1315 = vadd.f32 %v1224, %v1314
        %v1316 = vpop.f32.mrf.mxu0
        %1317 = vmatprep.mubr.f32.mxu0 0.0
        %v1318 = vand.u32 %v740, 4294901760
        %1319 = vmatmul.mubr.f32.gmra.mxu0 %v1318
        %v1320 = vpop.f32.mrf.mxu0
        %v1321 = vadd.f32 %v1230, %v1320
        %v1322 = vpop.f32.mrf.mxu0
        %1323 = vmatprep.mubr.f32.mxu0 0.0
        %v1324 = vand.u32 %v743, 4294901760
        %1325 = vmatmul.mubr.f32.gmra.mxu0 %v1324
        %v1326 = vpop.f32.mrf.mxu0
        %v1327 = vadd.f32 %v1236, %v1326
        %v1328 = vpop.f32.mrf.mxu0
        %1329 = vmatprep.mubr.f32.mxu0 0.0
        %v1330 = vand.u32 %v746, 4294901760
        %1331 = vmatmul.mubr.f32.gmra.mxu0 %v1330
        %v1332 = vpop.f32.mrf.mxu0
        %v1333 = vadd.f32 %v1242, %v1332
        %v1334 = vpop.f32.mrf.mxu0
        %1335 = vdwg.mxu0
        %vm1336 = vcmask 261120
        %1337 = vst.msk [vmem:[%s216] sm:$0xff] %vm1336, %v1315
        %1338 = vst.msk [vmem:[%s216 + $0x8] sm:$0xff] %vm1336, %v1321
        %1339 = vst.msk [vmem:[%s216 + $0x10] sm:$0xff] %vm1336, %v1327
        %1340 = vst.msk [vmem:[%s216 + $0x18] sm:$0xff] %vm1336, %v1333
        %s1341 = scalar_lea.vmem %s194, 16 [#allocation7]
        %v1342 = vld [vmem:[%s1341] sm:$0xff]
        %v1343 = vld [vmem:[%s1341 + $0x8] sm:$0xff]
        %v1345 = vsel %vm227, %v1342, 0
        %v1348 = vsel %vm227, %v1343, 0
        %1350 = vmatprep.subr.mxu0 0.0
        %1351 = vmatpush1.msra.mxu0 0.0
        %1352 = vmatprep.subr.mxu0 0.0
        %1353 = vmatpush1.msra.mxu0 0.0
        %1354 = vmatprep.subr.mxu0 0.0
        %1355 = vmatpush1.msra.mxu0 0.0
        %1356 = vmatprep.subr.mxu0 0.0
        %1357 = vmatpush1.msra.mxu0 0.0
        %1358 = vmatprep.subr.mxu0 0.0
        %1359 = vmatpush1.msra.mxu0 0.0
        %1360 = vmatprep.subr.mxu0 0.0
        %1361 = vmatpush1.msra.mxu0 0.0
        %1362 = vmatprep.subr.mxu0 0.0
        %1363 = vmatpush1.msra.mxu0 0.0
        %1364 = vmatprep.subr.mxu0 0.0
        %1365 = vmatpush1.msra.mxu0 0.0
        %1366 = vmatprep.subr.mxu0 0.0
        %1367 = vmatpush1.msra.mxu0 0.0
        %1368 = vmatprep.subr.mxu0 0.0
        %1369 = vmatpush1.msra.mxu0 0.0
        %1370 = vmatprep.subr.mxu0 0.0
        %1371 = vmatpush1.msra.mxu0 0.0
        %1372 = vmatprep.subr.mxu0 0.0
        %1373 = vmatpush1.msra.mxu0 0.0
        %1374 = vmatprep.subr.mxu0 0.0
        %1375 = vmatpush1.msra.mxu0 0.0
        %1376 = vmatprep.subr.mxu0 0.0
        %1377 = vmatpush1.msra.mxu0 0.0
        %1378 = vmatprep.subr.mxu0 0.0
        %v1379 = vand.u32 %v224, 4294901760
        %1380 = vmatpush1.msra.mxu0 %v1379
        %1381 = vmatprep.subr.mxu0 0.0
        %v1382 = vand.u32 %v223, 4294901760
        %1383 = vmatpush1.msra.mxu0 %v1382
        %1384 = vmatprep.subr.mxu0 0.0
        %1385 = vmatpush2.msra.mxu0 0.0
        %1386 = vmatprep.subr.mxu0 0.0
        %1387 = vmatpush2.msra.mxu0 0.0
        %1388 = vmatprep.subr.mxu0 0.0
        %1389 = vmatpush2.msra.mxu0 0.0
        %1390 = vmatprep.subr.mxu0 0.0
        %1391 = vmatpush2.msra.mxu0 0.0
        %1392 = vmatprep.subr.mxu0 0.0
        %1393 = vmatpush2.msra.mxu0 0.0
        %1394 = vmatprep.subr.mxu0 0.0
        %1395 = vmatpush2.msra.mxu0 0.0
        %1396 = vmatprep.subr.mxu0 0.0
        %1397 = vmatpush2.msra.mxu0 0.0
        %1398 = vmatprep.subr.mxu0 0.0
        %1399 = vmatpush2.msra.mxu0 0.0
        %1400 = vmatprep.subr.mxu0 0.0
        %1401 = vmatpush2.msra.mxu0 0.0
        %1402 = vmatprep.subr.mxu0 0.0
        %1403 = vmatpush2.msra.mxu0 0.0
        %1404 = vmatprep.subr.mxu0 0.0
        %1405 = vmatpush2.msra.mxu0 0.0
        %1406 = vmatprep.subr.mxu0 0.0
        %1407 = vmatpush2.msra.mxu0 0.0
        %1408 = vmatprep.subr.mxu0 0.0
        %1409 = vmatpush2.msra.mxu0 0.0
        %1410 = vmatprep.subr.mxu0 0.0
        %1411 = vmatpush2.msra.mxu0 0.0
        %1412 = vmatprep.subr.mxu0 0.0
        %1413 = vmatpush2.msra.mxu0 0.0
        %1414 = vmatprep.subr.mxu0 0.0
        %1415 = vmatpush2.msra.mxu0 0.0
        %1416 = vmatprep.mubr.f32.mxu0 0.0
        %v1417 = vand.u32 %v1345, 4294901760
        %v1418 = vsub.f32 %v1345, %v1417
        %v1419 = vand.u32 %v1418, 4294901760
        %v1420 = vsub.f32 %v1418, %v1419
        %v1421 = vand.u32 %v1420, 4294901760
        %1422 = vmatmul.mubr.f32.gmra.mxu0 %v1421
        %v1423 = vpop.f32.mrf.mxu0
        %v1424 = vadd.f32 0.0, %v1423
        %v1425 = vpop.f32.mrf.mxu0
        %1426 = vmatprep.mubr.f32.mxu0 0.0
        %v1427 = vand.u32 %v1348, 4294901760
        %v1428 = vsub.f32 %v1348, %v1427
        %v1429 = vand.u32 %v1428, 4294901760
        %v1430 = vsub.f32 %v1428, %v1429
        %v1431 = vand.u32 %v1430, 4294901760
        %1432 = vmatmul.mubr.f32.gmra.mxu0 %v1431
        %v1433 = vpop.f32.mrf.mxu0
        %v1434 = vadd.f32 0.0, %v1433
        %v1435 = vpop.f32.mrf.mxu0
        %1436 = vdwg.mxu0
        %1437 = vmatprep.subr.mxu0 0.0
        %1438 = vmatpush1.msra.mxu0 0.0
        %1439 = vmatprep.subr.mxu0 0.0
        %1440 = vmatpush1.msra.mxu0 0.0
        %1441 = vmatprep.subr.mxu0 0.0
        %1442 = vmatpush1.msra.mxu0 0.0
        %1443 = vmatprep.subr.mxu0 0.0
        %1444 = vmatpush1.msra.mxu0 0.0
        %1445 = vmatprep.subr.mxu0 0.0
        %1446 = vmatpush1.msra.mxu0 0.0
        %1447 = vmatprep.subr.mxu0 0.0
        %1448 = vmatpush1.msra.mxu0 0.0
        %1449 = vmatprep.subr.mxu0 0.0
        %1450 = vmatpush1.msra.mxu0 0.0
        %1451 = vmatprep.subr.mxu0 0.0
        %1452 = vmatpush1.msra.mxu0 0.0
        %1453 = vmatprep.subr.mxu0 0.0
        %1454 = vmatpush1.msra.mxu0 0.0
        %1455 = vmatprep.subr.mxu0 0.0
        %1456 = vmatpush1.msra.mxu0 0.0
        %1457 = vmatprep.subr.mxu0 0.0
        %1458 = vmatpush1.msra.mxu0 0.0
        %1459 = vmatprep.subr.mxu0 0.0
        %1460 = vmatpush1.msra.mxu0 0.0
        %1461 = vmatprep.subr.mxu0 0.0
        %1462 = vmatpush1.msra.mxu0 0.0
        %1463 = vmatprep.subr.mxu0 0.0
        %1464 = vmatpush1.msra.mxu0 0.0
        %1465 = vmatprep.subr.mxu0 0.0
        %v1466 = vand.u32 %v224, 4294901760
        %v1467 = vsub.f32 %v224, %v1466
        %v1468 = vand.u32 %v1467, 4294901760
        %v1469 = vsub.f32 %v1467, %v1468
        %v1470 = vand.u32 %v1469, 4294901760
        %1471 = vmatpush1.msra.mxu0 %v1470
        %1472 = vmatprep.subr.mxu0 0.0
        %v1473 = vand.u32 %v223, 4294901760
        %v1474 = vsub.f32 %v223, %v1473
        %v1475 = vand.u32 %v1474, 4294901760
        %v1476 = vsub.f32 %v1474, %v1475
        %v1477 = vand.u32 %v1476, 4294901760
        %1478 = vmatpush1.msra.mxu0 %v1477
        %1479 = vmatprep.subr.mxu0 0.0
        %1480 = vmatpush2.msra.mxu0 0.0
        %1481 = vmatprep.subr.mxu0 0.0
        %1482 = vmatpush2.msra.mxu0 0.0
        %1483 = vmatprep.subr.mxu0 0.0
        %1484 = vmatpush2.msra.mxu0 0.0
        %1485 = vmatprep.subr.mxu0 0.0
        %1486 = vmatpush2.msra.mxu0 0.0
        %1487 = vmatprep.subr.mxu0 0.0
        %1488 = vmatpush2.msra.mxu0 0.0
        %1489 = vmatprep.subr.mxu0 0.0
        %1490 = vmatpush2.msra.mxu0 0.0
        %1491 = vmatprep.subr.mxu0 0.0
        %1492 = vmatpush2.msra.mxu0 0.0
        %1493 = vmatprep.subr.mxu0 0.0
        %1494 = vmatpush2.msra.mxu0 0.0
        %1495 = vmatprep.subr.mxu0 0.0
        %1496 = vmatpush2.msra.mxu0 0.0
        %1497 = vmatprep.subr.mxu0 0.0
        %1498 = vmatpush2.msra.mxu0 0.0
        %1499 = vmatprep.subr.mxu0 0.0
        %1500 = vmatpush2.msra.mxu0 0.0
        %1501 = vmatprep.subr.mxu0 0.0
        %1502 = vmatpush2.msra.mxu0 0.0
        %1503 = vmatprep.subr.mxu0 0.0
        %1504 = vmatpush2.msra.mxu0 0.0
        %1505 = vmatprep.subr.mxu0 0.0
        %1506 = vmatpush2.msra.mxu0 0.0
        %1507 = vmatprep.subr.mxu0 0.0
        %1508 = vmatpush2.msra.mxu0 0.0
        %1509 = vmatprep.subr.mxu0 0.0
        %1510 = vmatpush2.msra.mxu0 0.0
        %1511 = vmatprep.mubr.f32.mxu0 0.0
        %v1512 = vand.u32 %v1345, 4294901760
        %1513 = vmatmul.mubr.f32.gmra.mxu0 %v1512
        %v1514 = vpop.f32.mrf.mxu0
        %v1515 = vadd.f32 %v1424, %v1514
        %v1516 = vpop.f32.mrf.mxu0
        %1517 = vmatprep.mubr.f32.mxu0 0.0
        %v1518 = vand.u32 %v1348, 4294901760
        %1519 = vmatmul.mubr.f32.gmra.mxu0 %v1518
        %v1520 = vpop.f32.mrf.mxu0
        %v1521 = vadd.f32 %v1434, %v1520
        %v1522 = vpop.f32.mrf.mxu0
        %1523 = vdwg.mxu0
        %1524 = vmatprep.subr.mxu0 0.0
        %1525 = vmatpush1.msra.mxu0 0.0
        %1526 = vmatprep.subr.mxu0 0.0
        %1527 = vmatpush1.msra.mxu0 0.0
        %1528 = vmatprep.subr.mxu0 0.0
        %1529 = vmatpush1.msra.mxu0 0.0
        %1530 = vmatprep.subr.mxu0 0.0
        %1531 = vmatpush1.msra.mxu0 0.0
        %1532 = vmatprep.subr.mxu0 0.0
        %1533 = vmatpush1.msra.mxu0 0.0
        %1534 = vmatprep.subr.mxu0 0.0
        %1535 = vmatpush1.msra.mxu0 0.0
        %1536 = vmatprep.subr.mxu0 0.0
        %1537 = vmatpush1.msra.mxu0 0.0
        %1538 = vmatprep.subr.mxu0 0.0
        %1539 = vmatpush1.msra.mxu0 0.0
        %1540 = vmatprep.subr.mxu0 0.0
        %1541 = vmatpush1.msra.mxu0 0.0
        %1542 = vmatprep.subr.mxu0 0.0
        %1543 = vmatpush1.msra.mxu0 0.0
        %1544 = vmatprep.subr.mxu0 0.0
        %1545 = vmatpush1.msra.mxu0 0.0
        %1546 = vmatprep.subr.mxu0 0.0
        %1547 = vmatpush1.msra.mxu0 0.0
        %1548 = vmatprep.subr.mxu0 0.0
        %1549 = vmatpush1.msra.mxu0 0.0
        %1550 = vmatprep.subr.mxu0 0.0
        %1551 = vmatpush1.msra.mxu0 0.0
        %1552 = vmatprep.subr.mxu0 0.0
        %v1553 = vand.u32 %v224, 4294901760
        %v1554 = vsub.f32 %v224, %v1553
        %1555 = vmatpush1.msra.mxu0 %v1554
        %1556 = vmatprep.subr.mxu0 0.0
        %v1557 = vand.u32 %v223, 4294901760
        %v1558 = vsub.f32 %v223, %v1557
        %1559 = vmatpush1.msra.mxu0 %v1558
        %1560 = vmatprep.subr.mxu0 0.0
        %1561 = vmatpush2.msra.mxu0 0.0
        %1562 = vmatprep.subr.mxu0 0.0
        %1563 = vmatpush2.msra.mxu0 0.0
        %1564 = vmatprep.subr.mxu0 0.0
        %1565 = vmatpush2.msra.mxu0 0.0
        %1566 = vmatprep.subr.mxu0 0.0
        %1567 = vmatpush2.msra.mxu0 0.0
        %1568 = vmatprep.subr.mxu0 0.0
        %1569 = vmatpush2.msra.mxu0 0.0
        %1570 = vmatprep.subr.mxu0 0.0
        %1571 = vmatpush2.msra.mxu0 0.0
        %1572 = vmatprep.subr.mxu0 0.0
        %1573 = vmatpush2.msra.mxu0 0.0
        %1574 = vmatprep.subr.mxu0 0.0
        %1575 = vmatpush2.msra.mxu0 0.0
        %1576 = vmatprep.subr.mxu0 0.0
        %1577 = vmatpush2.msra.mxu0 0.0
        %1578 = vmatprep.subr.mxu0 0.0
        %1579 = vmatpush2.msra.mxu0 0.0
        %1580 = vmatprep.subr.mxu0 0.0
        %1581 = vmatpush2.msra.mxu0 0.0
        %1582 = vmatprep.subr.mxu0 0.0
        %1583 = vmatpush2.msra.mxu0 0.0
        %1584 = vmatprep.subr.mxu0 0.0
        %1585 = vmatpush2.msra.mxu0 0.0
        %1586 = vmatprep.subr.mxu0 0.0
        %1587 = vmatpush2.msra.mxu0 0.0
        %1588 = vmatprep.subr.mxu0 0.0
        %1589 = vmatpush2.msra.mxu0 0.0
        %1590 = vmatprep.subr.mxu0 0.0
        %1591 = vmatpush2.msra.mxu0 0.0
        %1592 = vmatprep.mubr.f32.mxu0 0.0
        %v1593 = vand.u32 %v1345, 4294901760
        %v1594 = vsub.f32 %v1345, %v1593
        %1595 = vmatmul.mubr.f32.gmra.mxu0 %v1594
        %v1596 = vpop.f32.mrf.mxu0
        %v1597 = vadd.f32 %v1515, %v1596
        %v1598 = vpop.f32.mrf.mxu0
        %1599 = vmatprep.mubr.f32.mxu0 0.0
        %v1600 = vand.u32 %v1348, 4294901760
        %v1601 = vsub.f32 %v1348, %v1600
        %1602 = vmatmul.mubr.f32.gmra.mxu0 %v1601
        %v1603 = vpop.f32.mrf.mxu0
        %v1604 = vadd.f32 %v1521, %v1603
        %v1605 = vpop.f32.mrf.mxu0
        %1606 = vdwg.mxu0
        %1607 = vmatprep.subr.mxu0 0.0
        %1608 = vmatpush1.msra.mxu0 0.0
        %1609 = vmatprep.subr.mxu0 0.0
        %1610 = vmatpush1.msra.mxu0 0.0
        %1611 = vmatprep.subr.mxu0 0.0
        %1612 = vmatpush1.msra.mxu0 0.0
        %1613 = vmatprep.subr.mxu0 0.0
        %1614 = vmatpush1.msra.mxu0 0.0
        %1615 = vmatprep.subr.mxu0 0.0
        %1616 = vmatpush1.msra.mxu0 0.0
        %1617 = vmatprep.subr.mxu0 0.0
        %1618 = vmatpush1.msra.mxu0 0.0
        %1619 = vmatprep.subr.mxu0 0.0
        %1620 = vmatpush1.msra.mxu0 0.0
        %1621 = vmatprep.subr.mxu0 0.0
        %1622 = vmatpush1.msra.mxu0 0.0
        %1623 = vmatprep.subr.mxu0 0.0
        %1624 = vmatpush1.msra.mxu0 0.0
        %1625 = vmatprep.subr.mxu0 0.0
        %1626 = vmatpush1.msra.mxu0 0.0
        %1627 = vmatprep.subr.mxu0 0.0
        %1628 = vmatpush1.msra.mxu0 0.0
        %1629 = vmatprep.subr.mxu0 0.0
        %1630 = vmatpush1.msra.mxu0 0.0
        %1631 = vmatprep.subr.mxu0 0.0
        %1632 = vmatpush1.msra.mxu0 0.0
        %1633 = vmatprep.subr.mxu0 0.0
        %1634 = vmatpush1.msra.mxu0 0.0
        %1635 = vmatprep.subr.mxu0 0.0
        %v1636 = vand.u32 %v224, 4294901760
        %1637 = vmatpush1.msra.mxu0 %v1636
        %1638 = vmatprep.subr.mxu0 0.0
        %v1639 = vand.u32 %v223, 4294901760
        %1640 = vmatpush1.msra.mxu0 %v1639
        %1641 = vmatprep.subr.mxu0 0.0
        %1642 = vmatpush2.msra.mxu0 0.0
        %1643 = vmatprep.subr.mxu0 0.0
        %1644 = vmatpush2.msra.mxu0 0.0
        %1645 = vmatprep.subr.mxu0 0.0
        %1646 = vmatpush2.msra.mxu0 0.0
        %1647 = vmatprep.subr.mxu0 0.0
        %1648 = vmatpush2.msra.mxu0 0.0
        %1649 = vmatprep.subr.mxu0 0.0
        %1650 = vmatpush2.msra.mxu0 0.0
        %1651 = vmatprep.subr.mxu0 0.0
        %1652 = vmatpush2.msra.mxu0 0.0
        %1653 = vmatprep.subr.mxu0 0.0
        %1654 = vmatpush2.msra.mxu0 0.0
        %1655 = vmatprep.subr.mxu0 0.0
        %1656 = vmatpush2.msra.mxu0 0.0
        %1657 = vmatprep.subr.mxu0 0.0
        %1658 = vmatpush2.msra.mxu0 0.0
        %1659 = vmatprep.subr.mxu0 0.0
        %1660 = vmatpush2.msra.mxu0 0.0
        %1661 = vmatprep.subr.mxu0 0.0
        %1662 = vmatpush2.msra.mxu0 0.0
        %1663 = vmatprep.subr.mxu0 0.0
        %1664 = vmatpush2.msra.mxu0 0.0
        %1665 = vmatprep.subr.mxu0 0.0
        %1666 = vmatpush2.msra.mxu0 0.0
        %1667 = vmatprep.subr.mxu0 0.0
        %1668 = vmatpush2.msra.mxu0 0.0
        %1669 = vmatprep.subr.mxu0 0.0
        %1670 = vmatpush2.msra.mxu0 0.0
        %1671 = vmatprep.subr.mxu0 0.0
        %1672 = vmatpush2.msra.mxu0 0.0
        %1673 = vmatprep.mubr.f32.mxu0 0.0
        %v1674 = vand.u32 %v1345, 4294901760
        %v1675 = vsub.f32 %v1345, %v1674
        %v1676 = vand.u32 %v1675, 4294901760
        %1677 = vmatmul.mubr.f32.gmra.mxu0 %v1676
        %v1678 = vpop.f32.mrf.mxu0
        %v1679 = vadd.f32 %v1597, %v1678
        %v1680 = vpop.f32.mrf.mxu0
        %1681 = vmatprep.mubr.f32.mxu0 0.0
        %v1682 = vand.u32 %v1348, 4294901760
        %v1683 = vsub.f32 %v1348, %v1682
        %v1684 = vand.u32 %v1683, 4294901760
        %1685 = vmatmul.mubr.f32.gmra.mxu0 %v1684
        %v1686 = vpop.f32.mrf.mxu0
        %v1687 = vadd.f32 %v1604, %v1686
        %v1688 = vpop.f32.mrf.mxu0
        %1689 = vdwg.mxu0
        %1690 = vmatprep.subr.mxu0 0.0
        %1691 = vmatpush1.msra.mxu0 0.0
        %1692 = vmatprep.subr.mxu0 0.0
        %1693 = vmatpush1.msra.mxu0 0.0
        %1694 = vmatprep.subr.mxu0 0.0
        %1695 = vmatpush1.msra.mxu0 0.0
        %1696 = vmatprep.subr.mxu0 0.0
        %1697 = vmatpush1.msra.mxu0 0.0
        %1698 = vmatprep.subr.mxu0 0.0
        %1699 = vmatpush1.msra.mxu0 0.0
        %1700 = vmatprep.subr.mxu0 0.0
        %1701 = vmatpush1.msra.mxu0 0.0
        %1702 = vmatprep.subr.mxu0 0.0
        %1703 = vmatpush1.msra.mxu0 0.0
        %1704 = vmatprep.subr.mxu0 0.0
        %1705 = vmatpush1.msra.mxu0 0.0
        %1706 = vmatprep.subr.mxu0 0.0
        %1707 = vmatpush1.msra.mxu0 0.0
        %1708 = vmatprep.subr.mxu0 0.0
        %1709 = vmatpush1.msra.mxu0 0.0
        %1710 = vmatprep.subr.mxu0 0.0
        %1711 = vmatpush1.msra.mxu0 0.0
        %1712 = vmatprep.subr.mxu0 0.0
        %1713 = vmatpush1.msra.mxu0 0.0
        %1714 = vmatprep.subr.mxu0 0.0
        %1715 = vmatpush1.msra.mxu0 0.0
        %1716 = vmatprep.subr.mxu0 0.0
        %1717 = vmatpush1.msra.mxu0 0.0
        %1718 = vmatprep.subr.mxu0 0.0
        %v1719 = vand.u32 %v224, 4294901760
        %v1720 = vsub.f32 %v224, %v1719
        %v1721 = vand.u32 %v1720, 4294901760
        %1722 = vmatpush1.msra.mxu0 %v1721
        %1723 = vmatprep.subr.mxu0 0.0
        %v1724 = vand.u32 %v223, 4294901760
        %v1725 = vsub.f32 %v223, %v1724
        %v1726 = vand.u32 %v1725, 4294901760
        %1727 = vmatpush1.msra.mxu0 %v1726
        %1728 = vmatprep.subr.mxu0 0.0
        %1729 = vmatpush2.msra.mxu0 0.0
        %1730 = vmatprep.subr.mxu0 0.0
        %1731 = vmatpush2.msra.mxu0 0.0
        %1732 = vmatprep.subr.mxu0 0.0
        %1733 = vmatpush2.msra.mxu0 0.0
        %1734 = vmatprep.subr.mxu0 0.0
        %1735 = vmatpush2.msra.mxu0 0.0
        %1736 = vmatprep.subr.mxu0 0.0
        %1737 = vmatpush2.msra.mxu0 0.0
        %1738 = vmatprep.subr.mxu0 0.0
        %1739 = vmatpush2.msra.mxu0 0.0
        %1740 = vmatprep.subr.mxu0 0.0
        %1741 = vmatpush2.msra.mxu0 0.0
        %1742 = vmatprep.subr.mxu0 0.0
        %1743 = vmatpush2.msra.mxu0 0.0
        %1744 = vmatprep.subr.mxu0 0.0
        %1745 = vmatpush2.msra.mxu0 0.0
        %1746 = vmatprep.subr.mxu0 0.0
        %1747 = vmatpush2.msra.mxu0 0.0
        %1748 = vmatprep.subr.mxu0 0.0
        %1749 = vmatpush2.msra.mxu0 0.0
        %1750 = vmatprep.subr.mxu0 0.0
        %1751 = vmatpush2.msra.mxu0 0.0
        %1752 = vmatprep.subr.mxu0 0.0
        %1753 = vmatpush2.msra.mxu0 0.0
        %1754 = vmatprep.subr.mxu0 0.0
        %1755 = vmatpush2.msra.mxu0 0.0
        %1756 = vmatprep.subr.mxu0 0.0
        %1757 = vmatpush2.msra.mxu0 0.0
        %1758 = vmatprep.subr.mxu0 0.0
        %1759 = vmatpush2.msra.mxu0 0.0
        %1760 = vmatprep.mubr.f32.mxu0 0.0
        %v1761 = vand.u32 %v1345, 4294901760
        %1762 = vmatmul.mubr.f32.gmra.mxu0 %v1761
        %v1763 = vpop.f32.mrf.mxu0
        %v1764 = vadd.f32 %v1679, %v1763
        %v1765 = vpop.f32.mrf.mxu0
        %1766 = vmatprep.mubr.f32.mxu0 0.0
        %v1767 = vand.u32 %v1348, 4294901760
        %1768 = vmatmul.mubr.f32.gmra.mxu0 %v1767
        %v1769 = vpop.f32.mrf.mxu0
        %v1770 = vadd.f32 %v1687, %v1769
        %v1771 = vpop.f32.mrf.mxu0
        %1772 = vdwg.mxu0
        %1773 = vmatprep.subr.mxu0 0.0
        %1774 = vmatpush1.msra.mxu0 0.0
        %1775 = vmatprep.subr.mxu0 0.0
        %1776 = vmatpush1.msra.mxu0 0.0
        %1777 = vmatprep.subr.mxu0 0.0
        %1778 = vmatpush1.msra.mxu0 0.0
        %1779 = vmatprep.subr.mxu0 0.0
        %1780 = vmatpush1.msra.mxu0 0.0
        %1781 = vmatprep.subr.mxu0 0.0
        %1782 = vmatpush1.msra.mxu0 0.0
        %1783 = vmatprep.subr.mxu0 0.0
        %1784 = vmatpush1.msra.mxu0 0.0
        %1785 = vmatprep.subr.mxu0 0.0
        %1786 = vmatpush1.msra.mxu0 0.0
        %1787 = vmatprep.subr.mxu0 0.0
        %1788 = vmatpush1.msra.mxu0 0.0
        %1789 = vmatprep.subr.mxu0 0.0
        %1790 = vmatpush1.msra.mxu0 0.0
        %1791 = vmatprep.subr.mxu0 0.0
        %1792 = vmatpush1.msra.mxu0 0.0
        %1793 = vmatprep.subr.mxu0 0.0
        %1794 = vmatpush1.msra.mxu0 0.0
        %1795 = vmatprep.subr.mxu0 0.0
        %1796 = vmatpush1.msra.mxu0 0.0
        %1797 = vmatprep.subr.mxu0 0.0
        %1798 = vmatpush1.msra.mxu0 0.0
        %1799 = vmatprep.subr.mxu0 0.0
        %1800 = vmatpush1.msra.mxu0 0.0
        %1801 = vmatprep.subr.mxu0 0.0
        %v1802 = vand.u32 %v224, 4294901760
        %1803 = vmatpush1.msra.mxu0 %v1802
        %1804 = vmatprep.subr.mxu0 0.0
        %v1805 = vand.u32 %v223, 4294901760
        %1806 = vmatpush1.msra.mxu0 %v1805
        %1807 = vmatprep.subr.mxu0 0.0
        %1808 = vmatpush2.msra.mxu0 0.0
        %1809 = vmatprep.subr.mxu0 0.0
        %1810 = vmatpush2.msra.mxu0 0.0
        %1811 = vmatprep.subr.mxu0 0.0
        %1812 = vmatpush2.msra.mxu0 0.0
        %1813 = vmatprep.subr.mxu0 0.0
        %1814 = vmatpush2.msra.mxu0 0.0
        %1815 = vmatprep.subr.mxu0 0.0
        %1816 = vmatpush2.msra.mxu0 0.0
        %1817 = vmatprep.subr.mxu0 0.0
        %1818 = vmatpush2.msra.mxu0 0.0
        %1819 = vmatprep.subr.mxu0 0.0
        %1820 = vmatpush2.msra.mxu0 0.0
        %1821 = vmatprep.subr.mxu0 0.0
        %1822 = vmatpush2.msra.mxu0 0.0
        %1823 = vmatprep.subr.mxu0 0.0
        %1824 = vmatpush2.msra.mxu0 0.0
        %1825 = vmatprep.subr.mxu0 0.0
        %1826 = vmatpush2.msra.mxu0 0.0
        %1827 = vmatprep.subr.mxu0 0.0
        %1828 = vmatpush2.msra.mxu0 0.0
        %1829 = vmatprep.subr.mxu0 0.0
        %1830 = vmatpush2.msra.mxu0 0.0
        %1831 = vmatprep.subr.mxu0 0.0
        %1832 = vmatpush2.msra.mxu0 0.0
        %1833 = vmatprep.subr.mxu0 0.0
        %1834 = vmatpush2.msra.mxu0 0.0
        %1835 = vmatprep.subr.mxu0 0.0
        %1836 = vmatpush2.msra.mxu0 0.0
        %1837 = vmatprep.subr.mxu0 0.0
        %1838 = vmatpush2.msra.mxu0 0.0
        %1839 = vmatprep.mubr.f32.mxu0 0.0
        %v1840 = vand.u32 %v1345, 4294901760
        %1841 = vmatmul.mubr.f32.gmra.mxu0 %v1840
        %v1842 = vpop.f32.mrf.mxu0
        %v1843 = vadd.f32 %v1764, %v1842
        %v1844 = vpop.f32.mrf.mxu0
        %1845 = vmatprep.mubr.f32.mxu0 0.0
        %v1846 = vand.u32 %v1348, 4294901760
        %1847 = vmatmul.mubr.f32.gmra.mxu0 %v1846
        %v1848 = vpop.f32.mrf.mxu0
        %v1849 = vadd.f32 %v1770, %v1848
        %v1850 = vpop.f32.mrf.mxu0
        %1851 = vdwg.mxu0
        %1852 = vmatprep.subr.mxu0 0.0
        %1853 = vmatpush1.msra.mxu0 0.0
        %1854 = vmatprep.subr.mxu0 0.0
        %1855 = vmatpush1.msra.mxu0 0.0
        %1856 = vmatprep.subr.mxu0 0.0
        %1857 = vmatpush1.msra.mxu0 0.0
        %1858 = vmatprep.subr.mxu0 0.0
        %1859 = vmatpush1.msra.mxu0 0.0
        %1860 = vmatprep.subr.mxu0 0.0
        %1861 = vmatpush1.msra.mxu0 0.0
        %1862 = vmatprep.subr.mxu0 0.0
        %1863 = vmatpush1.msra.mxu0 0.0
        %1864 = vmatprep.subr.mxu0 0.0
        %1865 = vmatpush1.msra.mxu0 0.0
        %1866 = vmatprep.subr.mxu0 0.0
        %1867 = vmatpush1.msra.mxu0 0.0
        %1868 = vmatprep.subr.mxu0 0.0
        %1869 = vmatpush1.msra.mxu0 0.0
        %1870 = vmatprep.subr.mxu0 0.0
        %1871 = vmatpush1.msra.mxu0 0.0
        %1872 = vmatprep.subr.mxu0 0.0
        %1873 = vmatpush1.msra.mxu0 0.0
        %1874 = vmatprep.subr.mxu0 0.0
        %1875 = vmatpush1.msra.mxu0 0.0
        %1876 = vmatprep.subr.mxu0 0.0
        %1877 = vmatpush1.msra.mxu0 0.0
        %1878 = vmatprep.subr.mxu0 0.0
        %1879 = vmatpush1.msra.mxu0 0.0
        %1880 = vmatprep.subr.mxu0 0.0
        %v1881 = vand.u32 %v1849, 4294901760
        %1882 = vmatpush1.msra.mxu0 %v1881
        %1883 = vmatprep.subr.mxu0 0.0
        %v1884 = vand.u32 %v1843, 4294901760
        %1885 = vmatpush1.msra.mxu0 %v1884
        %1886 = vmatprep.subr.mxu0 0.0
        %1887 = vmatpush2.msra.mxu0 0.0
        %1888 = vmatprep.subr.mxu0 0.0
        %1889 = vmatpush2.msra.mxu0 0.0
        %1890 = vmatprep.subr.mxu0 0.0
        %1891 = vmatpush2.msra.mxu0 0.0
        %1892 = vmatprep.subr.mxu0 0.0
        %1893 = vmatpush2.msra.mxu0 0.0
        %1894 = vmatprep.subr.mxu0 0.0
        %1895 = vmatpush2.msra.mxu0 0.0
        %1896 = vmatprep.subr.mxu0 0.0
        %1897 = vmatpush2.msra.mxu0 0.0
        %1898 = vmatprep.subr.mxu0 0.0
        %1899 = vmatpush2.msra.mxu0 0.0
        %1900 = vmatprep.subr.mxu0 0.0
        %1901 = vmatpush2.msra.mxu0 0.0
        %1902 = vmatprep.subr.mxu0 0.0
        %1903 = vmatpush2.msra.mxu0 0.0
        %1904 = vmatprep.subr.mxu0 0.0
        %1905 = vmatpush2.msra.mxu0 0.0
        %1906 = vmatprep.subr.mxu0 0.0
        %1907 = vmatpush2.msra.mxu0 0.0
        %1908 = vmatprep.subr.mxu0 0.0
        %1909 = vmatpush2.msra.mxu0 0.0
        %1910 = vmatprep.subr.mxu0 0.0
        %1911 = vmatpush2.msra.mxu0 0.0
        %1912 = vmatprep.subr.mxu0 0.0
        %1913 = vmatpush2.msra.mxu0 0.0
        %1914 = vmatprep.subr.mxu0 0.0
        %1915 = vmatpush2.msra.mxu0 0.0
        %1916 = vmatprep.subr.mxu0 0.0
        %1917 = vmatpush2.msra.mxu0 0.0
        %1918 = vmatprep.mubr.f32.mxu0 0.0
        %v1919 = vand.u32 %v737, 4294901760
        %v1920 = vsub.f32 %v737, %v1919
        %v1921 = vand.u32 %v1920, 4294901760
        %v1922 = vsub.f32 %v1920, %v1921
        %v1923 = vand.u32 %v1922, 4294901760
        %1924 = vmatmul.mubr.f32.gmra.mxu0 %v1923
        %v1925 = vpop.f32.mrf.mxu0
        %v1926 = vadd.f32 0.0, %v1925
        %v1927 = vpop.f32.mrf.mxu0
        %1928 = vmatprep.mubr.f32.mxu0 0.0
        %v1929 = vand.u32 %v740, 4294901760
        %v1930 = vsub.f32 %v740, %v1929
        %v1931 = vand.u32 %v1930, 4294901760
        %v1932 = vsub.f32 %v1930, %v1931
        %v1933 = vand.u32 %v1932, 4294901760
        %1934 = vmatmul.mubr.f32.gmra.mxu0 %v1933
        %v1935 = vpop.f32.mrf.mxu0
        %v1936 = vadd.f32 0.0, %v1935
        %v1937 = vpop.f32.mrf.mxu0
        %1938 = vmatprep.mubr.f32.mxu0 0.0
        %v1939 = vand.u32 %v743, 4294901760
        %v1940 = vsub.f32 %v743, %v1939
        %v1941 = vand.u32 %v1940, 4294901760
        %v1942 = vsub.f32 %v1940, %v1941
        %v1943 = vand.u32 %v1942, 4294901760
        %1944 = vmatmul.mubr.f32.gmra.mxu0 %v1943
        %v1945 = vpop.f32.mrf.mxu0
        %v1946 = vadd.f32 0.0, %v1945
        %v1947 = vpop.f32.mrf.mxu0
        %1948 = vmatprep.mubr.f32.mxu0 0.0
        %v1949 = vand.u32 %v746, 4294901760
        %v1950 = vsub.f32 %v746, %v1949
        %v1951 = vand.u32 %v1950, 4294901760
        %v1952 = vsub.f32 %v1950, %v1951
        %v1953 = vand.u32 %v1952, 4294901760
        %1954 = vmatmul.mubr.f32.gmra.mxu0 %v1953
        %v1955 = vpop.f32.mrf.mxu0
        %v1956 = vadd.f32 0.0, %v1955
        %v1957 = vpop.f32.mrf.mxu0
        %1958 = vdwg.mxu0
        %1959 = vmatprep.subr.mxu0 0.0
        %1960 = vmatpush1.msra.mxu0 0.0
        %1961 = vmatprep.subr.mxu0 0.0
        %1962 = vmatpush1.msra.mxu0 0.0
        %1963 = vmatprep.subr.mxu0 0.0
        %1964 = vmatpush1.msra.mxu0 0.0
        %1965 = vmatprep.subr.mxu0 0.0
        %1966 = vmatpush1.msra.mxu0 0.0
        %1967 = vmatprep.subr.mxu0 0.0
        %1968 = vmatpush1.msra.mxu0 0.0
        %1969 = vmatprep.subr.mxu0 0.0
        %1970 = vmatpush1.msra.mxu0 0.0
        %1971 = vmatprep.subr.mxu0 0.0
        %1972 = vmatpush1.msra.mxu0 0.0
        %1973 = vmatprep.subr.mxu0 0.0
        %1974 = vmatpush1.msra.mxu0 0.0
        %1975 = vmatprep.subr.mxu0 0.0
        %1976 = vmatpush1.msra.mxu0 0.0
        %1977 = vmatprep.subr.mxu0 0.0
        %1978 = vmatpush1.msra.mxu0 0.0
        %1979 = vmatprep.subr.mxu0 0.0
        %1980 = vmatpush1.msra.mxu0 0.0
        %1981 = vmatprep.subr.mxu0 0.0
        %1982 = vmatpush1.msra.mxu0 0.0
        %1983 = vmatprep.subr.mxu0 0.0
        %1984 = vmatpush1.msra.mxu0 0.0
        %1985 = vmatprep.subr.mxu0 0.0
        %1986 = vmatpush1.msra.mxu0 0.0
        %1987 = vmatprep.subr.mxu0 0.0
        %v1988 = vand.u32 %v1849, 4294901760
        %v1989 = vsub.f32 %v1849, %v1988
        %v1990 = vand.u32 %v1989, 4294901760
        %v1991 = vsub.f32 %v1989, %v1990
        %v1992 = vand.u32 %v1991, 4294901760
        %1993 = vmatpush1.msra.mxu0 %v1992
        %1994 = vmatprep.subr.mxu0 0.0
        %v1995 = vand.u32 %v1843, 4294901760
        %v1996 = vsub.f32 %v1843, %v1995
        %v1997 = vand.u32 %v1996, 4294901760
        %v1998 = vsub.f32 %v1996, %v1997
        %v1999 = vand.u32 %v1998, 4294901760
        %2000 = vmatpush1.msra.mxu0 %v1999
        %2001 = vmatprep.subr.mxu0 0.0
        %2002 = vmatpush2.msra.mxu0 0.0
        %2003 = vmatprep.subr.mxu0 0.0
        %2004 = vmatpush2.msra.mxu0 0.0
        %2005 = vmatprep.subr.mxu0 0.0
        %2006 = vmatpush2.msra.mxu0 0.0
        %2007 = vmatprep.subr.mxu0 0.0
        %2008 = vmatpush2.msra.mxu0 0.0
        %2009 = vmatprep.subr.mxu0 0.0
        %2010 = vmatpush2.msra.mxu0 0.0
        %2011 = vmatprep.subr.mxu0 0.0
        %2012 = vmatpush2.msra.mxu0 0.0
        %2013 = vmatprep.subr.mxu0 0.0
        %2014 = vmatpush2.msra.mxu0 0.0
        %2015 = vmatprep.subr.mxu0 0.0
        %2016 = vmatpush2.msra.mxu0 0.0
        %2017 = vmatprep.subr.mxu0 0.0
        %2018 = vmatpush2.msra.mxu0 0.0
        %2019 = vmatprep.subr.mxu0 0.0
        %2020 = vmatpush2.msra.mxu0 0.0
        %2021 = vmatprep.subr.mxu0 0.0
        %2022 = vmatpush2.msra.mxu0 0.0
        %2023 = vmatprep.subr.mxu0 0.0
        %2024 = vmatpush2.msra.mxu0 0.0
        %2025 = vmatprep.subr.mxu0 0.0
        %2026 = vmatpush2.msra.mxu0 0.0
        %2027 = vmatprep.subr.mxu0 0.0
        %2028 = vmatpush2.msra.mxu0 0.0
        %2029 = vmatprep.subr.mxu0 0.0
        %2030 = vmatpush2.msra.mxu0 0.0
        %2031 = vmatprep.subr.mxu0 0.0
        %2032 = vmatpush2.msra.mxu0 0.0
        %2033 = vmatprep.mubr.f32.mxu0 0.0
        %v2034 = vand.u32 %v737, 4294901760
        %2035 = vmatmul.mubr.f32.gmra.mxu0 %v2034
        %v2036 = vpop.f32.mrf.mxu0
        %v2037 = vadd.f32 %v1926, %v2036
        %v2038 = vpop.f32.mrf.mxu0
        %2039 = vmatprep.mubr.f32.mxu0 0.0
        %v2040 = vand.u32 %v740, 4294901760
        %2041 = vmatmul.mubr.f32.gmra.mxu0 %v2040
        %v2042 = vpop.f32.mrf.mxu0
        %v2043 = vadd.f32 %v1936, %v2042
        %v2044 = vpop.f32.mrf.mxu0
        %2045 = vmatprep.mubr.f32.mxu0 0.0
        %v2046 = vand.u32 %v743, 4294901760
        %2047 = vmatmul.mubr.f32.gmra.mxu0 %v2046
        %v2048 = vpop.f32.mrf.mxu0
        %v2049 = vadd.f32 %v1946, %v2048
        %v2050 = vpop.f32.mrf.mxu0
        %2051 = vmatprep.mubr.f32.mxu0 0.0
        %v2052 = vand.u32 %v746, 4294901760
        %2053 = vmatmul.mubr.f32.gmra.mxu0 %v2052
        %v2054 = vpop.f32.mrf.mxu0
        %v2055 = vadd.f32 %v1956, %v2054
        %v2056 = vpop.f32.mrf.mxu0
        %2057 = vdwg.mxu0
        %2058 = vmatprep.subr.mxu0 0.0
        %2059 = vmatpush1.msra.mxu0 0.0
        %2060 = vmatprep.subr.mxu0 0.0
        %2061 = vmatpush1.msra.mxu0 0.0
        %2062 = vmatprep.subr.mxu0 0.0
        %2063 = vmatpush1.msra.mxu0 0.0
        %2064 = vmatprep.subr.mxu0 0.0
        %2065 = vmatpush1.msra.mxu0 0.0
        %2066 = vmatprep.subr.mxu0 0.0
        %2067 = vmatpush1.msra.mxu0 0.0
        %2068 = vmatprep.subr.mxu0 0.0
        %2069 = vmatpush1.msra.mxu0 0.0
        %2070 = vmatprep.subr.mxu0 0.0
        %2071 = vmatpush1.msra.mxu0 0.0
        %2072 = vmatprep.subr.mxu0 0.0
        %2073 = vmatpush1.msra.mxu0 0.0
        %2074 = vmatprep.subr.mxu0 0.0
        %2075 = vmatpush1.msra.mxu0 0.0
        %2076 = vmatprep.subr.mxu0 0.0
        %2077 = vmatpush1.msra.mxu0 0.0
        %2078 = vmatprep.subr.mxu0 0.0
        %2079 = vmatpush1.msra.mxu0 0.0
        %2080 = vmatprep.subr.mxu0 0.0
        %2081 = vmatpush1.msra.mxu0 0.0
        %2082 = vmatprep.subr.mxu0 0.0
        %2083 = vmatpush1.msra.mxu0 0.0
        %2084 = vmatprep.subr.mxu0 0.0
        %2085 = vmatpush1.msra.mxu0 0.0
        %2086 = vmatprep.subr.mxu0 0.0
        %v2087 = vand.u32 %v1849, 4294901760
        %v2088 = vsub.f32 %v1849, %v2087
        %2089 = vmatpush1.msra.mxu0 %v2088
        %2090 = vmatprep.subr.mxu0 0.0
        %v2091 = vand.u32 %v1843, 4294901760
        %v2092 = vsub.f32 %v1843, %v2091
        %2093 = vmatpush1.msra.mxu0 %v2092
        %2094 = vmatprep.subr.mxu0 0.0
        %2095 = vmatpush2.msra.mxu0 0.0
        %2096 = vmatprep.subr.mxu0 0.0
        %2097 = vmatpush2.msra.mxu0 0.0
        %2098 = vmatprep.subr.mxu0 0.0
        %2099 = vmatpush2.msra.mxu0 0.0
        %2100 = vmatprep.subr.mxu0 0.0
        %2101 = vmatpush2.msra.mxu0 0.0
        %2102 = vmatprep.subr.mxu0 0.0
        %2103 = vmatpush2.msra.mxu0 0.0
        %2104 = vmatprep.subr.mxu0 0.0
        %2105 = vmatpush2.msra.mxu0 0.0
        %2106 = vmatprep.subr.mxu0 0.0
        %2107 = vmatpush2.msra.mxu0 0.0
        %2108 = vmatprep.subr.mxu0 0.0
        %2109 = vmatpush2.msra.mxu0 0.0
        %2110 = vmatprep.subr.mxu0 0.0
        %2111 = vmatpush2.msra.mxu0 0.0
        %2112 = vmatprep.subr.mxu0 0.0
        %2113 = vmatpush2.msra.mxu0 0.0
        %2114 = vmatprep.subr.mxu0 0.0
        %2115 = vmatpush2.msra.mxu0 0.0
        %2116 = vmatprep.subr.mxu0 0.0
        %2117 = vmatpush2.msra.mxu0 0.0
        %2118 = vmatprep.subr.mxu0 0.0
        %2119 = vmatpush2.msra.mxu0 0.0
        %2120 = vmatprep.subr.mxu0 0.0
        %2121 = vmatpush2.msra.mxu0 0.0
        %2122 = vmatprep.subr.mxu0 0.0
        %2123 = vmatpush2.msra.mxu0 0.0
        %2124 = vmatprep.subr.mxu0 0.0
        %2125 = vmatpush2.msra.mxu0 0.0
        %2126 = vmatprep.mubr.f32.mxu0 0.0
        %v2127 = vand.u32 %v737, 4294901760
        %v2128 = vsub.f32 %v737, %v2127
        %2129 = vmatmul.mubr.f32.gmra.mxu0 %v2128
        %v2130 = vpop.f32.mrf.mxu0
        %v2131 = vadd.f32 %v2037, %v2130
        %v2132 = vpop.f32.mrf.mxu0
        %2133 = vmatprep.mubr.f32.mxu0 0.0
        %v2134 = vand.u32 %v740, 4294901760
        %v2135 = vsub.f32 %v740, %v2134
        %2136 = vmatmul.mubr.f32.gmra.mxu0 %v2135
        %v2137 = vpop.f32.mrf.mxu0
        %v2138 = vadd.f32 %v2043, %v2137
        %v2139 = vpop.f32.mrf.mxu0
        %2140 = vmatprep.mubr.f32.mxu0 0.0
        %v2141 = vand.u32 %v743, 4294901760
        %v2142 = vsub.f32 %v743, %v2141
        %2143 = vmatmul.mubr.f32.gmra.mxu0 %v2142
        %v2144 = vpop.f32.mrf.mxu0
        %v2145 = vadd.f32 %v2049, %v2144
        %v2146 = vpop.f32.mrf.mxu0
        %2147 = vmatprep.mubr.f32.mxu0 0.0
        %v2148 = vand.u32 %v746, 4294901760
        %v2149 = vsub.f32 %v746, %v2148
        %2150 = vmatmul.mubr.f32.gmra.mxu0 %v2149
        %v2151 = vpop.f32.mrf.mxu0
        %v2152 = vadd.f32 %v2055, %v2151
        %v2153 = vpop.f32.mrf.mxu0
        %2154 = vdwg.mxu0
        %2155 = vmatprep.subr.mxu0 0.0
        %2156 = vmatpush1.msra.mxu0 0.0
        %2157 = vmatprep.subr.mxu0 0.0
        %2158 = vmatpush1.msra.mxu0 0.0
        %2159 = vmatprep.subr.mxu0 0.0
        %2160 = vmatpush1.msra.mxu0 0.0
        %2161 = vmatprep.subr.mxu0 0.0
        %2162 = vmatpush1.msra.mxu0 0.0
        %2163 = vmatprep.subr.mxu0 0.0
        %2164 = vmatpush1.msra.mxu0 0.0
        %2165 = vmatprep.subr.mxu0 0.0
        %2166 = vmatpush1.msra.mxu0 0.0
        %2167 = vmatprep.subr.mxu0 0.0
        %2168 = vmatpush1.msra.mxu0 0.0
        %2169 = vmatprep.subr.mxu0 0.0
        %2170 = vmatpush1.msra.mxu0 0.0
        %2171 = vmatprep.subr.mxu0 0.0
        %2172 = vmatpush1.msra.mxu0 0.0
        %2173 = vmatprep.subr.mxu0 0.0
        %2174 = vmatpush1.msra.mxu0 0.0
        %2175 = vmatprep.subr.mxu0 0.0
        %2176 = vmatpush1.msra.mxu0 0.0
        %2177 = vmatprep.subr.mxu0 0.0
        %2178 = vmatpush1.msra.mxu0 0.0
        %2179 = vmatprep.subr.mxu0 0.0
        %2180 = vmatpush1.msra.mxu0 0.0
        %2181 = vmatprep.subr.mxu0 0.0
        %2182 = vmatpush1.msra.mxu0 0.0
        %2183 = vmatprep.subr.mxu0 0.0
        %v2184 = vand.u32 %v1849, 4294901760
        %2185 = vmatpush1.msra.mxu0 %v2184
        %2186 = vmatprep.subr.mxu0 0.0
        %v2187 = vand.u32 %v1843, 4294901760
        %2188 = vmatpush1.msra.mxu0 %v2187
        %2189 = vmatprep.subr.mxu0 0.0
        %2190 = vmatpush2.msra.mxu0 0.0
        %2191 = vmatprep.subr.mxu0 0.0
        %2192 = vmatpush2.msra.mxu0 0.0
        %2193 = vmatprep.subr.mxu0 0.0
        %2194 = vmatpush2.msra.mxu0 0.0
        %2195 = vmatprep.subr.mxu0 0.0
        %2196 = vmatpush2.msra.mxu0 0.0
        %2197 = vmatprep.subr.mxu0 0.0
        %2198 = vmatpush2.msra.mxu0 0.0
        %2199 = vmatprep.subr.mxu0 0.0
        %2200 = vmatpush2.msra.mxu0 0.0
        %2201 = vmatprep.subr.mxu0 0.0
        %2202 = vmatpush2.msra.mxu0 0.0
        %2203 = vmatprep.subr.mxu0 0.0
        %2204 = vmatpush2.msra.mxu0 0.0
        %2205 = vmatprep.subr.mxu0 0.0
        %2206 = vmatpush2.msra.mxu0 0.0
        %2207 = vmatprep.subr.mxu0 0.0
        %2208 = vmatpush2.msra.mxu0 0.0
        %2209 = vmatprep.subr.mxu0 0.0
        %2210 = vmatpush2.msra.mxu0 0.0
        %2211 = vmatprep.subr.mxu0 0.0
        %2212 = vmatpush2.msra.mxu0 0.0
        %2213 = vmatprep.subr.mxu0 0.0
        %2214 = vmatpush2.msra.mxu0 0.0
        %2215 = vmatprep.subr.mxu0 0.0
        %2216 = vmatpush2.msra.mxu0 0.0
        %2217 = vmatprep.subr.mxu0 0.0
        %2218 = vmatpush2.msra.mxu0 0.0
        %2219 = vmatprep.subr.mxu0 0.0
        %2220 = vmatpush2.msra.mxu0 0.0
        %2221 = vmatprep.mubr.f32.mxu0 0.0
        %v2222 = vand.u32 %v737, 4294901760
        %v2223 = vsub.f32 %v737, %v2222
        %v2224 = vand.u32 %v2223, 4294901760
        %2225 = vmatmul.mubr.f32.gmra.mxu0 %v2224
        %v2226 = vpop.f32.mrf.mxu0
        %v2227 = vadd.f32 %v2131, %v2226
        %v2228 = vpop.f32.mrf.mxu0
        %2229 = vmatprep.mubr.f32.mxu0 0.0
        %v2230 = vand.u32 %v740, 4294901760
        %v2231 = vsub.f32 %v740, %v2230
        %v2232 = vand.u32 %v2231, 4294901760
        %2233 = vmatmul.mubr.f32.gmra.mxu0 %v2232
        %v2234 = vpop.f32.mrf.mxu0
        %v2235 = vadd.f32 %v2138, %v2234
        %v2236 = vpop.f32.mrf.mxu0
        %2237 = vmatprep.mubr.f32.mxu0 0.0
        %v2238 = vand.u32 %v743, 4294901760
        %v2239 = vsub.f32 %v743, %v2238
        %v2240 = vand.u32 %v2239, 4294901760
        %2241 = vmatmul.mubr.f32.gmra.mxu0 %v2240
        %v2242 = vpop.f32.mrf.mxu0
        %v2243 = vadd.f32 %v2145, %v2242
        %v2244 = vpop.f32.mrf.mxu0
        %2245 = vmatprep.mubr.f32.mxu0 0.0
        %v2246 = vand.u32 %v746, 4294901760
        %v2247 = vsub.f32 %v746, %v2246
        %v2248 = vand.u32 %v2247, 4294901760
        %2249 = vmatmul.mubr.f32.gmra.mxu0 %v2248
        %v2250 = vpop.f32.mrf.mxu0
        %v2251 = vadd.f32 %v2152, %v2250
        %v2252 = vpop.f32.mrf.mxu0
        %2253 = vdwg.mxu0
        %2254 = vmatprep.subr.mxu0 0.0
        %2255 = vmatpush1.msra.mxu0 0.0
        %2256 = vmatprep.subr.mxu0 0.0
        %2257 = vmatpush1.msra.mxu0 0.0
        %2258 = vmatprep.subr.mxu0 0.0
        %2259 = vmatpush1.msra.mxu0 0.0
        %2260 = vmatprep.subr.mxu0 0.0
        %2261 = vmatpush1.msra.mxu0 0.0
        %2262 = vmatprep.subr.mxu0 0.0
        %2263 = vmatpush1.msra.mxu0 0.0
        %2264 = vmatprep.subr.mxu0 0.0
        %2265 = vmatpush1.msra.mxu0 0.0
        %2266 = vmatprep.subr.mxu0 0.0
        %2267 = vmatpush1.msra.mxu0 0.0
        %2268 = vmatprep.subr.mxu0 0.0
        %2269 = vmatpush1.msra.mxu0 0.0
        %2270 = vmatprep.subr.mxu0 0.0
        %2271 = vmatpush1.msra.mxu0 0.0
        %2272 = vmatprep.subr.mxu0 0.0
        %2273 = vmatpush1.msra.mxu0 0.0
        %2274 = vmatprep.subr.mxu0 0.0
        %2275 = vmatpush1.msra.mxu0 0.0
        %2276 = vmatprep.subr.mxu0 0.0
        %2277 = vmatpush1.msra.mxu0 0.0
        %2278 = vmatprep.subr.mxu0 0.0
        %2279 = vmatpush1.msra.mxu0 0.0
        %2280 = vmatprep.subr.mxu0 0.0
        %2281 = vmatpush1.msra.mxu0 0.0
        %2282 = vmatprep.subr.mxu0 0.0
        %v2283 = vand.u32 %v1849, 4294901760
        %v2284 = vsub.f32 %v1849, %v2283
        %v2285 = vand.u32 %v2284, 4294901760
        %2286 = vmatpush1.msra.mxu0 %v2285
        %2287 = vmatprep.subr.mxu0 0.0
        %v2288 = vand.u32 %v1843, 4294901760
        %v2289 = vsub.f32 %v1843, %v2288
        %v2290 = vand.u32 %v2289, 4294901760
        %2291 = vmatpush1.msra.mxu0 %v2290
        %2292 = vmatprep.subr.mxu0 0.0
        %2293 = vmatpush2.msra.mxu0 0.0
        %2294 = vmatprep.subr.mxu0 0.0
        %2295 = vmatpush2.msra.mxu0 0.0
        %2296 = vmatprep.subr.mxu0 0.0
        %2297 = vmatpush2.msra.mxu0 0.0
        %2298 = vmatprep.subr.mxu0 0.0
        %2299 = vmatpush2.msra.mxu0 0.0
        %2300 = vmatprep.subr.mxu0 0.0
        %2301 = vmatpush2.msra.mxu0 0.0
        %2302 = vmatprep.subr.mxu0 0.0
        %2303 = vmatpush2.msra.mxu0 0.0
        %2304 = vmatprep.subr.mxu0 0.0
        %2305 = vmatpush2.msra.mxu0 0.0
        %2306 = vmatprep.subr.mxu0 0.0
        %2307 = vmatpush2.msra.mxu0 0.0
        %2308 = vmatprep.subr.mxu0 0.0
        %2309 = vmatpush2.msra.mxu0 0.0
        %2310 = vmatprep.subr.mxu0 0.0
        %2311 = vmatpush2.msra.mxu0 0.0
        %2312 = vmatprep.subr.mxu0 0.0
        %2313 = vmatpush2.msra.mxu0 0.0
        %2314 = vmatprep.subr.mxu0 0.0
        %2315 = vmatpush2.msra.mxu0 0.0
        %2316 = vmatprep.subr.mxu0 0.0
        %2317 = vmatpush2.msra.mxu0 0.0
        %2318 = vmatprep.subr.mxu0 0.0
        %2319 = vmatpush2.msra.mxu0 0.0
        %2320 = vmatprep.subr.mxu0 0.0
        %2321 = vmatpush2.msra.mxu0 0.0
        %2322 = vmatprep.subr.mxu0 0.0
        %2323 = vmatpush2.msra.mxu0 0.0
        %2324 = vmatprep.mubr.f32.mxu0 0.0
        %v2325 = vand.u32 %v737, 4294901760
        %2326 = vmatmul.mubr.f32.gmra.mxu0 %v2325
        %v2327 = vpop.f32.mrf.mxu0
        %v2328 = vadd.f32 %v2227, %v2327
        %v2329 = vpop.f32.mrf.mxu0
        %2330 = vmatprep.mubr.f32.mxu0 0.0
        %v2331 = vand.u32 %v740, 4294901760
        %2332 = vmatmul.mubr.f32.gmra.mxu0 %v2331
        %v2333 = vpop.f32.mrf.mxu0
        %v2334 = vadd.f32 %v2235, %v2333
        %v2335 = vpop.f32.mrf.mxu0
        %2336 = vmatprep.mubr.f32.mxu0 0.0
        %v2337 = vand.u32 %v743, 4294901760
        %2338 = vmatmul.mubr.f32.gmra.mxu0 %v2337
        %v2339 = vpop.f32.mrf.mxu0
        %v2340 = vadd.f32 %v2243, %v2339
        %v2341 = vpop.f32.mrf.mxu0
        %2342 = vmatprep.mubr.f32.mxu0 0.0
        %v2343 = vand.u32 %v746, 4294901760
        %2344 = vmatmul.mubr.f32.gmra.mxu0 %v2343
        %v2345 = vpop.f32.mrf.mxu0
        %v2346 = vadd.f32 %v2251, %v2345
        %v2347 = vpop.f32.mrf.mxu0
        %2348 = vdwg.mxu0
        %2349 = vmatprep.subr.mxu0 0.0
        %2350 = vmatpush1.msra.mxu0 0.0
        %2351 = vmatprep.subr.mxu0 0.0
        %2352 = vmatpush1.msra.mxu0 0.0
        %2353 = vmatprep.subr.mxu0 0.0
        %2354 = vmatpush1.msra.mxu0 0.0
        %2355 = vmatprep.subr.mxu0 0.0
        %2356 = vmatpush1.msra.mxu0 0.0
        %2357 = vmatprep.subr.mxu0 0.0
        %2358 = vmatpush1.msra.mxu0 0.0
        %2359 = vmatprep.subr.mxu0 0.0
        %2360 = vmatpush1.msra.mxu0 0.0
        %2361 = vmatprep.subr.mxu0 0.0
        %2362 = vmatpush1.msra.mxu0 0.0
        %2363 = vmatprep.subr.mxu0 0.0
        %2364 = vmatpush1.msra.mxu0 0.0
        %2365 = vmatprep.subr.mxu0 0.0
        %2366 = vmatpush1.msra.mxu0 0.0
        %2367 = vmatprep.subr.mxu0 0.0
        %2368 = vmatpush1.msra.mxu0 0.0
        %2369 = vmatprep.subr.mxu0 0.0
        %2370 = vmatpush1.msra.mxu0 0.0
        %2371 = vmatprep.subr.mxu0 0.0
        %2372 = vmatpush1.msra.mxu0 0.0
        %2373 = vmatprep.subr.mxu0 0.0
        %2374 = vmatpush1.msra.mxu0 0.0
        %2375 = vmatprep.subr.mxu0 0.0
        %2376 = vmatpush1.msra.mxu0 0.0
        %2377 = vmatprep.subr.mxu0 0.0
        %v2378 = vand.u32 %v1849, 4294901760
        %2379 = vmatpush1.msra.mxu0 %v2378
        %2380 = vmatprep.subr.mxu0 0.0
        %v2381 = vand.u32 %v1843, 4294901760
        %2382 = vmatpush1.msra.mxu0 %v2381
        %2383 = vmatprep.subr.mxu0 0.0
        %2384 = vmatpush2.msra.mxu0 0.0
        %2385 = vmatprep.subr.mxu0 0.0
        %2386 = vmatpush2.msra.mxu0 0.0
        %2387 = vmatprep.subr.mxu0 0.0
        %2388 = vmatpush2.msra.mxu0 0.0
        %2389 = vmatprep.subr.mxu0 0.0
        %2390 = vmatpush2.msra.mxu0 0.0
        %2391 = vmatprep.subr.mxu0 0.0
        %2392 = vmatpush2.msra.mxu0 0.0
        %2393 = vmatprep.subr.mxu0 0.0
        %2394 = vmatpush2.msra.mxu0 0.0
        %2395 = vmatprep.subr.mxu0 0.0
        %2396 = vmatpush2.msra.mxu0 0.0
        %2397 = vmatprep.subr.mxu0 0.0
        %2398 = vmatpush2.msra.mxu0 0.0
        %2399 = vmatprep.subr.mxu0 0.0
        %2400 = vmatpush2.msra.mxu0 0.0
        %2401 = vmatprep.subr.mxu0 0.0
        %2402 = vmatpush2.msra.mxu0 0.0
        %2403 = vmatprep.subr.mxu0 0.0
        %2404 = vmatpush2.msra.mxu0 0.0
        %2405 = vmatprep.subr.mxu0 0.0
        %2406 = vmatpush2.msra.mxu0 0.0
        %2407 = vmatprep.subr.mxu0 0.0
        %2408 = vmatpush2.msra.mxu0 0.0
        %2409 = vmatprep.subr.mxu0 0.0
        %2410 = vmatpush2.msra.mxu0 0.0
        %2411 = vmatprep.subr.mxu0 0.0
        %2412 = vmatpush2.msra.mxu0 0.0
        %2413 = vmatprep.subr.mxu0 0.0
        %2414 = vmatpush2.msra.mxu0 0.0
        %2415 = vmatprep.mubr.f32.mxu0 0.0
        %v2416 = vand.u32 %v737, 4294901760
        %2417 = vmatmul.mubr.f32.gmra.mxu0 %v2416
        %v2418 = vpop.f32.mrf.mxu0
        %v2419 = vadd.f32 %v2328, %v2418
        %v2420 = vpop.f32.mrf.mxu0
        %2421 = vmatprep.mubr.f32.mxu0 0.0
        %v2422 = vand.u32 %v740, 4294901760
        %2423 = vmatmul.mubr.f32.gmra.mxu0 %v2422
        %v2424 = vpop.f32.mrf.mxu0
        %v2425 = vadd.f32 %v2334, %v2424
        %v2426 = vpop.f32.mrf.mxu0
        %2427 = vmatprep.mubr.f32.mxu0 0.0
        %v2428 = vand.u32 %v743, 4294901760
        %2429 = vmatmul.mubr.f32.gmra.mxu0 %v2428
        %v2430 = vpop.f32.mrf.mxu0
        %v2431 = vadd.f32 %v2340, %v2430
        %v2432 = vpop.f32.mrf.mxu0
        %2433 = vmatprep.mubr.f32.mxu0 0.0
        %v2434 = vand.u32 %v746, 4294901760
        %2435 = vmatmul.mubr.f32.gmra.mxu0 %v2434
        %v2436 = vpop.f32.mrf.mxu0
        %v2437 = vadd.f32 %v2346, %v2436
        %v2438 = vpop.f32.mrf.mxu0
        %2439 = vdwg.mxu0
        %s2440 = scalar_lea.vmem %s216, 32 [#allocation8]
        %2441 = vst.msk [vmem:[%s2440] sm:$0xff] %vm1336, %v2419
        %2442 = vst.msk [vmem:[%s2440 + $0x8] sm:$0xff] %vm1336, %v2425
        %2443 = vst.msk [vmem:[%s2440 + $0x10] sm:$0xff] %vm1336, %v2431
        %2444 = vst.msk [vmem:[%s2440 + $0x18] sm:$0xff] %vm1336, %v2437
        %s2445 = scalar_lea.vmem %s194, 32 [#allocation7]
        %v2446 = vld [vmem:[%s2445] sm:$0xff]
        %v2447 = vld [vmem:[%s2445 + $0x8] sm:$0xff]
        %v2449 = vsel %vm227, %v2446, 0
        %v2452 = vsel %vm227, %v2447, 0
        %2454 = vmatprep.subr.mxu0 0.0
        %2455 = vmatpush1.msra.mxu0 0.0
        %2456 = vmatprep.subr.mxu0 0.0
        %2457 = vmatpush1.msra.mxu0 0.0
        %2458 = vmatprep.subr.mxu0 0.0
        %2459 = vmatpush1.msra.mxu0 0.0
        %2460 = vmatprep.subr.mxu0 0.0
        %2461 = vmatpush1.msra.mxu0 0.0
        %2462 = vmatprep.subr.mxu0 0.0
        %2463 = vmatpush1.msra.mxu0 0.0
        %2464 = vmatprep.subr.mxu0 0.0
        %2465 = vmatpush1.msra.mxu0 0.0
        %2466 = vmatprep.subr.mxu0 0.0
        %2467 = vmatpush1.msra.mxu0 0.0
        %2468 = vmatprep.subr.mxu0 0.0
        %2469 = vmatpush1.msra.mxu0 0.0
        %2470 = vmatprep.subr.mxu0 0.0
        %2471 = vmatpush1.msra.mxu0 0.0
        %2472 = vmatprep.subr.mxu0 0.0
        %2473 = vmatpush1.msra.mxu0 0.0
        %2474 = vmatprep.subr.mxu0 0.0
        %2475 = vmatpush1.msra.mxu0 0.0
        %2476 = vmatprep.subr.mxu0 0.0
        %2477 = vmatpush1.msra.mxu0 0.0
        %2478 = vmatprep.subr.mxu0 0.0
        %2479 = vmatpush1.msra.mxu0 0.0
        %2480 = vmatprep.subr.mxu0 0.0
        %2481 = vmatpush1.msra.mxu0 0.0
        %2482 = vmatprep.subr.mxu0 0.0
        %v2483 = vand.u32 %v224, 4294901760
        %2484 = vmatpush1.msra.mxu0 %v2483
        %2485 = vmatprep.subr.mxu0 0.0
        %v2486 = vand.u32 %v223, 4294901760
        %2487 = vmatpush1.msra.mxu0 %v2486
        %2488 = vmatprep.subr.mxu0 0.0
        %2489 = vmatpush2.msra.mxu0 0.0
        %2490 = vmatprep.subr.mxu0 0.0
        %2491 = vmatpush2.msra.mxu0 0.0
        %2492 = vmatprep.subr.mxu0 0.0
        %2493 = vmatpush2.msra.mxu0 0.0
        %2494 = vmatprep.subr.mxu0 0.0
        %2495 = vmatpush2.msra.mxu0 0.0
        %2496 = vmatprep.subr.mxu0 0.0
        %2497 = vmatpush2.msra.mxu0 0.0
        %2498 = vmatprep.subr.mxu0 0.0
        %2499 = vmatpush2.msra.mxu0 0.0
        %2500 = vmatprep.subr.mxu0 0.0
        %2501 = vmatpush2.msra.mxu0 0.0
        %2502 = vmatprep.subr.mxu0 0.0
        %2503 = vmatpush2.msra.mxu0 0.0
        %2504 = vmatprep.subr.mxu0 0.0
        %2505 = vmatpush2.msra.mxu0 0.0
        %2506 = vmatprep.subr.mxu0 0.0
        %2507 = vmatpush2.msra.mxu0 0.0
        %2508 = vmatprep.subr.mxu0 0.0
        %2509 = vmatpush2.msra.mxu0 0.0
        %2510 = vmatprep.subr.mxu0 0.0
        %2511 = vmatpush2.msra.mxu0 0.0
        %2512 = vmatprep.subr.mxu0 0.0
        %2513 = vmatpush2.msra.mxu0 0.0
        %2514 = vmatprep.subr.mxu0 0.0
        %2515 = vmatpush2.msra.mxu0 0.0
        %2516 = vmatprep.subr.mxu0 0.0
        %2517 = vmatpush2.msra.mxu0 0.0
        %2518 = vmatprep.subr.mxu0 0.0
        %2519 = vmatpush2.msra.mxu0 0.0
        %2520 = vmatprep.mubr.f32.mxu0 0.0
        %v2521 = vand.u32 %v2449, 4294901760
        %v2522 = vsub.f32 %v2449, %v2521
        %v2523 = vand.u32 %v2522, 4294901760
        %v2524 = vsub.f32 %v2522, %v2523
        %v2525 = vand.u32 %v2524, 4294901760
        %2526 = vmatmul.mubr.f32.gmra.mxu0 %v2525
        %v2527 = vpop.f32.mrf.mxu0
        %v2528 = vadd.f32 0.0, %v2527
        %v2529 = vpop.f32.mrf.mxu0
        %2530 = vmatprep.mubr.f32.mxu0 0.0
        %v2531 = vand.u32 %v2452, 4294901760
        %v2532 = vsub.f32 %v2452, %v2531
        %v2533 = vand.u32 %v2532, 4294901760
        %v2534 = vsub.f32 %v2532, %v2533
        %v2535 = vand.u32 %v2534, 4294901760
        %2536 = vmatmul.mubr.f32.gmra.mxu0 %v2535
        %v2537 = vpop.f32.mrf.mxu0
        %v2538 = vadd.f32 0.0, %v2537
        %v2539 = vpop.f32.mrf.mxu0
        %2540 = vdwg.mxu0
        %2541 = vmatprep.subr.mxu0 0.0
        %2542 = vmatpush1.msra.mxu0 0.0
        %2543 = vmatprep.subr.mxu0 0.0
        %2544 = vmatpush1.msra.mxu0 0.0
        %2545 = vmatprep.subr.mxu0 0.0
        %2546 = vmatpush1.msra.mxu0 0.0
        %2547 = vmatprep.subr.mxu0 0.0
        %2548 = vmatpush1.msra.mxu0 0.0
        %2549 = vmatprep.subr.mxu0 0.0
        %2550 = vmatpush1.msra.mxu0 0.0
        %2551 = vmatprep.subr.mxu0 0.0
        %2552 = vmatpush1.msra.mxu0 0.0
        %2553 = vmatprep.subr.mxu0 0.0
        %2554 = vmatpush1.msra.mxu0 0.0
        %2555 = vmatprep.subr.mxu0 0.0
        %2556 = vmatpush1.msra.mxu0 0.0
        %2557 = vmatprep.subr.mxu0 0.0
        %2558 = vmatpush1.msra.mxu0 0.0
        %2559 = vmatprep.subr.mxu0 0.0
        %2560 = vmatpush1.msra.mxu0 0.0
        %2561 = vmatprep.subr.mxu0 0.0
        %2562 = vmatpush1.msra.mxu0 0.0
        %2563 = vmatprep.subr.mxu0 0.0
        %2564 = vmatpush1.msra.mxu0 0.0
        %2565 = vmatprep.subr.mxu0 0.0
        %2566 = vmatpush1.msra.mxu0 0.0
        %2567 = vmatprep.subr.mxu0 0.0
        %2568 = vmatpush1.msra.mxu0 0.0
        %2569 = vmatprep.subr.mxu0 0.0
        %v2570 = vand.u32 %v224, 4294901760
        %v2571 = vsub.f32 %v224, %v2570
        %v2572 = vand.u32 %v2571, 4294901760
        %v2573 = vsub.f32 %v2571, %v2572
        %v2574 = vand.u32 %v2573, 4294901760
        %2575 = vmatpush1.msra.mxu0 %v2574
        %2576 = vmatprep.subr.mxu0 0.0
        %v2577 = vand.u32 %v223, 4294901760
        %v2578 = vsub.f32 %v223, %v2577
        %v2579 = vand.u32 %v2578, 4294901760
        %v2580 = vsub.f32 %v2578, %v2579
        %v2581 = vand.u32 %v2580, 4294901760
        %2582 = vmatpush1.msra.mxu0 %v2581
        %2583 = vmatprep.subr.mxu0 0.0
        %2584 = vmatpush2.msra.mxu0 0.0
        %2585 = vmatprep.subr.mxu0 0.0
        %2586 = vmatpush2.msra.mxu0 0.0
        %2587 = vmatprep.subr.mxu0 0.0
        %2588 = vmatpush2.msra.mxu0 0.0
        %2589 = vmatprep.subr.mxu0 0.0
        %2590 = vmatpush2.msra.mxu0 0.0
        %2591 = vmatprep.subr.mxu0 0.0
        %2592 = vmatpush2.msra.mxu0 0.0
        %2593 = vmatprep.subr.mxu0 0.0
        %2594 = vmatpush2.msra.mxu0 0.0
        %2595 = vmatprep.subr.mxu0 0.0
        %2596 = vmatpush2.msra.mxu0 0.0
        %2597 = vmatprep.subr.mxu0 0.0
        %2598 = vmatpush2.msra.mxu0 0.0
        %2599 = vmatprep.subr.mxu0 0.0
        %2600 = vmatpush2.msra.mxu0 0.0
        %2601 = vmatprep.subr.mxu0 0.0
        %2602 = vmatpush2.msra.mxu0 0.0
        %2603 = vmatprep.subr.mxu0 0.0
        %2604 = vmatpush2.msra.mxu0 0.0
        %2605 = vmatprep.subr.mxu0 0.0
        %2606 = vmatpush2.msra.mxu0 0.0
        %2607 = vmatprep.subr.mxu0 0.0
        %2608 = vmatpush2.msra.mxu0 0.0
        %2609 = vmatprep.subr.mxu0 0.0
        %2610 = vmatpush2.msra.mxu0 0.0
        %2611 = vmatprep.subr.mxu0 0.0
        %2612 = vmatpush2.msra.mxu0 0.0
        %2613 = vmatprep.subr.mxu0 0.0
        %2614 = vmatpush2.msra.mxu0 0.0
        %2615 = vmatprep.mubr.f32.mxu0 0.0
        %v2616 = vand.u32 %v2449, 4294901760
        %2617 = vmatmul.mubr.f32.gmra.mxu0 %v2616
        %v2618 = vpop.f32.mrf.mxu0
        %v2619 = vadd.f32 %v2528, %v2618
        %v2620 = vpop.f32.mrf.mxu0
        %2621 = vmatprep.mubr.f32.mxu0 0.0
        %v2622 = vand.u32 %v2452, 4294901760
        %2623 = vmatmul.mubr.f32.gmra.mxu0 %v2622
        %v2624 = vpop.f32.mrf.mxu0
        %v2625 = vadd.f32 %v2538, %v2624
        %v2626 = vpop.f32.mrf.mxu0
        %2627 = vdwg.mxu0
        %2628 = vmatprep.subr.mxu0 0.0
        %2629 = vmatpush1.msra.mxu0 0.0
        %2630 = vmatprep.subr.mxu0 0.0
        %2631 = vmatpush1.msra.mxu0 0.0
        %2632 = vmatprep.subr.mxu0 0.0
        %2633 = vmatpush1.msra.mxu0 0.0
        %2634 = vmatprep.subr.mxu0 0.0
        %2635 = vmatpush1.msra.mxu0 0.0
        %2636 = vmatprep.subr.mxu0 0.0
        %2637 = vmatpush1.msra.mxu0 0.0
        %2638 = vmatprep.subr.mxu0 0.0
        %2639 = vmatpush1.msra.mxu0 0.0
        %2640 = vmatprep.subr.mxu0 0.0
        %2641 = vmatpush1.msra.mxu0 0.0
        %2642 = vmatprep.subr.mxu0 0.0
        %2643 = vmatpush1.msra.mxu0 0.0
        %2644 = vmatprep.subr.mxu0 0.0
        %2645 = vmatpush1.msra.mxu0 0.0
        %2646 = vmatprep.subr.mxu0 0.0
        %2647 = vmatpush1.msra.mxu0 0.0
        %2648 = vmatprep.subr.mxu0 0.0
        %2649 = vmatpush1.msra.mxu0 0.0
        %2650 = vmatprep.subr.mxu0 0.0
        %2651 = vmatpush1.msra.mxu0 0.0
        %2652 = vmatprep.subr.mxu0 0.0
        %2653 = vmatpush1.msra.mxu0 0.0
        %2654 = vmatprep.subr.mxu0 0.0
        %2655 = vmatpush1.msra.mxu0 0.0
        %2656 = vmatprep.subr.mxu0 0.0
        %v2657 = vand.u32 %v224, 4294901760
        %v2658 = vsub.f32 %v224, %v2657
        %2659 = vmatpush1.msra.mxu0 %v2658
        %2660 = vmatprep.subr.mxu0 0.0
        %v2661 = vand.u32 %v223, 4294901760
        %v2662 = vsub.f32 %v223, %v2661
        %2663 = vmatpush1.msra.mxu0 %v2662
        %2664 = vmatprep.subr.mxu0 0.0
        %2665 = vmatpush2.msra.mxu0 0.0
        %2666 = vmatprep.subr.mxu0 0.0
        %2667 = vmatpush2.msra.mxu0 0.0
        %2668 = vmatprep.subr.mxu0 0.0
        %2669 = vmatpush2.msra.mxu0 0.0
        %2670 = vmatprep.subr.mxu0 0.0
        %2671 = vmatpush2.msra.mxu0 0.0
        %2672 = vmatprep.subr.mxu0 0.0
        %2673 = vmatpush2.msra.mxu0 0.0
        %2674 = vmatprep.subr.mxu0 0.0
        %2675 = vmatpush2.msra.mxu0 0.0
        %2676 = vmatprep.subr.mxu0 0.0
        %2677 = vmatpush2.msra.mxu0 0.0
        %2678 = vmatprep.subr.mxu0 0.0
        %2679 = vmatpush2.msra.mxu0 0.0
        %2680 = vmatprep.subr.mxu0 0.0
        %2681 = vmatpush2.msra.mxu0 0.0
        %2682 = vmatprep.subr.mxu0 0.0
        %2683 = vmatpush2.msra.mxu0 0.0
        %2684 = vmatprep.subr.mxu0 0.0
        %2685 = vmatpush2.msra.mxu0 0.0
        %2686 = vmatprep.subr.mxu0 0.0
        %2687 = vmatpush2.msra.mxu0 0.0
        %2688 = vmatprep.subr.mxu0 0.0
        %2689 = vmatpush2.msra.mxu0 0.0
        %2690 = vmatprep.subr.mxu0 0.0
        %2691 = vmatpush2.msra.mxu0 0.0
        %2692 = vmatprep.subr.mxu0 0.0
        %2693 = vmatpush2.msra.mxu0 0.0
        %2694 = vmatprep.subr.mxu0 0.0
        %2695 = vmatpush2.msra.mxu0 0.0
        %2696 = vmatprep.mubr.f32.mxu0 0.0
        %v2697 = vand.u32 %v2449, 4294901760
        %v2698 = vsub.f32 %v2449, %v2697
        %2699 = vmatmul.mubr.f32.gmra.mxu0 %v2698
        %v2700 = vpop.f32.mrf.mxu0
        %v2701 = vadd.f32 %v2619, %v2700
        %v2702 = vpop.f32.mrf.mxu0
        %2703 = vmatprep.mubr.f32.mxu0 0.0
        %v2704 = vand.u32 %v2452, 4294901760
        %v2705 = vsub.f32 %v2452, %v2704
        %2706 = vmatmul.mubr.f32.gmra.mxu0 %v2705
        %v2707 = vpop.f32.mrf.mxu0
        %v2708 = vadd.f32 %v2625, %v2707
        %v2709 = vpop.f32.mrf.mxu0
        %2710 = vdwg.mxu0
        %2711 = vmatprep.subr.mxu0 0.0
        %2712 = vmatpush1.msra.mxu0 0.0
        %2713 = vmatprep.subr.mxu0 0.0
        %2714 = vmatpush1.msra.mxu0 0.0
        %2715 = vmatprep.subr.mxu0 0.0
        %2716 = vmatpush1.msra.mxu0 0.0
        %2717 = vmatprep.subr.mxu0 0.0
        %2718 = vmatpush1.msra.mxu0 0.0
        %2719 = vmatprep.subr.mxu0 0.0
        %2720 = vmatpush1.msra.mxu0 0.0
        %2721 = vmatprep.subr.mxu0 0.0
        %2722 = vmatpush1.msra.mxu0 0.0
        %2723 = vmatprep.subr.mxu0 0.0
        %2724 = vmatpush1.msra.mxu0 0.0
        %2725 = vmatprep.subr.mxu0 0.0
        %2726 = vmatpush1.msra.mxu0 0.0
        %2727 = vmatprep.subr.mxu0 0.0
        %2728 = vmatpush1.msra.mxu0 0.0
        %2729 = vmatprep.subr.mxu0 0.0
        %2730 = vmatpush1.msra.mxu0 0.0
        %2731 = vmatprep.subr.mxu0 0.0
        %2732 = vmatpush1.msra.mxu0 0.0
        %2733 = vmatprep.subr.mxu0 0.0
        %2734 = vmatpush1.msra.mxu0 0.0
        %2735 = vmatprep.subr.mxu0 0.0
        %2736 = vmatpush1.msra.mxu0 0.0
        %2737 = vmatprep.subr.mxu0 0.0
        %2738 = vmatpush1.msra.mxu0 0.0
        %2739 = vmatprep.subr.mxu0 0.0
        %v2740 = vand.u32 %v224, 4294901760
        %2741 = vmatpush1.msra.mxu0 %v2740
        %2742 = vmatprep.subr.mxu0 0.0
        %v2743 = vand.u32 %v223, 4294901760
        %2744 = vmatpush1.msra.mxu0 %v2743
        %2745 = vmatprep.subr.mxu0 0.0
        %2746 = vmatpush2.msra.mxu0 0.0
        %2747 = vmatprep.subr.mxu0 0.0
        %2748 = vmatpush2.msra.mxu0 0.0
        %2749 = vmatprep.subr.mxu0 0.0
        %2750 = vmatpush2.msra.mxu0 0.0
        %2751 = vmatprep.subr.mxu0 0.0
        %2752 = vmatpush2.msra.mxu0 0.0
        %2753 = vmatprep.subr.mxu0 0.0
        %2754 = vmatpush2.msra.mxu0 0.0
        %2755 = vmatprep.subr.mxu0 0.0
        %2756 = vmatpush2.msra.mxu0 0.0
        %2757 = vmatprep.subr.mxu0 0.0
        %2758 = vmatpush2.msra.mxu0 0.0
        %2759 = vmatprep.subr.mxu0 0.0
        %2760 = vmatpush2.msra.mxu0 0.0
        %2761 = vmatprep.subr.mxu0 0.0
        %2762 = vmatpush2.msra.mxu0 0.0
        %2763 = vmatprep.subr.mxu0 0.0
        %2764 = vmatpush2.msra.mxu0 0.0
        %2765 = vmatprep.subr.mxu0 0.0
        %2766 = vmatpush2.msra.mxu0 0.0
        %2767 = vmatprep.subr.mxu0 0.0
        %2768 = vmatpush2.msra.mxu0 0.0
        %2769 = vmatprep.subr.mxu0 0.0
        %2770 = vmatpush2.msra.mxu0 0.0
        %2771 = vmatprep.subr.mxu0 0.0
        %2772 = vmatpush2.msra.mxu0 0.0
        %2773 = vmatprep.subr.mxu0 0.0
        %2774 = vmatpush2.msra.mxu0 0.0
        %2775 = vmatprep.subr.mxu0 0.0
        %2776 = vmatpush2.msra.mxu0 0.0
        %2777 = vmatprep.mubr.f32.mxu0 0.0
        %v2778 = vand.u32 %v2449, 4294901760
        %v2779 = vsub.f32 %v2449, %v2778
        %v2780 = vand.u32 %v2779, 4294901760
        %2781 = vmatmul.mubr.f32.gmra.mxu0 %v2780
        %v2782 = vpop.f32.mrf.mxu0
        %v2783 = vadd.f32 %v2701, %v2782
        %v2784 = vpop.f32.mrf.mxu0
        %2785 = vmatprep.mubr.f32.mxu0 0.0
        %v2786 = vand.u32 %v2452, 4294901760
        %v2787 = vsub.f32 %v2452, %v2786
        %v2788 = vand.u32 %v2787, 4294901760
        %2789 = vmatmul.mubr.f32.gmra.mxu0 %v2788
        %v2790 = vpop.f32.mrf.mxu0
        %v2791 = vadd.f32 %v2708, %v2790
        %v2792 = vpop.f32.mrf.mxu0
        %2793 = vdwg.mxu0
        %2794 = vmatprep.subr.mxu0 0.0
        %2795 = vmatpush1.msra.mxu0 0.0
        %2796 = vmatprep.subr.mxu0 0.0
        %2797 = vmatpush1.msra.mxu0 0.0
        %2798 = vmatprep.subr.mxu0 0.0
        %2799 = vmatpush1.msra.mxu0 0.0
        %2800 = vmatprep.subr.mxu0 0.0
        %2801 = vmatpush1.msra.mxu0 0.0
        %2802 = vmatprep.subr.mxu0 0.0
        %2803 = vmatpush1.msra.mxu0 0.0
        %2804 = vmatprep.subr.mxu0 0.0
        %2805 = vmatpush1.msra.mxu0 0.0
        %2806 = vmatprep.subr.mxu0 0.0
        %2807 = vmatpush1.msra.mxu0 0.0
        %2808 = vmatprep.subr.mxu0 0.0
        %2809 = vmatpush1.msra.mxu0 0.0
        %2810 = vmatprep.subr.mxu0 0.0
        %2811 = vmatpush1.msra.mxu0 0.0
        %2812 = vmatprep.subr.mxu0 0.0
        %2813 = vmatpush1.msra.mxu0 0.0
        %2814 = vmatprep.subr.mxu0 0.0
        %2815 = vmatpush1.msra.mxu0 0.0
        %2816 = vmatprep.subr.mxu0 0.0
        %2817 = vmatpush1.msra.mxu0 0.0
        %2818 = vmatprep.subr.mxu0 0.0
        %2819 = vmatpush1.msra.mxu0 0.0
        %2820 = vmatprep.subr.mxu0 0.0
        %2821 = vmatpush1.msra.mxu0 0.0
        %2822 = vmatprep.subr.mxu0 0.0
        %v2823 = vand.u32 %v224, 4294901760
        %v2824 = vsub.f32 %v224, %v2823
        %v2825 = vand.u32 %v2824, 4294901760
        %2826 = vmatpush1.msra.mxu0 %v2825
        %2827 = vmatprep.subr.mxu0 0.0
        %v2828 = vand.u32 %v223, 4294901760
        %v2829 = vsub.f32 %v223, %v2828
        %v2830 = vand.u32 %v2829, 4294901760
        %2831 = vmatpush1.msra.mxu0 %v2830
        %2832 = vmatprep.subr.mxu0 0.0
        %2833 = vmatpush2.msra.mxu0 0.0
        %2834 = vmatprep.subr.mxu0 0.0
        %2835 = vmatpush2.msra.mxu0 0.0
        %2836 = vmatprep.subr.mxu0 0.0
        %2837 = vmatpush2.msra.mxu0 0.0
        %2838 = vmatprep.subr.mxu0 0.0
        %2839 = vmatpush2.msra.mxu0 0.0
        %2840 = vmatprep.subr.mxu0 0.0
        %2841 = vmatpush2.msra.mxu0 0.0
        %2842 = vmatprep.subr.mxu0 0.0
        %2843 = vmatpush2.msra.mxu0 0.0
        %2844 = vmatprep.subr.mxu0 0.0
        %2845 = vmatpush2.msra.mxu0 0.0
        %2846 = vmatprep.subr.mxu0 0.0
        %2847 = vmatpush2.msra.mxu0 0.0
        %2848 = vmatprep.subr.mxu0 0.0
        %2849 = vmatpush2.msra.mxu0 0.0
        %2850 = vmatprep.subr.mxu0 0.0
        %2851 = vmatpush2.msra.mxu0 0.0
        %2852 = vmatprep.subr.mxu0 0.0
        %2853 = vmatpush2.msra.mxu0 0.0
        %2854 = vmatprep.subr.mxu0 0.0
        %2855 = vmatpush2.msra.mxu0 0.0
        %2856 = vmatprep.subr.mxu0 0.0
        %2857 = vmatpush2.msra.mxu0 0.0
        %2858 = vmatprep.subr.mxu0 0.0
        %2859 = vmatpush2.msra.mxu0 0.0
        %2860 = vmatprep.subr.mxu0 0.0
        %2861 = vmatpush2.msra.mxu0 0.0
        %2862 = vmatprep.subr.mxu0 0.0
        %2863 = vmatpush2.msra.mxu0 0.0
        %2864 = vmatprep.mubr.f32.mxu0 0.0
        %v2865 = vand.u32 %v2449, 4294901760
        %2866 = vmatmul.mubr.f32.gmra.mxu0 %v2865
        %v2867 = vpop.f32.mrf.mxu0
        %v2868 = vadd.f32 %v2783, %v2867
        %v2869 = vpop.f32.mrf.mxu0
        %2870 = vmatprep.mubr.f32.mxu0 0.0
        %v2871 = vand.u32 %v2452, 4294901760
        %2872 = vmatmul.mubr.f32.gmra.mxu0 %v2871
        %v2873 = vpop.f32.mrf.mxu0
        %v2874 = vadd.f32 %v2791, %v2873
        %v2875 = vpop.f32.mrf.mxu0
        %2876 = vdwg.mxu0
        %2877 = vmatprep.subr.mxu0 0.0
        %2878 = vmatpush1.msra.mxu0 0.0
        %2879 = vmatprep.subr.mxu0 0.0
        %2880 = vmatpush1.msra.mxu0 0.0
        %2881 = vmatprep.subr.mxu0 0.0
        %2882 = vmatpush1.msra.mxu0 0.0
        %2883 = vmatprep.subr.mxu0 0.0
        %2884 = vmatpush1.msra.mxu0 0.0
        %2885 = vmatprep.subr.mxu0 0.0
        %2886 = vmatpush1.msra.mxu0 0.0
        %2887 = vmatprep.subr.mxu0 0.0
        %2888 = vmatpush1.msra.mxu0 0.0
        %2889 = vmatprep.subr.mxu0 0.0
        %2890 = vmatpush1.msra.mxu0 0.0
        %2891 = vmatprep.subr.mxu0 0.0
        %2892 = vmatpush1.msra.mxu0 0.0
        %2893 = vmatprep.subr.mxu0 0.0
        %2894 = vmatpush1.msra.mxu0 0.0
        %2895 = vmatprep.subr.mxu0 0.0
        %2896 = vmatpush1.msra.mxu0 0.0
        %2897 = vmatprep.subr.mxu0 0.0
        %2898 = vmatpush1.msra.mxu0 0.0
        %2899 = vmatprep.subr.mxu0 0.0
        %2900 = vmatpush1.msra.mxu0 0.0
        %2901 = vmatprep.subr.mxu0 0.0
        %2902 = vmatpush1.msra.mxu0 0.0
        %2903 = vmatprep.subr.mxu0 0.0
        %2904 = vmatpush1.msra.mxu0 0.0
        %2905 = vmatprep.subr.mxu0 0.0
        %v2906 = vand.u32 %v224, 4294901760
        %2907 = vmatpush1.msra.mxu0 %v2906
        %2908 = vmatprep.subr.mxu0 0.0
        %v2909 = vand.u32 %v223, 4294901760
        %2910 = vmatpush1.msra.mxu0 %v2909
        %2911 = vmatprep.subr.mxu0 0.0
        %2912 = vmatpush2.msra.mxu0 0.0
        %2913 = vmatprep.subr.mxu0 0.0
        %2914 = vmatpush2.msra.mxu0 0.0
        %2915 = vmatprep.subr.mxu0 0.0
        %2916 = vmatpush2.msra.mxu0 0.0
        %2917 = vmatprep.subr.mxu0 0.0
        %2918 = vmatpush2.msra.mxu0 0.0
        %2919 = vmatprep.subr.mxu0 0.0
        %2920 = vmatpush2.msra.mxu0 0.0
        %2921 = vmatprep.subr.mxu0 0.0
        %2922 = vmatpush2.msra.mxu0 0.0
        %2923 = vmatprep.subr.mxu0 0.0
        %2924 = vmatpush2.msra.mxu0 0.0
        %2925 = vmatprep.subr.mxu0 0.0
        %2926 = vmatpush2.msra.mxu0 0.0
        %2927 = vmatprep.subr.mxu0 0.0
        %2928 = vmatpush2.msra.mxu0 0.0
        %2929 = vmatprep.subr.mxu0 0.0
        %2930 = vmatpush2.msra.mxu0 0.0
        %2931 = vmatprep.subr.mxu0 0.0
        %2932 = vmatpush2.msra.mxu0 0.0
        %2933 = vmatprep.subr.mxu0 0.0
        %2934 = vmatpush2.msra.mxu0 0.0
        %2935 = vmatprep.subr.mxu0 0.0
        %2936 = vmatpush2.msra.mxu0 0.0
        %2937 = vmatprep.subr.mxu0 0.0
        %2938 = vmatpush2.msra.mxu0 0.0
        %2939 = vmatprep.subr.mxu0 0.0
        %2940 = vmatpush2.msra.mxu0 0.0
        %2941 = vmatprep.subr.mxu0 0.0
        %2942 = vmatpush2.msra.mxu0 0.0
        %2943 = vmatprep.mubr.f32.mxu0 0.0
        %v2944 = vand.u32 %v2449, 4294901760
        %2945 = vmatmul.mubr.f32.gmra.mxu0 %v2944
        %v2946 = vpop.f32.mrf.mxu0
        %v2947 = vadd.f32 %v2868, %v2946
        %v2948 = vpop.f32.mrf.mxu0
        %2949 = vmatprep.mubr.f32.mxu0 0.0
        %v2950 = vand.u32 %v2452, 4294901760
        %2951 = vmatmul.mubr.f32.gmra.mxu0 %v2950
        %v2952 = vpop.f32.mrf.mxu0
        %v2953 = vadd.f32 %v2874, %v2952
        %v2954 = vpop.f32.mrf.mxu0
        %2955 = vdwg.mxu0
        %2956 = vmatprep.subr.mxu0 0.0
        %2957 = vmatpush1.msra.mxu0 0.0
        %2958 = vmatprep.subr.mxu0 0.0
        %2959 = vmatpush1.msra.mxu0 0.0
        %2960 = vmatprep.subr.mxu0 0.0
        %2961 = vmatpush1.msra.mxu0 0.0
        %2962 = vmatprep.subr.mxu0 0.0
        %2963 = vmatpush1.msra.mxu0 0.0
        %2964 = vmatprep.subr.mxu0 0.0
        %2965 = vmatpush1.msra.mxu0 0.0
        %2966 = vmatprep.subr.mxu0 0.0
        %2967 = vmatpush1.msra.mxu0 0.0
        %2968 = vmatprep.subr.mxu0 0.0
        %2969 = vmatpush1.msra.mxu0 0.0
        %2970 = vmatprep.subr.mxu0 0.0
        %2971 = vmatpush1.msra.mxu0 0.0
        %2972 = vmatprep.subr.mxu0 0.0
        %2973 = vmatpush1.msra.mxu0 0.0
        %2974 = vmatprep.subr.mxu0 0.0
        %2975 = vmatpush1.msra.mxu0 0.0
        %2976 = vmatprep.subr.mxu0 0.0
        %2977 = vmatpush1.msra.mxu0 0.0
        %2978 = vmatprep.subr.mxu0 0.0
        %2979 = vmatpush1.msra.mxu0 0.0
        %2980 = vmatprep.subr.mxu0 0.0
        %2981 = vmatpush1.msra.mxu0 0.0
        %2982 = vmatprep.subr.mxu0 0.0
        %2983 = vmatpush1.msra.mxu0 0.0
        %2984 = vmatprep.subr.mxu0 0.0
        %v2985 = vand.u32 %v2953, 4294901760
        %2986 = vmatpush1.msra.mxu0 %v2985
        %2987 = vmatprep.subr.mxu0 0.0
        %v2988 = vand.u32 %v2947, 4294901760
        %2989 = vmatpush1.msra.mxu0 %v2988
        %2990 = vmatprep.subr.mxu0 0.0
        %2991 = vmatpush2.msra.mxu0 0.0
        %2992 = vmatprep.subr.mxu0 0.0
        %2993 = vmatpush2.msra.mxu0 0.0
        %2994 = vmatprep.subr.mxu0 0.0
        %2995 = vmatpush2.msra.mxu0 0.0
        %2996 = vmatprep.subr.mxu0 0.0
        %2997 = vmatpush2.msra.mxu0 0.0
        %2998 = vmatprep.subr.mxu0 0.0
        %2999 = vmatpush2.msra.mxu0 0.0
        %3000 = vmatprep.subr.mxu0 0.0
        %3001 = vmatpush2.msra.mxu0 0.0
        %3002 = vmatprep.subr.mxu0 0.0
        %3003 = vmatpush2.msra.mxu0 0.0
        %3004 = vmatprep.subr.mxu0 0.0
        %3005 = vmatpush2.msra.mxu0 0.0
        %3006 = vmatprep.subr.mxu0 0.0
        %3007 = vmatpush2.msra.mxu0 0.0
        %3008 = vmatprep.subr.mxu0 0.0
        %3009 = vmatpush2.msra.mxu0 0.0
        %3010 = vmatprep.subr.mxu0 0.0
        %3011 = vmatpush2.msra.mxu0 0.0
        %3012 = vmatprep.subr.mxu0 0.0
        %3013 = vmatpush2.msra.mxu0 0.0
        %3014 = vmatprep.subr.mxu0 0.0
        %3015 = vmatpush2.msra.mxu0 0.0
        %3016 = vmatprep.subr.mxu0 0.0
        %3017 = vmatpush2.msra.mxu0 0.0
        %3018 = vmatprep.subr.mxu0 0.0
        %3019 = vmatpush2.msra.mxu0 0.0
        %3020 = vmatprep.subr.mxu0 0.0
        %3021 = vmatpush2.msra.mxu0 0.0
        %3022 = vmatprep.mubr.f32.mxu0 0.0
        %v3023 = vand.u32 %v737, 4294901760
        %v3024 = vsub.f32 %v737, %v3023
        %v3025 = vand.u32 %v3024, 4294901760
        %v3026 = vsub.f32 %v3024, %v3025
        %v3027 = vand.u32 %v3026, 4294901760
        %3028 = vmatmul.mubr.f32.gmra.mxu0 %v3027
        %v3029 = vpop.f32.mrf.mxu0
        %v3030 = vadd.f32 0.0, %v3029
        %v3031 = vpop.f32.mrf.mxu0
        %3032 = vmatprep.mubr.f32.mxu0 0.0
        %v3033 = vand.u32 %v740, 4294901760
        %v3034 = vsub.f32 %v740, %v3033
        %v3035 = vand.u32 %v3034, 4294901760
        %v3036 = vsub.f32 %v3034, %v3035
        %v3037 = vand.u32 %v3036, 4294901760
        %3038 = vmatmul.mubr.f32.gmra.mxu0 %v3037
        %v3039 = vpop.f32.mrf.mxu0
        %v3040 = vadd.f32 0.0, %v3039
        %v3041 = vpop.f32.mrf.mxu0
        %3042 = vmatprep.mubr.f32.mxu0 0.0
        %v3043 = vand.u32 %v743, 4294901760
        %v3044 = vsub.f32 %v743, %v3043
        %v3045 = vand.u32 %v3044, 4294901760
        %v3046 = vsub.f32 %v3044, %v3045
        %v3047 = vand.u32 %v3046, 4294901760
        %3048 = vmatmul.mubr.f32.gmra.mxu0 %v3047
        %v3049 = vpop.f32.mrf.mxu0
        %v3050 = vadd.f32 0.0, %v3049
        %v3051 = vpop.f32.mrf.mxu0
        %3052 = vmatprep.mubr.f32.mxu0 0.0
        %v3053 = vand.u32 %v746, 4294901760
        %v3054 = vsub.f32 %v746, %v3053
        %v3055 = vand.u32 %v3054, 4294901760
        %v3056 = vsub.f32 %v3054, %v3055
        %v3057 = vand.u32 %v3056, 4294901760
        %3058 = vmatmul.mubr.f32.gmra.mxu0 %v3057
        %v3059 = vpop.f32.mrf.mxu0
        %v3060 = vadd.f32 0.0, %v3059
        %v3061 = vpop.f32.mrf.mxu0
        %3062 = vdwg.mxu0
        %3063 = vmatprep.subr.mxu0 0.0
        %3064 = vmatpush1.msra.mxu0 0.0
        %3065 = vmatprep.subr.mxu0 0.0
        %3066 = vmatpush1.msra.mxu0 0.0
        %3067 = vmatprep.subr.mxu0 0.0
        %3068 = vmatpush1.msra.mxu0 0.0
        %3069 = vmatprep.subr.mxu0 0.0
        %3070 = vmatpush1.msra.mxu0 0.0
        %3071 = vmatprep.subr.mxu0 0.0
        %3072 = vmatpush1.msra.mxu0 0.0
        %3073 = vmatprep.subr.mxu0 0.0
        %3074 = vmatpush1.msra.mxu0 0.0
        %3075 = vmatprep.subr.mxu0 0.0
        %3076 = vmatpush1.msra.mxu0 0.0
        %3077 = vmatprep.subr.mxu0 0.0
        %3078 = vmatpush1.msra.mxu0 0.0
        %3079 = vmatprep.subr.mxu0 0.0
        %3080 = vmatpush1.msra.mxu0 0.0
        %3081 = vmatprep.subr.mxu0 0.0
        %3082 = vmatpush1.msra.mxu0 0.0
        %3083 = vmatprep.subr.mxu0 0.0
        %3084 = vmatpush1.msra.mxu0 0.0
        %3085 = vmatprep.subr.mxu0 0.0
        %3086 = vmatpush1.msra.mxu0 0.0
        %3087 = vmatprep.subr.mxu0 0.0
        %3088 = vmatpush1.msra.mxu0 0.0
        %3089 = vmatprep.subr.mxu0 0.0
        %3090 = vmatpush1.msra.mxu0 0.0
        %3091 = vmatprep.subr.mxu0 0.0
        %v3092 = vand.u32 %v2953, 4294901760
        %v3093 = vsub.f32 %v2953, %v3092
        %v3094 = vand.u32 %v3093, 4294901760
        %v3095 = vsub.f32 %v3093, %v3094
        %v3096 = vand.u32 %v3095, 4294901760
        %3097 = vmatpush1.msra.mxu0 %v3096
        %3098 = vmatprep.subr.mxu0 0.0
        %v3099 = vand.u32 %v2947, 4294901760
        %v3100 = vsub.f32 %v2947, %v3099
        %v3101 = vand.u32 %v3100, 4294901760
        %v3102 = vsub.f32 %v3100, %v3101
        %v3103 = vand.u32 %v3102, 4294901760
        %3104 = vmatpush1.msra.mxu0 %v3103
        %3105 = vmatprep.subr.mxu0 0.0
        %3106 = vmatpush2.msra.mxu0 0.0
        %3107 = vmatprep.subr.mxu0 0.0
        %3108 = vmatpush2.msra.mxu0 0.0
        %3109 = vmatprep.subr.mxu0 0.0
        %3110 = vmatpush2.msra.mxu0 0.0
        %3111 = vmatprep.subr.mxu0 0.0
        %3112 = vmatpush2.msra.mxu0 0.0
        %3113 = vmatprep.subr.mxu0 0.0
        %3114 = vmatpush2.msra.mxu0 0.0
        %3115 = vmatprep.subr.mxu0 0.0
        %3116 = vmatpush2.msra.mxu0 0.0
        %3117 = vmatprep.subr.mxu0 0.0
        %3118 = vmatpush2.msra.mxu0 0.0
        %3119 = vmatprep.subr.mxu0 0.0
        %3120 = vmatpush2.msra.mxu0 0.0
        %3121 = vmatprep.subr.mxu0 0.0
        %3122 = vmatpush2.msra.mxu0 0.0
        %3123 = vmatprep.subr.mxu0 0.0
        %3124 = vmatpush2.msra.mxu0 0.0
        %3125 = vmatprep.subr.mxu0 0.0
        %3126 = vmatpush2.msra.mxu0 0.0
        %3127 = vmatprep.subr.mxu0 0.0
        %3128 = vmatpush2.msra.mxu0 0.0
        %3129 = vmatprep.subr.mxu0 0.0
        %3130 = vmatpush2.msra.mxu0 0.0
        %3131 = vmatprep.subr.mxu0 0.0
        %3132 = vmatpush2.msra.mxu0 0.0
        %3133 = vmatprep.subr.mxu0 0.0
        %3134 = vmatpush2.msra.mxu0 0.0
        %3135 = vmatprep.subr.mxu0 0.0
        %3136 = vmatpush2.msra.mxu0 0.0
        %3137 = vmatprep.mubr.f32.mxu0 0.0
        %v3138 = vand.u32 %v737, 4294901760
        %3139 = vmatmul.mubr.f32.gmra.mxu0 %v3138
        %v3140 = vpop.f32.mrf.mxu0
        %v3141 = vadd.f32 %v3030, %v3140
        %v3142 = vpop.f32.mrf.mxu0
        %3143 = vmatprep.mubr.f32.mxu0 0.0
        %v3144 = vand.u32 %v740, 4294901760
        %3145 = vmatmul.mubr.f32.gmra.mxu0 %v3144
        %v3146 = vpop.f32.mrf.mxu0
        %v3147 = vadd.f32 %v3040, %v3146
        %v3148 = vpop.f32.mrf.mxu0
        %3149 = vmatprep.mubr.f32.mxu0 0.0
        %v3150 = vand.u32 %v743, 4294901760
        %3151 = vmatmul.mubr.f32.gmra.mxu0 %v3150
        %v3152 = vpop.f32.mrf.mxu0
        %v3153 = vadd.f32 %v3050, %v3152
        %v3154 = vpop.f32.mrf.mxu0
        %3155 = vmatprep.mubr.f32.mxu0 0.0
        %v3156 = vand.u32 %v746, 4294901760
        %3157 = vmatmul.mubr.f32.gmra.mxu0 %v3156
        %v3158 = vpop.f32.mrf.mxu0
        %v3159 = vadd.f32 %v3060, %v3158
        %v3160 = vpop.f32.mrf.mxu0
        %3161 = vdwg.mxu0
        %3162 = vmatprep.subr.mxu0 0.0
        %3163 = vmatpush1.msra.mxu0 0.0
        %3164 = vmatprep.subr.mxu0 0.0
        %3165 = vmatpush1.msra.mxu0 0.0
        %3166 = vmatprep.subr.mxu0 0.0
        %3167 = vmatpush1.msra.mxu0 0.0
        %3168 = vmatprep.subr.mxu0 0.0
        %3169 = vmatpush1.msra.mxu0 0.0
        %3170 = vmatprep.subr.mxu0 0.0
        %3171 = vmatpush1.msra.mxu0 0.0
        %3172 = vmatprep.subr.mxu0 0.0
        %3173 = vmatpush1.msra.mxu0 0.0
        %3174 = vmatprep.subr.mxu0 0.0
        %3175 = vmatpush1.msra.mxu0 0.0
        %3176 = vmatprep.subr.mxu0 0.0
        %3177 = vmatpush1.msra.mxu0 0.0
        %3178 = vmatprep.subr.mxu0 0.0
        %3179 = vmatpush1.msra.mxu0 0.0
        %3180 = vmatprep.subr.mxu0 0.0
        %3181 = vmatpush1.msra.mxu0 0.0
        %3182 = vmatprep.subr.mxu0 0.0
        %3183 = vmatpush1.msra.mxu0 0.0
        %3184 = vmatprep.subr.mxu0 0.0
        %3185 = vmatpush1.msra.mxu0 0.0
        %3186 = vmatprep.subr.mxu0 0.0
        %3187 = vmatpush1.msra.mxu0 0.0
        %3188 = vmatprep.subr.mxu0 0.0
        %3189 = vmatpush1.msra.mxu0 0.0
        %3190 = vmatprep.subr.mxu0 0.0
        %v3191 = vand.u32 %v2953, 4294901760
        %v3192 = vsub.f32 %v2953, %v3191
        %3193 = vmatpush1.msra.mxu0 %v3192
        %3194 = vmatprep.subr.mxu0 0.0
        %v3195 = vand.u32 %v2947, 4294901760
        %v3196 = vsub.f32 %v2947, %v3195
        %3197 = vmatpush1.msra.mxu0 %v3196
        %3198 = vmatprep.subr.mxu0 0.0
        %3199 = vmatpush2.msra.mxu0 0.0
        %3200 = vmatprep.subr.mxu0 0.0
        %3201 = vmatpush2.msra.mxu0 0.0
        %3202 = vmatprep.subr.mxu0 0.0
        %3203 = vmatpush2.msra.mxu0 0.0
        %3204 = vmatprep.subr.mxu0 0.0
        %3205 = vmatpush2.msra.mxu0 0.0
        %3206 = vmatprep.subr.mxu0 0.0
        %3207 = vmatpush2.msra.mxu0 0.0
        %3208 = vmatprep.subr.mxu0 0.0
        %3209 = vmatpush2.msra.mxu0 0.0
        %3210 = vmatprep.subr.mxu0 0.0
        %3211 = vmatpush2.msra.mxu0 0.0
        %3212 = vmatprep.subr.mxu0 0.0
        %3213 = vmatpush2.msra.mxu0 0.0
        %3214 = vmatprep.subr.mxu0 0.0
        %3215 = vmatpush2.msra.mxu0 0.0
        %3216 = vmatprep.subr.mxu0 0.0
        %3217 = vmatpush2.msra.mxu0 0.0
        %3218 = vmatprep.subr.mxu0 0.0
        %3219 = vmatpush2.msra.mxu0 0.0
        %3220 = vmatprep.subr.mxu0 0.0
        %3221 = vmatpush2.msra.mxu0 0.0
        %3222 = vmatprep.subr.mxu0 0.0
        %3223 = vmatpush2.msra.mxu0 0.0
        %3224 = vmatprep.subr.mxu0 0.0
        %3225 = vmatpush2.msra.mxu0 0.0
        %3226 = vmatprep.subr.mxu0 0.0
        %3227 = vmatpush2.msra.mxu0 0.0
        %3228 = vmatprep.subr.mxu0 0.0
        %3229 = vmatpush2.msra.mxu0 0.0
        %3230 = vmatprep.mubr.f32.mxu0 0.0
        %v3231 = vand.u32 %v737, 4294901760
        %v3232 = vsub.f32 %v737, %v3231
        %3233 = vmatmul.mubr.f32.gmra.mxu0 %v3232
        %v3234 = vpop.f32.mrf.mxu0
        %v3235 = vadd.f32 %v3141, %v3234
        %v3236 = vpop.f32.mrf.mxu0
        %3237 = vmatprep.mubr.f32.mxu0 0.0
        %v3238 = vand.u32 %v740, 4294901760
        %v3239 = vsub.f32 %v740, %v3238
        %3240 = vmatmul.mubr.f32.gmra.mxu0 %v3239
        %v3241 = vpop.f32.mrf.mxu0
        %v3242 = vadd.f32 %v3147, %v3241
        %v3243 = vpop.f32.mrf.mxu0
        %3244 = vmatprep.mubr.f32.mxu0 0.0
        %v3245 = vand.u32 %v743, 4294901760
        %v3246 = vsub.f32 %v743, %v3245
        %3247 = vmatmul.mubr.f32.gmra.mxu0 %v3246
        %v3248 = vpop.f32.mrf.mxu0
        %v3249 = vadd.f32 %v3153, %v3248
        %v3250 = vpop.f32.mrf.mxu0
        %3251 = vmatprep.mubr.f32.mxu0 0.0
        %v3252 = vand.u32 %v746, 4294901760
        %v3253 = vsub.f32 %v746, %v3252
        %3254 = vmatmul.mubr.f32.gmra.mxu0 %v3253
        %v3255 = vpop.f32.mrf.mxu0
        %v3256 = vadd.f32 %v3159, %v3255
        %v3257 = vpop.f32.mrf.mxu0
        %3258 = vdwg.mxu0
        %3259 = vmatprep.subr.mxu0 0.0
        %3260 = vmatpush1.msra.mxu0 0.0
        %3261 = vmatprep.subr.mxu0 0.0
        %3262 = vmatpush1.msra.mxu0 0.0
        %3263 = vmatprep.subr.mxu0 0.0
        %3264 = vmatpush1.msra.mxu0 0.0
        %3265 = vmatprep.subr.mxu0 0.0
        %3266 = vmatpush1.msra.mxu0 0.0
        %3267 = vmatprep.subr.mxu0 0.0
        %3268 = vmatpush1.msra.mxu0 0.0
        %3269 = vmatprep.subr.mxu0 0.0
        %3270 = vmatpush1.msra.mxu0 0.0
        %3271 = vmatprep.subr.mxu0 0.0
        %3272 = vmatpush1.msra.mxu0 0.0
        %3273 = vmatprep.subr.mxu0 0.0
        %3274 = vmatpush1.msra.mxu0 0.0
        %3275 = vmatprep.subr.mxu0 0.0
        %3276 = vmatpush1.msra.mxu0 0.0
        %3277 = vmatprep.subr.mxu0 0.0
        %3278 = vmatpush1.msra.mxu0 0.0
        %3279 = vmatprep.subr.mxu0 0.0
        %3280 = vmatpush1.msra.mxu0 0.0
        %3281 = vmatprep.subr.mxu0 0.0
        %3282 = vmatpush1.msra.mxu0 0.0
        %3283 = vmatprep.subr.mxu0 0.0
        %3284 = vmatpush1.msra.mxu0 0.0
        %3285 = vmatprep.subr.mxu0 0.0
        %3286 = vmatpush1.msra.mxu0 0.0
        %3287 = vmatprep.subr.mxu0 0.0
        %v3288 = vand.u32 %v2953, 4294901760
        %3289 = vmatpush1.msra.mxu0 %v3288
        %3290 = vmatprep.subr.mxu0 0.0
        %v3291 = vand.u32 %v2947, 4294901760
        %3292 = vmatpush1.msra.mxu0 %v3291
        %3293 = vmatprep.subr.mxu0 0.0
        %3294 = vmatpush2.msra.mxu0 0.0
        %3295 = vmatprep.subr.mxu0 0.0
        %3296 = vmatpush2.msra.mxu0 0.0
        %3297 = vmatprep.subr.mxu0 0.0
        %3298 = vmatpush2.msra.mxu0 0.0
        %3299 = vmatprep.subr.mxu0 0.0
        %3300 = vmatpush2.msra.mxu0 0.0
        %3301 = vmatprep.subr.mxu0 0.0
        %3302 = vmatpush2.msra.mxu0 0.0
        %3303 = vmatprep.subr.mxu0 0.0
        %3304 = vmatpush2.msra.mxu0 0.0
        %3305 = vmatprep.subr.mxu0 0.0
        %3306 = vmatpush2.msra.mxu0 0.0
        %3307 = vmatprep.subr.mxu0 0.0
        %3308 = vmatpush2.msra.mxu0 0.0
        %3309 = vmatprep.subr.mxu0 0.0
        %3310 = vmatpush2.msra.mxu0 0.0
        %3311 = vmatprep.subr.mxu0 0.0
        %3312 = vmatpush2.msra.mxu0 0.0
        %3313 = vmatprep.subr.mxu0 0.0
        %3314 = vmatpush2.msra.mxu0 0.0
        %3315 = vmatprep.subr.mxu0 0.0
        %3316 = vmatpush2.msra.mxu0 0.0
        %3317 = vmatprep.subr.mxu0 0.0
        %3318 = vmatpush2.msra.mxu0 0.0
        %3319 = vmatprep.subr.mxu0 0.0
        %3320 = vmatpush2.msra.mxu0 0.0
        %3321 = vmatprep.subr.mxu0 0.0
        %3322 = vmatpush2.msra.mxu0 0.0
        %3323 = vmatprep.subr.mxu0 0.0
        %3324 = vmatpush2.msra.mxu0 0.0
        %3325 = vmatprep.mubr.f32.mxu0 0.0
        %v3326 = vand.u32 %v737, 4294901760
        %v3327 = vsub.f32 %v737, %v3326
        %v3328 = vand.u32 %v3327, 4294901760
        %3329 = vmatmul.mubr.f32.gmra.mxu0 %v3328
        %v3330 = vpop.f32.mrf.mxu0
        %v3331 = vadd.f32 %v3235, %v3330
        %v3332 = vpop.f32.mrf.mxu0
        %3333 = vmatprep.mubr.f32.mxu0 0.0
        %v3334 = vand.u32 %v740, 4294901760
        %v3335 = vsub.f32 %v740, %v3334
        %v3336 = vand.u32 %v3335, 4294901760
        %3337 = vmatmul.mubr.f32.gmra.mxu0 %v3336
        %v3338 = vpop.f32.mrf.mxu0
        %v3339 = vadd.f32 %v3242, %v3338
        %v3340 = vpop.f32.mrf.mxu0
        %3341 = vmatprep.mubr.f32.mxu0 0.0
        %v3342 = vand.u32 %v743, 4294901760
        %v3343 = vsub.f32 %v743, %v3342
        %v3344 = vand.u32 %v3343, 4294901760
        %3345 = vmatmul.mubr.f32.gmra.mxu0 %v3344
        %v3346 = vpop.f32.mrf.mxu0
        %v3347 = vadd.f32 %v3249, %v3346
        %v3348 = vpop.f32.mrf.mxu0
        %3349 = vmatprep.mubr.f32.mxu0 0.0
        %v3350 = vand.u32 %v746, 4294901760
        %v3351 = vsub.f32 %v746, %v3350
        %v3352 = vand.u32 %v3351, 4294901760
        %3353 = vmatmul.mubr.f32.gmra.mxu0 %v3352
        %v3354 = vpop.f32.mrf.mxu0
        %v3355 = vadd.f32 %v3256, %v3354
        %v3356 = vpop.f32.mrf.mxu0
        %3357 = vdwg.mxu0
        %3358 = vmatprep.subr.mxu0 0.0
        %3359 = vmatpush1.msra.mxu0 0.0
        %3360 = vmatprep.subr.mxu0 0.0
        %3361 = vmatpush1.msra.mxu0 0.0
        %3362 = vmatprep.subr.mxu0 0.0
        %3363 = vmatpush1.msra.mxu0 0.0
        %3364 = vmatprep.subr.mxu0 0.0
        %3365 = vmatpush1.msra.mxu0 0.0
        %3366 = vmatprep.subr.mxu0 0.0
        %3367 = vmatpush1.msra.mxu0 0.0
        %3368 = vmatprep.subr.mxu0 0.0
        %3369 = vmatpush1.msra.mxu0 0.0
        %3370 = vmatprep.subr.mxu0 0.0
        %3371 = vmatpush1.msra.mxu0 0.0
        %3372 = vmatprep.subr.mxu0 0.0
        %3373 = vmatpush1.msra.mxu0 0.0
        %3374 = vmatprep.subr.mxu0 0.0
        %3375 = vmatpush1.msra.mxu0 0.0
        %3376 = vmatprep.subr.mxu0 0.0
        %3377 = vmatpush1.msra.mxu0 0.0
        %3378 = vmatprep.subr.mxu0 0.0
        %3379 = vmatpush1.msra.mxu0 0.0
        %3380 = vmatprep.subr.mxu0 0.0
        %3381 = vmatpush1.msra.mxu0 0.0
        %3382 = vmatprep.subr.mxu0 0.0
        %3383 = vmatpush1.msra.mxu0 0.0
        %3384 = vmatprep.subr.mxu0 0.0
        %3385 = vmatpush1.msra.mxu0 0.0
        %3386 = vmatprep.subr.mxu0 0.0
        %v3387 = vand.u32 %v2953, 4294901760
        %v3388 = vsub.f32 %v2953, %v3387
        %v3389 = vand.u32 %v3388, 4294901760
        %3390 = vmatpush1.msra.mxu0 %v3389
        %3391 = vmatprep.subr.mxu0 0.0
        %v3392 = vand.u32 %v2947, 4294901760
        %v3393 = vsub.f32 %v2947, %v3392
        %v3394 = vand.u32 %v3393, 4294901760
        %3395 = vmatpush1.msra.mxu0 %v3394
        %3396 = vmatprep.subr.mxu0 0.0
        %3397 = vmatpush2.msra.mxu0 0.0
        %3398 = vmatprep.subr.mxu0 0.0
        %3399 = vmatpush2.msra.mxu0 0.0
        %3400 = vmatprep.subr.mxu0 0.0
        %3401 = vmatpush2.msra.mxu0 0.0
        %3402 = vmatprep.subr.mxu0 0.0
        %3403 = vmatpush2.msra.mxu0 0.0
        %3404 = vmatprep.subr.mxu0 0.0
        %3405 = vmatpush2.msra.mxu0 0.0
        %3406 = vmatprep.subr.mxu0 0.0
        %3407 = vmatpush2.msra.mxu0 0.0
        %3408 = vmatprep.subr.mxu0 0.0
        %3409 = vmatpush2.msra.mxu0 0.0
        %3410 = vmatprep.subr.mxu0 0.0
        %3411 = vmatpush2.msra.mxu0 0.0
        %3412 = vmatprep.subr.mxu0 0.0
        %3413 = vmatpush2.msra.mxu0 0.0
        %3414 = vmatprep.subr.mxu0 0.0
        %3415 = vmatpush2.msra.mxu0 0.0
        %3416 = vmatprep.subr.mxu0 0.0
        %3417 = vmatpush2.msra.mxu0 0.0
        %3418 = vmatprep.subr.mxu0 0.0
        %3419 = vmatpush2.msra.mxu0 0.0
        %3420 = vmatprep.subr.mxu0 0.0
        %3421 = vmatpush2.msra.mxu0 0.0
        %3422 = vmatprep.subr.mxu0 0.0
        %3423 = vmatpush2.msra.mxu0 0.0
        %3424 = vmatprep.subr.mxu0 0.0
        %3425 = vmatpush2.msra.mxu0 0.0
        %3426 = vmatprep.subr.mxu0 0.0
        %3427 = vmatpush2.msra.mxu0 0.0
        %3428 = vmatprep.mubr.f32.mxu0 0.0
        %v3429 = vand.u32 %v737, 4294901760
        %3430 = vmatmul.mubr.f32.gmra.mxu0 %v3429
        %v3431 = vpop.f32.mrf.mxu0
        %v3432 = vadd.f32 %v3331, %v3431
        %v3433 = vpop.f32.mrf.mxu0
        %3434 = vmatprep.mubr.f32.mxu0 0.0
        %v3435 = vand.u32 %v740, 4294901760
        %3436 = vmatmul.mubr.f32.gmra.mxu0 %v3435
        %v3437 = vpop.f32.mrf.mxu0
        %v3438 = vadd.f32 %v3339, %v3437
        %v3439 = vpop.f32.mrf.mxu0
        %3440 = vmatprep.mubr.f32.mxu0 0.0
        %v3441 = vand.u32 %v743, 4294901760
        %3442 = vmatmul.mubr.f32.gmra.mxu0 %v3441
        %v3443 = vpop.f32.mrf.mxu0
        %v3444 = vadd.f32 %v3347, %v3443
        %v3445 = vpop.f32.mrf.mxu0
        %3446 = vmatprep.mubr.f32.mxu0 0.0
        %v3447 = vand.u32 %v746, 4294901760
        %3448 = vmatmul.mubr.f32.gmra.mxu0 %v3447
        %v3449 = vpop.f32.mrf.mxu0
        %v3450 = vadd.f32 %v3355, %v3449
        %v3451 = vpop.f32.mrf.mxu0
        %3452 = vdwg.mxu0
        %3453 = vmatprep.subr.mxu0 0.0
        %3454 = vmatpush1.msra.mxu0 0.0
        %3455 = vmatprep.subr.mxu0 0.0
        %3456 = vmatpush1.msra.mxu0 0.0
        %3457 = vmatprep.subr.mxu0 0.0
        %3458 = vmatpush1.msra.mxu0 0.0
        %3459 = vmatprep.subr.mxu0 0.0
        %3460 = vmatpush1.msra.mxu0 0.0
        %3461 = vmatprep.subr.mxu0 0.0
        %3462 = vmatpush1.msra.mxu0 0.0
        %3463 = vmatprep.subr.mxu0 0.0
        %3464 = vmatpush1.msra.mxu0 0.0
        %3465 = vmatprep.subr.mxu0 0.0
        %3466 = vmatpush1.msra.mxu0 0.0
        %3467 = vmatprep.subr.mxu0 0.0
        %3468 = vmatpush1.msra.mxu0 0.0
        %3469 = vmatprep.subr.mxu0 0.0
        %3470 = vmatpush1.msra.mxu0 0.0
        %3471 = vmatprep.subr.mxu0 0.0
        %3472 = vmatpush1.msra.mxu0 0.0
        %3473 = vmatprep.subr.mxu0 0.0
        %3474 = vmatpush1.msra.mxu0 0.0
        %3475 = vmatprep.subr.mxu0 0.0
        %3476 = vmatpush1.msra.mxu0 0.0
        %3477 = vmatprep.subr.mxu0 0.0
        %3478 = vmatpush1.msra.mxu0 0.0
        %3479 = vmatprep.subr.mxu0 0.0
        %3480 = vmatpush1.msra.mxu0 0.0
        %3481 = vmatprep.subr.mxu0 0.0
        %v3482 = vand.u32 %v2953, 4294901760
        %3483 = vmatpush1.msra.mxu0 %v3482
        %3484 = vmatprep.subr.mxu0 0.0
        %v3485 = vand.u32 %v2947, 4294901760
        %3486 = vmatpush1.msra.mxu0 %v3485
        %3487 = vmatprep.subr.mxu0 0.0
        %3488 = vmatpush2.msra.mxu0 0.0
        %3489 = vmatprep.subr.mxu0 0.0
        %3490 = vmatpush2.msra.mxu0 0.0
        %3491 = vmatprep.subr.mxu0 0.0
        %3492 = vmatpush2.msra.mxu0 0.0
        %3493 = vmatprep.subr.mxu0 0.0
        %3494 = vmatpush2.msra.mxu0 0.0
        %3495 = vmatprep.subr.mxu0 0.0
        %3496 = vmatpush2.msra.mxu0 0.0
        %3497 = vmatprep.subr.mxu0 0.0
        %3498 = vmatpush2.msra.mxu0 0.0
        %3499 = vmatprep.subr.mxu0 0.0
        %3500 = vmatpush2.msra.mxu0 0.0
        %3501 = vmatprep.subr.mxu0 0.0
        %3502 = vmatpush2.msra.mxu0 0.0
        %3503 = vmatprep.subr.mxu0 0.0
        %3504 = vmatpush2.msra.mxu0 0.0
        %3505 = vmatprep.subr.mxu0 0.0
        %3506 = vmatpush2.msra.mxu0 0.0
        %3507 = vmatprep.subr.mxu0 0.0
        %3508 = vmatpush2.msra.mxu0 0.0
        %3509 = vmatprep.subr.mxu0 0.0
        %3510 = vmatpush2.msra.mxu0 0.0
        %3511 = vmatprep.subr.mxu0 0.0
        %3512 = vmatpush2.msra.mxu0 0.0
        %3513 = vmatprep.subr.mxu0 0.0
        %3514 = vmatpush2.msra.mxu0 0.0
        %3515 = vmatprep.subr.mxu0 0.0
        %3516 = vmatpush2.msra.mxu0 0.0
        %3517 = vmatprep.subr.mxu0 0.0
        %3518 = vmatpush2.msra.mxu0 0.0
        %3519 = vmatprep.mubr.f32.mxu0 0.0
        %v3520 = vand.u32 %v737, 4294901760
        %3521 = vmatmul.mubr.f32.gmra.mxu0 %v3520
        %v3522 = vpop.f32.mrf.mxu0
        %v3523 = vadd.f32 %v3432, %v3522
        %v3524 = vpop.f32.mrf.mxu0
        %3525 = vmatprep.mubr.f32.mxu0 0.0
        %v3526 = vand.u32 %v740, 4294901760
        %3527 = vmatmul.mubr.f32.gmra.mxu0 %v3526
        %v3528 = vpop.f32.mrf.mxu0
        %v3529 = vadd.f32 %v3438, %v3528
        %v3530 = vpop.f32.mrf.mxu0
        %3531 = vmatprep.mubr.f32.mxu0 0.0
        %v3532 = vand.u32 %v743, 4294901760
        %3533 = vmatmul.mubr.f32.gmra.mxu0 %v3532
        %v3534 = vpop.f32.mrf.mxu0
        %v3535 = vadd.f32 %v3444, %v3534
        %v3536 = vpop.f32.mrf.mxu0
        %3537 = vmatprep.mubr.f32.mxu0 0.0
        %v3538 = vand.u32 %v746, 4294901760
        %3539 = vmatmul.mubr.f32.gmra.mxu0 %v3538
        %v3540 = vpop.f32.mrf.mxu0
        %v3541 = vadd.f32 %v3450, %v3540
        %v3542 = vpop.f32.mrf.mxu0
        %3543 = vdwg.mxu0
        %s3544 = scalar_lea.vmem %s216, 64 [#allocation8]
        %3545 = vst.msk [vmem:[%s3544] sm:$0xff] %vm1336, %v3523
        %3546 = vst.msk [vmem:[%s3544 + $0x8] sm:$0xff] %vm1336, %v3529
        %3547 = vst.msk [vmem:[%s3544 + $0x10] sm:$0xff] %vm1336, %v3535
        %3548 = vst.msk [vmem:[%s3544 + $0x18] sm:$0xff] %vm1336, %v3541
        %s3549 = scalar_lea.vmem %s194, 48 [#allocation7]
        %v3550 = vld [vmem:[%s3549] sm:$0xff]
        %v3551 = vld [vmem:[%s3549 + $0x8] sm:$0xff]
        %v3553 = vsel %vm227, %v3550, 0
        %v3556 = vsel %vm227, %v3551, 0
        %3558 = vmatprep.subr.mxu0 0.0
        %3559 = vmatpush1.msra.mxu0 0.0
        %3560 = vmatprep.subr.mxu0 0.0
        %3561 = vmatpush1.msra.mxu0 0.0
        %3562 = vmatprep.subr.mxu0 0.0
        %3563 = vmatpush1.msra.mxu0 0.0
        %3564 = vmatprep.subr.mxu0 0.0
        %3565 = vmatpush1.msra.mxu0 0.0
        %3566 = vmatprep.subr.mxu0 0.0
        %3567 = vmatpush1.msra.mxu0 0.0
        %3568 = vmatprep.subr.mxu0 0.0
        %3569 = vmatpush1.msra.mxu0 0.0
        %3570 = vmatprep.subr.mxu0 0.0
        %3571 = vmatpush1.msra.mxu0 0.0
        %3572 = vmatprep.subr.mxu0 0.0
        %3573 = vmatpush1.msra.mxu0 0.0
        %3574 = vmatprep.subr.mxu0 0.0
        %3575 = vmatpush1.msra.mxu0 0.0
        %3576 = vmatprep.subr.mxu0 0.0
        %3577 = vmatpush1.msra.mxu0 0.0
        %3578 = vmatprep.subr.mxu0 0.0
        %3579 = vmatpush1.msra.mxu0 0.0
        %3580 = vmatprep.subr.mxu0 0.0
        %3581 = vmatpush1.msra.mxu0 0.0
        %3582 = vmatprep.subr.mxu0 0.0
        %3583 = vmatpush1.msra.mxu0 0.0
        %3584 = vmatprep.subr.mxu0 0.0
        %3585 = vmatpush1.msra.mxu0 0.0
        %3586 = vmatprep.subr.mxu0 0.0
        %v3587 = vand.u32 %v224, 4294901760
        %3588 = vmatpush1.msra.mxu0 %v3587
        %3589 = vmatprep.subr.mxu0 0.0
        %v3590 = vand.u32 %v223, 4294901760
        %3591 = vmatpush1.msra.mxu0 %v3590
        %3592 = vmatprep.subr.mxu0 0.0
        %3593 = vmatpush2.msra.mxu0 0.0
        %3594 = vmatprep.subr.mxu0 0.0
        %3595 = vmatpush2.msra.mxu0 0.0
        %3596 = vmatprep.subr.mxu0 0.0
        %3597 = vmatpush2.msra.mxu0 0.0
        %3598 = vmatprep.subr.mxu0 0.0
        %3599 = vmatpush2.msra.mxu0 0.0
        %3600 = vmatprep.subr.mxu0 0.0
        %3601 = vmatpush2.msra.mxu0 0.0
        %3602 = vmatprep.subr.mxu0 0.0
        %3603 = vmatpush2.msra.mxu0 0.0
        %3604 = vmatprep.subr.mxu0 0.0
        %3605 = vmatpush2.msra.mxu0 0.0
        %3606 = vmatprep.subr.mxu0 0.0
        %3607 = vmatpush2.msra.mxu0 0.0
        %3608 = vmatprep.subr.mxu0 0.0
        %3609 = vmatpush2.msra.mxu0 0.0
        %3610 = vmatprep.subr.mxu0 0.0
        %3611 = vmatpush2.msra.mxu0 0.0
        %3612 = vmatprep.subr.mxu0 0.0
        %3613 = vmatpush2.msra.mxu0 0.0
        %3614 = vmatprep.subr.mxu0 0.0
        %3615 = vmatpush2.msra.mxu0 0.0
        %3616 = vmatprep.subr.mxu0 0.0
        %3617 = vmatpush2.msra.mxu0 0.0
        %3618 = vmatprep.subr.mxu0 0.0
        %3619 = vmatpush2.msra.mxu0 0.0
        %3620 = vmatprep.subr.mxu0 0.0
        %3621 = vmatpush2.msra.mxu0 0.0
        %3622 = vmatprep.subr.mxu0 0.0
        %3623 = vmatpush2.msra.mxu0 0.0
        %3624 = vmatprep.mubr.f32.mxu0 0.0
        %v3625 = vand.u32 %v3553, 4294901760
        %v3626 = vsub.f32 %v3553, %v3625
        %v3627 = vand.u32 %v3626, 4294901760
        %v3628 = vsub.f32 %v3626, %v3627
        %v3629 = vand.u32 %v3628, 4294901760
        %3630 = vmatmul.mubr.f32.gmra.mxu0 %v3629
        %v3631 = vpop.f32.mrf.mxu0
        %v3632 = vadd.f32 0.0, %v3631
        %v3633 = vpop.f32.mrf.mxu0
        %3634 = vmatprep.mubr.f32.mxu0 0.0
        %v3635 = vand.u32 %v3556, 4294901760
        %v3636 = vsub.f32 %v3556, %v3635
        %v3637 = vand.u32 %v3636, 4294901760
        %v3638 = vsub.f32 %v3636, %v3637
        %v3639 = vand.u32 %v3638, 4294901760
        %3640 = vmatmul.mubr.f32.gmra.mxu0 %v3639
        %v3641 = vpop.f32.mrf.mxu0
        %v3642 = vadd.f32 0.0, %v3641
        %v3643 = vpop.f32.mrf.mxu0
        %3644 = vdwg.mxu0
        %3645 = vmatprep.subr.mxu0 0.0
        %3646 = vmatpush1.msra.mxu0 0.0
        %3647 = vmatprep.subr.mxu0 0.0
        %3648 = vmatpush1.msra.mxu0 0.0
        %3649 = vmatprep.subr.mxu0 0.0
        %3650 = vmatpush1.msra.mxu0 0.0
        %3651 = vmatprep.subr.mxu0 0.0
        %3652 = vmatpush1.msra.mxu0 0.0
        %3653 = vmatprep.subr.mxu0 0.0
        %3654 = vmatpush1.msra.mxu0 0.0
        %3655 = vmatprep.subr.mxu0 0.0
        %3656 = vmatpush1.msra.mxu0 0.0
        %3657 = vmatprep.subr.mxu0 0.0
        %3658 = vmatpush1.msra.mxu0 0.0
        %3659 = vmatprep.subr.mxu0 0.0
        %3660 = vmatpush1.msra.mxu0 0.0
        %3661 = vmatprep.subr.mxu0 0.0
        %3662 = vmatpush1.msra.mxu0 0.0
        %3663 = vmatprep.subr.mxu0 0.0
        %3664 = vmatpush1.msra.mxu0 0.0
        %3665 = vmatprep.subr.mxu0 0.0
        %3666 = vmatpush1.msra.mxu0 0.0
        %3667 = vmatprep.subr.mxu0 0.0
        %3668 = vmatpush1.msra.mxu0 0.0
        %3669 = vmatprep.subr.mxu0 0.0
        %3670 = vmatpush1.msra.mxu0 0.0
        %3671 = vmatprep.subr.mxu0 0.0
        %3672 = vmatpush1.msra.mxu0 0.0
        %3673 = vmatprep.subr.mxu0 0.0
        %v3674 = vand.u32 %v224, 4294901760
        %v3675 = vsub.f32 %v224, %v3674
        %v3676 = vand.u32 %v3675, 4294901760
        %v3677 = vsub.f32 %v3675, %v3676
        %v3678 = vand.u32 %v3677, 4294901760
        %3679 = vmatpush1.msra.mxu0 %v3678
        %3680 = vmatprep.subr.mxu0 0.0
        %v3681 = vand.u32 %v223, 4294901760
        %v3682 = vsub.f32 %v223, %v3681
        %v3683 = vand.u32 %v3682, 4294901760
        %v3684 = vsub.f32 %v3682, %v3683
        %v3685 = vand.u32 %v3684, 4294901760
        %3686 = vmatpush1.msra.mxu0 %v3685
        %3687 = vmatprep.subr.mxu0 0.0
        %3688 = vmatpush2.msra.mxu0 0.0
        %3689 = vmatprep.subr.mxu0 0.0
        %3690 = vmatpush2.msra.mxu0 0.0
        %3691 = vmatprep.subr.mxu0 0.0
        %3692 = vmatpush2.msra.mxu0 0.0
        %3693 = vmatprep.subr.mxu0 0.0
        %3694 = vmatpush2.msra.mxu0 0.0
        %3695 = vmatprep.subr.mxu0 0.0
        %3696 = vmatpush2.msra.mxu0 0.0
        %3697 = vmatprep.subr.mxu0 0.0
        %3698 = vmatpush2.msra.mxu0 0.0
        %3699 = vmatprep.subr.mxu0 0.0
        %3700 = vmatpush2.msra.mxu0 0.0
        %3701 = vmatprep.subr.mxu0 0.0
        %3702 = vmatpush2.msra.mxu0 0.0
        %3703 = vmatprep.subr.mxu0 0.0
        %3704 = vmatpush2.msra.mxu0 0.0
        %3705 = vmatprep.subr.mxu0 0.0
        %3706 = vmatpush2.msra.mxu0 0.0
        %3707 = vmatprep.subr.mxu0 0.0
        %3708 = vmatpush2.msra.mxu0 0.0
        %3709 = vmatprep.subr.mxu0 0.0
        %3710 = vmatpush2.msra.mxu0 0.0
        %3711 = vmatprep.subr.mxu0 0.0
        %3712 = vmatpush2.msra.mxu0 0.0
        %3713 = vmatprep.subr.mxu0 0.0
        %3714 = vmatpush2.msra.mxu0 0.0
        %3715 = vmatprep.subr.mxu0 0.0
        %3716 = vmatpush2.msra.mxu0 0.0
        %3717 = vmatprep.subr.mxu0 0.0
        %3718 = vmatpush2.msra.mxu0 0.0
        %3719 = vmatprep.mubr.f32.mxu0 0.0
        %v3720 = vand.u32 %v3553, 4294901760
        %3721 = vmatmul.mubr.f32.gmra.mxu0 %v3720
        %v3722 = vpop.f32.mrf.mxu0
        %v3723 = vadd.f32 %v3632, %v3722
        %v3724 = vpop.f32.mrf.mxu0
        %3725 = vmatprep.mubr.f32.mxu0 0.0
        %v3726 = vand.u32 %v3556, 4294901760
        %3727 = vmatmul.mubr.f32.gmra.mxu0 %v3726
        %v3728 = vpop.f32.mrf.mxu0
        %v3729 = vadd.f32 %v3642, %v3728
        %v3730 = vpop.f32.mrf.mxu0
        %3731 = vdwg.mxu0
        %3732 = vmatprep.subr.mxu0 0.0
        %3733 = vmatpush1.msra.mxu0 0.0
        %3734 = vmatprep.subr.mxu0 0.0
        %3735 = vmatpush1.msra.mxu0 0.0
        %3736 = vmatprep.subr.mxu0 0.0
        %3737 = vmatpush1.msra.mxu0 0.0
        %3738 = vmatprep.subr.mxu0 0.0
        %3739 = vmatpush1.msra.mxu0 0.0
        %3740 = vmatprep.subr.mxu0 0.0
        %3741 = vmatpush1.msra.mxu0 0.0
        %3742 = vmatprep.subr.mxu0 0.0
        %3743 = vmatpush1.msra.mxu0 0.0
        %3744 = vmatprep.subr.mxu0 0.0
        %3745 = vmatpush1.msra.mxu0 0.0
        %3746 = vmatprep.subr.mxu0 0.0
        %3747 = vmatpush1.msra.mxu0 0.0
        %3748 = vmatprep.subr.mxu0 0.0
        %3749 = vmatpush1.msra.mxu0 0.0
        %3750 = vmatprep.subr.mxu0 0.0
        %3751 = vmatpush1.msra.mxu0 0.0
        %3752 = vmatprep.subr.mxu0 0.0
        %3753 = vmatpush1.msra.mxu0 0.0
        %3754 = vmatprep.subr.mxu0 0.0
        %3755 = vmatpush1.msra.mxu0 0.0
        %3756 = vmatprep.subr.mxu0 0.0
        %3757 = vmatpush1.msra.mxu0 0.0
        %3758 = vmatprep.subr.mxu0 0.0
        %3759 = vmatpush1.msra.mxu0 0.0
        %3760 = vmatprep.subr.mxu0 0.0
        %v3761 = vand.u32 %v224, 4294901760
        %v3762 = vsub.f32 %v224, %v3761
        %3763 = vmatpush1.msra.mxu0 %v3762
        %3764 = vmatprep.subr.mxu0 0.0
        %v3765 = vand.u32 %v223, 4294901760
        %v3766 = vsub.f32 %v223, %v3765
        %3767 = vmatpush1.msra.mxu0 %v3766
        %3768 = vmatprep.subr.mxu0 0.0
        %3769 = vmatpush2.msra.mxu0 0.0
        %3770 = vmatprep.subr.mxu0 0.0
        %3771 = vmatpush2.msra.mxu0 0.0
        %3772 = vmatprep.subr.mxu0 0.0
        %3773 = vmatpush2.msra.mxu0 0.0
        %3774 = vmatprep.subr.mxu0 0.0
        %3775 = vmatpush2.msra.mxu0 0.0
        %3776 = vmatprep.subr.mxu0 0.0
        %3777 = vmatpush2.msra.mxu0 0.0
        %3778 = vmatprep.subr.mxu0 0.0
        %3779 = vmatpush2.msra.mxu0 0.0
        %3780 = vmatprep.subr.mxu0 0.0
        %3781 = vmatpush2.msra.mxu0 0.0
        %3782 = vmatprep.subr.mxu0 0.0
        %3783 = vmatpush2.msra.mxu0 0.0
        %3784 = vmatprep.subr.mxu0 0.0
        %3785 = vmatpush2.msra.mxu0 0.0
        %3786 = vmatprep.subr.mxu0 0.0
        %3787 = vmatpush2.msra.mxu0 0.0
        %3788 = vmatprep.subr.mxu0 0.0
        %3789 = vmatpush2.msra.mxu0 0.0
        %3790 = vmatprep.subr.mxu0 0.0
        %3791 = vmatpush2.msra.mxu0 0.0
        %3792 = vmatprep.subr.mxu0 0.0
        %3793 = vmatpush2.msra.mxu0 0.0
        %3794 = vmatprep.subr.mxu0 0.0
        %3795 = vmatpush2.msra.mxu0 0.0
        %3796 = vmatprep.subr.mxu0 0.0
        %3797 = vmatpush2.msra.mxu0 0.0
        %3798 = vmatprep.subr.mxu0 0.0
        %3799 = vmatpush2.msra.mxu0 0.0
        %3800 = vmatprep.mubr.f32.mxu0 0.0
        %v3801 = vand.u32 %v3553, 4294901760
        %v3802 = vsub.f32 %v3553, %v3801
        %3803 = vmatmul.mubr.f32.gmra.mxu0 %v3802
        %v3804 = vpop.f32.mrf.mxu0
        %v3805 = vadd.f32 %v3723, %v3804
        %v3806 = vpop.f32.mrf.mxu0
        %3807 = vmatprep.mubr.f32.mxu0 0.0
        %v3808 = vand.u32 %v3556, 4294901760
        %v3809 = vsub.f32 %v3556, %v3808
        %3810 = vmatmul.mubr.f32.gmra.mxu0 %v3809
        %v3811 = vpop.f32.mrf.mxu0
        %v3812 = vadd.f32 %v3729, %v3811
        %v3813 = vpop.f32.mrf.mxu0
        %3814 = vdwg.mxu0
        %3815 = vmatprep.subr.mxu0 0.0
        %3816 = vmatpush1.msra.mxu0 0.0
        %3817 = vmatprep.subr.mxu0 0.0
        %3818 = vmatpush1.msra.mxu0 0.0
        %3819 = vmatprep.subr.mxu0 0.0
        %3820 = vmatpush1.msra.mxu0 0.0
        %3821 = vmatprep.subr.mxu0 0.0
        %3822 = vmatpush1.msra.mxu0 0.0
        %3823 = vmatprep.subr.mxu0 0.0
        %3824 = vmatpush1.msra.mxu0 0.0
        %3825 = vmatprep.subr.mxu0 0.0
        %3826 = vmatpush1.msra.mxu0 0.0
        %3827 = vmatprep.subr.mxu0 0.0
        %3828 = vmatpush1.msra.mxu0 0.0
        %3829 = vmatprep.subr.mxu0 0.0
        %3830 = vmatpush1.msra.mxu0 0.0
        %3831 = vmatprep.subr.mxu0 0.0
        %3832 = vmatpush1.msra.mxu0 0.0
        %3833 = vmatprep.subr.mxu0 0.0
        %3834 = vmatpush1.msra.mxu0 0.0
        %3835 = vmatprep.subr.mxu0 0.0
        %3836 = vmatpush1.msra.mxu0 0.0
        %3837 = vmatprep.subr.mxu0 0.0
        %3838 = vmatpush1.msra.mxu0 0.0
        %3839 = vmatprep.subr.mxu0 0.0
        %3840 = vmatpush1.msra.mxu0 0.0
        %3841 = vmatprep.subr.mxu0 0.0
        %3842 = vmatpush1.msra.mxu0 0.0
        %3843 = vmatprep.subr.mxu0 0.0
        %v3844 = vand.u32 %v224, 4294901760
        %3845 = vmatpush1.msra.mxu0 %v3844
        %3846 = vmatprep.subr.mxu0 0.0
        %v3847 = vand.u32 %v223, 4294901760
        %3848 = vmatpush1.msra.mxu0 %v3847
        %3849 = vmatprep.subr.mxu0 0.0
        %3850 = vmatpush2.msra.mxu0 0.0
        %3851 = vmatprep.subr.mxu0 0.0
        %3852 = vmatpush2.msra.mxu0 0.0
        %3853 = vmatprep.subr.mxu0 0.0
        %3854 = vmatpush2.msra.mxu0 0.0
        %3855 = vmatprep.subr.mxu0 0.0
        %3856 = vmatpush2.msra.mxu0 0.0
        %3857 = vmatprep.subr.mxu0 0.0
        %3858 = vmatpush2.msra.mxu0 0.0
        %3859 = vmatprep.subr.mxu0 0.0
        %3860 = vmatpush2.msra.mxu0 0.0
        %3861 = vmatprep.subr.mxu0 0.0
        %3862 = vmatpush2.msra.mxu0 0.0
        %3863 = vmatprep.subr.mxu0 0.0
        %3864 = vmatpush2.msra.mxu0 0.0
        %3865 = vmatprep.subr.mxu0 0.0
        %3866 = vmatpush2.msra.mxu0 0.0
        %3867 = vmatprep.subr.mxu0 0.0
        %3868 = vmatpush2.msra.mxu0 0.0
        %3869 = vmatprep.subr.mxu0 0.0
        %3870 = vmatpush2.msra.mxu0 0.0
        %3871 = vmatprep.subr.mxu0 0.0
        %3872 = vmatpush2.msra.mxu0 0.0
        %3873 = vmatprep.subr.mxu0 0.0
        %3874 = vmatpush2.msra.mxu0 0.0
        %3875 = vmatprep.subr.mxu0 0.0
        %3876 = vmatpush2.msra.mxu0 0.0
        %3877 = vmatprep.subr.mxu0 0.0
        %3878 = vmatpush2.msra.mxu0 0.0
        %3879 = vmatprep.subr.mxu0 0.0
        %3880 = vmatpush2.msra.mxu0 0.0
        %3881 = vmatprep.mubr.f32.mxu0 0.0
        %v3882 = vand.u32 %v3553, 4294901760
        %v3883 = vsub.f32 %v3553, %v3882
        %v3884 = vand.u32 %v3883, 4294901760
        %3885 = vmatmul.mubr.f32.gmra.mxu0 %v3884
        %v3886 = vpop.f32.mrf.mxu0
        %v3887 = vadd.f32 %v3805, %v3886
        %v3888 = vpop.f32.mrf.mxu0
        %3889 = vmatprep.mubr.f32.mxu0 0.0
        %v3890 = vand.u32 %v3556, 4294901760
        %v3891 = vsub.f32 %v3556, %v3890
        %v3892 = vand.u32 %v3891, 4294901760
        %3893 = vmatmul.mubr.f32.gmra.mxu0 %v3892
        %v3894 = vpop.f32.mrf.mxu0
        %v3895 = vadd.f32 %v3812, %v3894
        %v3896 = vpop.f32.mrf.mxu0
        %3897 = vdwg.mxu0
        %3898 = vmatprep.subr.mxu0 0.0
        %3899 = vmatpush1.msra.mxu0 0.0
        %3900 = vmatprep.subr.mxu0 0.0
        %3901 = vmatpush1.msra.mxu0 0.0
        %3902 = vmatprep.subr.mxu0 0.0
        %3903 = vmatpush1.msra.mxu0 0.0
        %3904 = vmatprep.subr.mxu0 0.0
        %3905 = vmatpush1.msra.mxu0 0.0
        %3906 = vmatprep.subr.mxu0 0.0
        %3907 = vmatpush1.msra.mxu0 0.0
        %3908 = vmatprep.subr.mxu0 0.0
        %3909 = vmatpush1.msra.mxu0 0.0
        %3910 = vmatprep.subr.mxu0 0.0
        %3911 = vmatpush1.msra.mxu0 0.0
        %3912 = vmatprep.subr.mxu0 0.0
        %3913 = vmatpush1.msra.mxu0 0.0
        %3914 = vmatprep.subr.mxu0 0.0
        %3915 = vmatpush1.msra.mxu0 0.0
        %3916 = vmatprep.subr.mxu0 0.0
        %3917 = vmatpush1.msra.mxu0 0.0
        %3918 = vmatprep.subr.mxu0 0.0
        %3919 = vmatpush1.msra.mxu0 0.0
        %3920 = vmatprep.subr.mxu0 0.0
        %3921 = vmatpush1.msra.mxu0 0.0
        %3922 = vmatprep.subr.mxu0 0.0
        %3923 = vmatpush1.msra.mxu0 0.0
        %3924 = vmatprep.subr.mxu0 0.0
        %3925 = vmatpush1.msra.mxu0 0.0
        %3926 = vmatprep.subr.mxu0 0.0
        %v3927 = vand.u32 %v224, 4294901760
        %v3928 = vsub.f32 %v224, %v3927
        %v3929 = vand.u32 %v3928, 4294901760
        %3930 = vmatpush1.msra.mxu0 %v3929
        %3931 = vmatprep.subr.mxu0 0.0
        %v3932 = vand.u32 %v223, 4294901760
        %v3933 = vsub.f32 %v223, %v3932
        %v3934 = vand.u32 %v3933, 4294901760
        %3935 = vmatpush1.msra.mxu0 %v3934
        %3936 = vmatprep.subr.mxu0 0.0
        %3937 = vmatpush2.msra.mxu0 0.0
        %3938 = vmatprep.subr.mxu0 0.0
        %3939 = vmatpush2.msra.mxu0 0.0
        %3940 = vmatprep.subr.mxu0 0.0
        %3941 = vmatpush2.msra.mxu0 0.0
        %3942 = vmatprep.subr.mxu0 0.0
        %3943 = vmatpush2.msra.mxu0 0.0
        %3944 = vmatprep.subr.mxu0 0.0
        %3945 = vmatpush2.msra.mxu0 0.0
        %3946 = vmatprep.subr.mxu0 0.0
        %3947 = vmatpush2.msra.mxu0 0.0
        %3948 = vmatprep.subr.mxu0 0.0
        %3949 = vmatpush2.msra.mxu0 0.0
        %3950 = vmatprep.subr.mxu0 0.0
        %3951 = vmatpush2.msra.mxu0 0.0
        %3952 = vmatprep.subr.mxu0 0.0
        %3953 = vmatpush2.msra.mxu0 0.0
        %3954 = vmatprep.subr.mxu0 0.0
        %3955 = vmatpush2.msra.mxu0 0.0
        %3956 = vmatprep.subr.mxu0 0.0
        %3957 = vmatpush2.msra.mxu0 0.0
        %3958 = vmatprep.subr.mxu0 0.0
        %3959 = vmatpush2.msra.mxu0 0.0
        %3960 = vmatprep.subr.mxu0 0.0
        %3961 = vmatpush2.msra.mxu0 0.0
        %3962 = vmatprep.subr.mxu0 0.0
        %3963 = vmatpush2.msra.mxu0 0.0
        %3964 = vmatprep.subr.mxu0 0.0
        %3965 = vmatpush2.msra.mxu0 0.0
        %3966 = vmatprep.subr.mxu0 0.0
        %3967 = vmatpush2.msra.mxu0 0.0
        %3968 = vmatprep.mubr.f32.mxu0 0.0
        %v3969 = vand.u32 %v3553, 4294901760
        %3970 = vmatmul.mubr.f32.gmra.mxu0 %v3969
        %v3971 = vpop.f32.mrf.mxu0
        %v3972 = vadd.f32 %v3887, %v3971
        %v3973 = vpop.f32.mrf.mxu0
        %3974 = vmatprep.mubr.f32.mxu0 0.0
        %v3975 = vand.u32 %v3556, 4294901760
        %3976 = vmatmul.mubr.f32.gmra.mxu0 %v3975
        %v3977 = vpop.f32.mrf.mxu0
        %v3978 = vadd.f32 %v3895, %v3977
        %v3979 = vpop.f32.mrf.mxu0
        %3980 = vdwg.mxu0
        %3981 = vmatprep.subr.mxu0 0.0
        %3982 = vmatpush1.msra.mxu0 0.0
        %3983 = vmatprep.subr.mxu0 0.0
        %3984 = vmatpush1.msra.mxu0 0.0
        %3985 = vmatprep.subr.mxu0 0.0
        %3986 = vmatpush1.msra.mxu0 0.0
        %3987 = vmatprep.subr.mxu0 0.0
        %3988 = vmatpush1.msra.mxu0 0.0
        %3989 = vmatprep.subr.mxu0 0.0
        %3990 = vmatpush1.msra.mxu0 0.0
        %3991 = vmatprep.subr.mxu0 0.0
        %3992 = vmatpush1.msra.mxu0 0.0
        %3993 = vmatprep.subr.mxu0 0.0
        %3994 = vmatpush1.msra.mxu0 0.0
        %3995 = vmatprep.subr.mxu0 0.0
        %3996 = vmatpush1.msra.mxu0 0.0
        %3997 = vmatprep.subr.mxu0 0.0
        %3998 = vmatpush1.msra.mxu0 0.0
        %3999 = vmatprep.subr.mxu0 0.0
        %4000 = vmatpush1.msra.mxu0 0.0
        %4001 = vmatprep.subr.mxu0 0.0
        %4002 = vmatpush1.msra.mxu0 0.0
        %4003 = vmatprep.subr.mxu0 0.0
        %4004 = vmatpush1.msra.mxu0 0.0
        %4005 = vmatprep.subr.mxu0 0.0
        %4006 = vmatpush1.msra.mxu0 0.0
        %4007 = vmatprep.subr.mxu0 0.0
        %4008 = vmatpush1.msra.mxu0 0.0
        %4009 = vmatprep.subr.mxu0 0.0
        %v4010 = vand.u32 %v224, 4294901760
        %4011 = vmatpush1.msra.mxu0 %v4010
        %4012 = vmatprep.subr.mxu0 0.0
        %v4013 = vand.u32 %v223, 4294901760
        %4014 = vmatpush1.msra.mxu0 %v4013
        %4015 = vmatprep.subr.mxu0 0.0
        %4016 = vmatpush2.msra.mxu0 0.0
        %4017 = vmatprep.subr.mxu0 0.0
        %4018 = vmatpush2.msra.mxu0 0.0
        %4019 = vmatprep.subr.mxu0 0.0
        %4020 = vmatpush2.msra.mxu0 0.0
        %4021 = vmatprep.subr.mxu0 0.0
        %4022 = vmatpush2.msra.mxu0 0.0
        %4023 = vmatprep.subr.mxu0 0.0
        %4024 = vmatpush2.msra.mxu0 0.0
        %4025 = vmatprep.subr.mxu0 0.0
        %4026 = vmatpush2.msra.mxu0 0.0
        %4027 = vmatprep.subr.mxu0 0.0
        %4028 = vmatpush2.msra.mxu0 0.0
        %4029 = vmatprep.subr.mxu0 0.0
        %4030 = vmatpush2.msra.mxu0 0.0
        %4031 = vmatprep.subr.mxu0 0.0
        %4032 = vmatpush2.msra.mxu0 0.0
        %4033 = vmatprep.subr.mxu0 0.0
        %4034 = vmatpush2.msra.mxu0 0.0
        %4035 = vmatprep.subr.mxu0 0.0
        %4036 = vmatpush2.msra.mxu0 0.0
        %4037 = vmatprep.subr.mxu0 0.0
        %4038 = vmatpush2.msra.mxu0 0.0
        %4039 = vmatprep.subr.mxu0 0.0
        %4040 = vmatpush2.msra.mxu0 0.0
        %4041 = vmatprep.subr.mxu0 0.0
        %4042 = vmatpush2.msra.mxu0 0.0
        %4043 = vmatprep.subr.mxu0 0.0
        %4044 = vmatpush2.msra.mxu0 0.0
        %4045 = vmatprep.subr.mxu0 0.0
        %4046 = vmatpush2.msra.mxu0 0.0
        %4047 = vmatprep.mubr.f32.mxu0 0.0
        %v4048 = vand.u32 %v3553, 4294901760
        %4049 = vmatmul.mubr.f32.gmra.mxu0 %v4048
        %v4050 = vpop.f32.mrf.mxu0
        %v4051 = vadd.f32 %v3972, %v4050
        %v4052 = vpop.f32.mrf.mxu0
        %4053 = vmatprep.mubr.f32.mxu0 0.0
        %v4054 = vand.u32 %v3556, 4294901760
        %4055 = vmatmul.mubr.f32.gmra.mxu0 %v4054
        %v4056 = vpop.f32.mrf.mxu0
        %v4057 = vadd.f32 %v3978, %v4056
        %v4058 = vpop.f32.mrf.mxu0
        %4059 = vdwg.mxu0
        %4060 = vmatprep.subr.mxu0 0.0
        %4061 = vmatpush1.msra.mxu0 0.0
        %4062 = vmatprep.subr.mxu0 0.0
        %4063 = vmatpush1.msra.mxu0 0.0
        %4064 = vmatprep.subr.mxu0 0.0
        %4065 = vmatpush1.msra.mxu0 0.0
        %4066 = vmatprep.subr.mxu0 0.0
        %4067 = vmatpush1.msra.mxu0 0.0
        %4068 = vmatprep.subr.mxu0 0.0
        %4069 = vmatpush1.msra.mxu0 0.0
        %4070 = vmatprep.subr.mxu0 0.0
        %4071 = vmatpush1.msra.mxu0 0.0
        %4072 = vmatprep.subr.mxu0 0.0
        %4073 = vmatpush1.msra.mxu0 0.0
        %4074 = vmatprep.subr.mxu0 0.0
        %4075 = vmatpush1.msra.mxu0 0.0
        %4076 = vmatprep.subr.mxu0 0.0
        %4077 = vmatpush1.msra.mxu0 0.0
        %4078 = vmatprep.subr.mxu0 0.0
        %4079 = vmatpush1.msra.mxu0 0.0
        %4080 = vmatprep.subr.mxu0 0.0
        %4081 = vmatpush1.msra.mxu0 0.0
        %4082 = vmatprep.subr.mxu0 0.0
        %4083 = vmatpush1.msra.mxu0 0.0
        %4084 = vmatprep.subr.mxu0 0.0
        %4085 = vmatpush1.msra.mxu0 0.0
        %4086 = vmatprep.subr.mxu0 0.0
        %4087 = vmatpush1.msra.mxu0 0.0
        %4088 = vmatprep.subr.mxu0 0.0
        %v4089 = vand.u32 %v4057, 4294901760
        %4090 = vmatpush1.msra.mxu0 %v4089
        %4091 = vmatprep.subr.mxu0 0.0
        %v4092 = vand.u32 %v4051, 4294901760
        %4093 = vmatpush1.msra.mxu0 %v4092
        %4094 = vmatprep.subr.mxu0 0.0
        %4095 = vmatpush2.msra.mxu0 0.0
        %4096 = vmatprep.subr.mxu0 0.0
        %4097 = vmatpush2.msra.mxu0 0.0
        %4098 = vmatprep.subr.mxu0 0.0
        %4099 = vmatpush2.msra.mxu0 0.0
        %4100 = vmatprep.subr.mxu0 0.0
        %4101 = vmatpush2.msra.mxu0 0.0
        %4102 = vmatprep.subr.mxu0 0.0
        %4103 = vmatpush2.msra.mxu0 0.0
        %4104 = vmatprep.subr.mxu0 0.0
        %4105 = vmatpush2.msra.mxu0 0.0
        %4106 = vmatprep.subr.mxu0 0.0
        %4107 = vmatpush2.msra.mxu0 0.0
        %4108 = vmatprep.subr.mxu0 0.0
        %4109 = vmatpush2.msra.mxu0 0.0
        %4110 = vmatprep.subr.mxu0 0.0
        %4111 = vmatpush2.msra.mxu0 0.0
        %4112 = vmatprep.subr.mxu0 0.0
        %4113 = vmatpush2.msra.mxu0 0.0
        %4114 = vmatprep.subr.mxu0 0.0
        %4115 = vmatpush2.msra.mxu0 0.0
        %4116 = vmatprep.subr.mxu0 0.0
        %4117 = vmatpush2.msra.mxu0 0.0
        %4118 = vmatprep.subr.mxu0 0.0
        %4119 = vmatpush2.msra.mxu0 0.0
        %4120 = vmatprep.subr.mxu0 0.0
        %4121 = vmatpush2.msra.mxu0 0.0
        %4122 = vmatprep.subr.mxu0 0.0
        %4123 = vmatpush2.msra.mxu0 0.0
        %4124 = vmatprep.subr.mxu0 0.0
        %4125 = vmatpush2.msra.mxu0 0.0
        %4126 = vmatprep.mubr.f32.mxu0 0.0
        %v4127 = vand.u32 %v737, 4294901760
        %v4128 = vsub.f32 %v737, %v4127
        %v4129 = vand.u32 %v4128, 4294901760
        %v4130 = vsub.f32 %v4128, %v4129
        %v4131 = vand.u32 %v4130, 4294901760
        %4132 = vmatmul.mubr.f32.gmra.mxu0 %v4131
        %v4133 = vpop.f32.mrf.mxu0
        %v4134 = vadd.f32 0.0, %v4133
        %v4135 = vpop.f32.mrf.mxu0
        %4136 = vmatprep.mubr.f32.mxu0 0.0
        %v4137 = vand.u32 %v740, 4294901760
        %v4138 = vsub.f32 %v740, %v4137
        %v4139 = vand.u32 %v4138, 4294901760
        %v4140 = vsub.f32 %v4138, %v4139
        %v4141 = vand.u32 %v4140, 4294901760
        %4142 = vmatmul.mubr.f32.gmra.mxu0 %v4141
        %v4143 = vpop.f32.mrf.mxu0
        %v4144 = vadd.f32 0.0, %v4143
        %v4145 = vpop.f32.mrf.mxu0
        %4146 = vmatprep.mubr.f32.mxu0 0.0
        %v4147 = vand.u32 %v743, 4294901760
        %v4148 = vsub.f32 %v743, %v4147
        %v4149 = vand.u32 %v4148, 4294901760
        %v4150 = vsub.f32 %v4148, %v4149
        %v4151 = vand.u32 %v4150, 4294901760
        %4152 = vmatmul.mubr.f32.gmra.mxu0 %v4151
        %v4153 = vpop.f32.mrf.mxu0
        %v4154 = vadd.f32 0.0, %v4153
        %v4155 = vpop.f32.mrf.mxu0
        %4156 = vmatprep.mubr.f32.mxu0 0.0
        %v4157 = vand.u32 %v746, 4294901760
        %v4158 = vsub.f32 %v746, %v4157
        %v4159 = vand.u32 %v4158, 4294901760
        %v4160 = vsub.f32 %v4158, %v4159
        %v4161 = vand.u32 %v4160, 4294901760
        %4162 = vmatmul.mubr.f32.gmra.mxu0 %v4161
        %v4163 = vpop.f32.mrf.mxu0
        %v4164 = vadd.f32 0.0, %v4163
        %v4165 = vpop.f32.mrf.mxu0
        %4166 = vdwg.mxu0
        %4167 = vmatprep.subr.mxu0 0.0
        %4168 = vmatpush1.msra.mxu0 0.0
        %4169 = vmatprep.subr.mxu0 0.0
        %4170 = vmatpush1.msra.mxu0 0.0
        %4171 = vmatprep.subr.mxu0 0.0
        %4172 = vmatpush1.msra.mxu0 0.0
        %4173 = vmatprep.subr.mxu0 0.0
        %4174 = vmatpush1.msra.mxu0 0.0
        %4175 = vmatprep.subr.mxu0 0.0
        %4176 = vmatpush1.msra.mxu0 0.0
        %4177 = vmatprep.subr.mxu0 0.0
        %4178 = vmatpush1.msra.mxu0 0.0
        %4179 = vmatprep.subr.mxu0 0.0
        %4180 = vmatpush1.msra.mxu0 0.0
        %4181 = vmatprep.subr.mxu0 0.0
        %4182 = vmatpush1.msra.mxu0 0.0
        %4183 = vmatprep.subr.mxu0 0.0
        %4184 = vmatpush1.msra.mxu0 0.0
        %4185 = vmatprep.subr.mxu0 0.0
        %4186 = vmatpush1.msra.mxu0 0.0
        %4187 = vmatprep.subr.mxu0 0.0
        %4188 = vmatpush1.msra.mxu0 0.0
        %4189 = vmatprep.subr.mxu0 0.0
        %4190 = vmatpush1.msra.mxu0 0.0
        %4191 = vmatprep.subr.mxu0 0.0
        %4192 = vmatpush1.msra.mxu0 0.0
        %4193 = vmatprep.subr.mxu0 0.0
        %4194 = vmatpush1.msra.mxu0 0.0
        %4195 = vmatprep.subr.mxu0 0.0
        %v4196 = vand.u32 %v4057, 4294901760
        %v4197 = vsub.f32 %v4057, %v4196
        %v4198 = vand.u32 %v4197, 4294901760
        %v4199 = vsub.f32 %v4197, %v4198
        %v4200 = vand.u32 %v4199, 4294901760
        %4201 = vmatpush1.msra.mxu0 %v4200
        %4202 = vmatprep.subr.mxu0 0.0
        %v4203 = vand.u32 %v4051, 4294901760
        %v4204 = vsub.f32 %v4051, %v4203
        %v4205 = vand.u32 %v4204, 4294901760
        %v4206 = vsub.f32 %v4204, %v4205
        %v4207 = vand.u32 %v4206, 4294901760
        %4208 = vmatpush1.msra.mxu0 %v4207
        %4209 = vmatprep.subr.mxu0 0.0
        %4210 = vmatpush2.msra.mxu0 0.0
        %4211 = vmatprep.subr.mxu0 0.0
        %4212 = vmatpush2.msra.mxu0 0.0
        %4213 = vmatprep.subr.mxu0 0.0
        %4214 = vmatpush2.msra.mxu0 0.0
        %4215 = vmatprep.subr.mxu0 0.0
        %4216 = vmatpush2.msra.mxu0 0.0
        %4217 = vmatprep.subr.mxu0 0.0
        %4218 = vmatpush2.msra.mxu0 0.0
        %4219 = vmatprep.subr.mxu0 0.0
        %4220 = vmatpush2.msra.mxu0 0.0
        %4221 = vmatprep.subr.mxu0 0.0
        %4222 = vmatpush2.msra.mxu0 0.0
        %4223 = vmatprep.subr.mxu0 0.0
        %4224 = vmatpush2.msra.mxu0 0.0
        %4225 = vmatprep.subr.mxu0 0.0
        %4226 = vmatpush2.msra.mxu0 0.0
        %4227 = vmatprep.subr.mxu0 0.0
        %4228 = vmatpush2.msra.mxu0 0.0
        %4229 = vmatprep.subr.mxu0 0.0
        %4230 = vmatpush2.msra.mxu0 0.0
        %4231 = vmatprep.subr.mxu0 0.0
        %4232 = vmatpush2.msra.mxu0 0.0
        %4233 = vmatprep.subr.mxu0 0.0
        %4234 = vmatpush2.msra.mxu0 0.0
        %4235 = vmatprep.subr.mxu0 0.0
        %4236 = vmatpush2.msra.mxu0 0.0
        %4237 = vmatprep.subr.mxu0 0.0
        %4238 = vmatpush2.msra.mxu0 0.0
        %4239 = vmatprep.subr.mxu0 0.0
        %4240 = vmatpush2.msra.mxu0 0.0
        %4241 = vmatprep.mubr.f32.mxu0 0.0
        %v4242 = vand.u32 %v737, 4294901760
        %4243 = vmatmul.mubr.f32.gmra.mxu0 %v4242
        %v4244 = vpop.f32.mrf.mxu0
        %v4245 = vadd.f32 %v4134, %v4244
        %v4246 = vpop.f32.mrf.mxu0
        %4247 = vmatprep.mubr.f32.mxu0 0.0
        %v4248 = vand.u32 %v740, 4294901760
        %4249 = vmatmul.mubr.f32.gmra.mxu0 %v4248
        %v4250 = vpop.f32.mrf.mxu0
        %v4251 = vadd.f32 %v4144, %v4250
        %v4252 = vpop.f32.mrf.mxu0
        %4253 = vmatprep.mubr.f32.mxu0 0.0
        %v4254 = vand.u32 %v743, 4294901760
        %4255 = vmatmul.mubr.f32.gmra.mxu0 %v4254
        %v4256 = vpop.f32.mrf.mxu0
        %v4257 = vadd.f32 %v4154, %v4256
        %v4258 = vpop.f32.mrf.mxu0
        %4259 = vmatprep.mubr.f32.mxu0 0.0
        %v4260 = vand.u32 %v746, 4294901760
        %4261 = vmatmul.mubr.f32.gmra.mxu0 %v4260
        %v4262 = vpop.f32.mrf.mxu0
        %v4263 = vadd.f32 %v4164, %v4262
        %v4264 = vpop.f32.mrf.mxu0
        %4265 = vdwg.mxu0
        %4266 = vmatprep.subr.mxu0 0.0
        %4267 = vmatpush1.msra.mxu0 0.0
        %4268 = vmatprep.subr.mxu0 0.0
        %4269 = vmatpush1.msra.mxu0 0.0
        %4270 = vmatprep.subr.mxu0 0.0
        %4271 = vmatpush1.msra.mxu0 0.0
        %4272 = vmatprep.subr.mxu0 0.0
        %4273 = vmatpush1.msra.mxu0 0.0
        %4274 = vmatprep.subr.mxu0 0.0
        %4275 = vmatpush1.msra.mxu0 0.0
        %4276 = vmatprep.subr.mxu0 0.0
        %4277 = vmatpush1.msra.mxu0 0.0
        %4278 = vmatprep.subr.mxu0 0.0
        %4279 = vmatpush1.msra.mxu0 0.0
        %4280 = vmatprep.subr.mxu0 0.0
        %4281 = vmatpush1.msra.mxu0 0.0
        %4282 = vmatprep.subr.mxu0 0.0
        %4283 = vmatpush1.msra.mxu0 0.0
        %4284 = vmatprep.subr.mxu0 0.0
        %4285 = vmatpush1.msra.mxu0 0.0
        %4286 = vmatprep.subr.mxu0 0.0
        %4287 = vmatpush1.msra.mxu0 0.0
        %4288 = vmatprep.subr.mxu0 0.0
        %4289 = vmatpush1.msra.mxu0 0.0
        %4290 = vmatprep.subr.mxu0 0.0
        %4291 = vmatpush1.msra.mxu0 0.0
        %4292 = vmatprep.subr.mxu0 0.0
        %4293 = vmatpush1.msra.mxu0 0.0
        %4294 = vmatprep.subr.mxu0 0.0
        %v4295 = vand.u32 %v4057, 4294901760
        %v4296 = vsub.f32 %v4057, %v4295
        %4297 = vmatpush1.msra.mxu0 %v4296
        %4298 = vmatprep.subr.mxu0 0.0
        %v4299 = vand.u32 %v4051, 4294901760
        %v4300 = vsub.f32 %v4051, %v4299
        %4301 = vmatpush1.msra.mxu0 %v4300
        %4302 = vmatprep.subr.mxu0 0.0
        %4303 = vmatpush2.msra.mxu0 0.0
        %4304 = vmatprep.subr.mxu0 0.0
        %4305 = vmatpush2.msra.mxu0 0.0
        %4306 = vmatprep.subr.mxu0 0.0
        %4307 = vmatpush2.msra.mxu0 0.0
        %4308 = vmatprep.subr.mxu0 0.0
        %4309 = vmatpush2.msra.mxu0 0.0
        %4310 = vmatprep.subr.mxu0 0.0
        %4311 = vmatpush2.msra.mxu0 0.0
        %4312 = vmatprep.subr.mxu0 0.0
        %4313 = vmatpush2.msra.mxu0 0.0
        %4314 = vmatprep.subr.mxu0 0.0
        %4315 = vmatpush2.msra.mxu0 0.0
        %4316 = vmatprep.subr.mxu0 0.0
        %4317 = vmatpush2.msra.mxu0 0.0
        %4318 = vmatprep.subr.mxu0 0.0
        %4319 = vmatpush2.msra.mxu0 0.0
        %4320 = vmatprep.subr.mxu0 0.0
        %4321 = vmatpush2.msra.mxu0 0.0
        %4322 = vmatprep.subr.mxu0 0.0
        %4323 = vmatpush2.msra.mxu0 0.0
        %4324 = vmatprep.subr.mxu0 0.0
        %4325 = vmatpush2.msra.mxu0 0.0
        %4326 = vmatprep.subr.mxu0 0.0
        %4327 = vmatpush2.msra.mxu0 0.0
        %4328 = vmatprep.subr.mxu0 0.0
        %4329 = vmatpush2.msra.mxu0 0.0
        %4330 = vmatprep.subr.mxu0 0.0
        %4331 = vmatpush2.msra.mxu0 0.0
        %4332 = vmatprep.subr.mxu0 0.0
        %4333 = vmatpush2.msra.mxu0 0.0
        %4334 = vmatprep.mubr.f32.mxu0 0.0
        %v4335 = vand.u32 %v737, 4294901760
        %v4336 = vsub.f32 %v737, %v4335
        %4337 = vmatmul.mubr.f32.gmra.mxu0 %v4336
        %v4338 = vpop.f32.mrf.mxu0
        %v4339 = vadd.f32 %v4245, %v4338
        %v4340 = vpop.f32.mrf.mxu0
        %4341 = vmatprep.mubr.f32.mxu0 0.0
        %v4342 = vand.u32 %v740, 4294901760
        %v4343 = vsub.f32 %v740, %v4342
        %4344 = vmatmul.mubr.f32.gmra.mxu0 %v4343
        %v4345 = vpop.f32.mrf.mxu0
        %v4346 = vadd.f32 %v4251, %v4345
        %v4347 = vpop.f32.mrf.mxu0
        %4348 = vmatprep.mubr.f32.mxu0 0.0
        %v4349 = vand.u32 %v743, 4294901760
        %v4350 = vsub.f32 %v743, %v4349
        %4351 = vmatmul.mubr.f32.gmra.mxu0 %v4350
        %v4352 = vpop.f32.mrf.mxu0
        %v4353 = vadd.f32 %v4257, %v4352
        %v4354 = vpop.f32.mrf.mxu0
        %4355 = vmatprep.mubr.f32.mxu0 0.0
        %v4356 = vand.u32 %v746, 4294901760
        %v4357 = vsub.f32 %v746, %v4356
        %4358 = vmatmul.mubr.f32.gmra.mxu0 %v4357
        %v4359 = vpop.f32.mrf.mxu0
        %v4360 = vadd.f32 %v4263, %v4359
        %v4361 = vpop.f32.mrf.mxu0
        %4362 = vdwg.mxu0
        %4363 = vmatprep.subr.mxu0 0.0
        %4364 = vmatpush1.msra.mxu0 0.0
        %4365 = vmatprep.subr.mxu0 0.0
        %4366 = vmatpush1.msra.mxu0 0.0
        %4367 = vmatprep.subr.mxu0 0.0
        %4368 = vmatpush1.msra.mxu0 0.0
        %4369 = vmatprep.subr.mxu0 0.0
        %4370 = vmatpush1.msra.mxu0 0.0
        %4371 = vmatprep.subr.mxu0 0.0
        %4372 = vmatpush1.msra.mxu0 0.0
        %4373 = vmatprep.subr.mxu0 0.0
        %4374 = vmatpush1.msra.mxu0 0.0
        %4375 = vmatprep.subr.mxu0 0.0
        %4376 = vmatpush1.msra.mxu0 0.0
        %4377 = vmatprep.subr.mxu0 0.0
        %4378 = vmatpush1.msra.mxu0 0.0
        %4379 = vmatprep.subr.mxu0 0.0
        %4380 = vmatpush1.msra.mxu0 0.0
        %4381 = vmatprep.subr.mxu0 0.0
        %4382 = vmatpush1.msra.mxu0 0.0
        %4383 = vmatprep.subr.mxu0 0.0
        %4384 = vmatpush1.msra.mxu0 0.0
        %4385 = vmatprep.subr.mxu0 0.0
        %4386 = vmatpush1.msra.mxu0 0.0
        %4387 = vmatprep.subr.mxu0 0.0
        %4388 = vmatpush1.msra.mxu0 0.0
        %4389 = vmatprep.subr.mxu0 0.0
        %4390 = vmatpush1.msra.mxu0 0.0
        %4391 = vmatprep.subr.mxu0 0.0
        %v4392 = vand.u32 %v4057, 4294901760
        %4393 = vmatpush1.msra.mxu0 %v4392
        %4394 = vmatprep.subr.mxu0 0.0
        %v4395 = vand.u32 %v4051, 4294901760
        %4396 = vmatpush1.msra.mxu0 %v4395
        %4397 = vmatprep.subr.mxu0 0.0
        %4398 = vmatpush2.msra.mxu0 0.0
        %4399 = vmatprep.subr.mxu0 0.0
        %4400 = vmatpush2.msra.mxu0 0.0
        %4401 = vmatprep.subr.mxu0 0.0
        %4402 = vmatpush2.msra.mxu0 0.0
        %4403 = vmatprep.subr.mxu0 0.0
        %4404 = vmatpush2.msra.mxu0 0.0
        %4405 = vmatprep.subr.mxu0 0.0
        %4406 = vmatpush2.msra.mxu0 0.0
        %4407 = vmatprep.subr.mxu0 0.0
        %4408 = vmatpush2.msra.mxu0 0.0
        %4409 = vmatprep.subr.mxu0 0.0
        %4410 = vmatpush2.msra.mxu0 0.0
        %4411 = vmatprep.subr.mxu0 0.0
        %4412 = vmatpush2.msra.mxu0 0.0
        %4413 = vmatprep.subr.mxu0 0.0
        %4414 = vmatpush2.msra.mxu0 0.0
        %4415 = vmatprep.subr.mxu0 0.0
        %4416 = vmatpush2.msra.mxu0 0.0
        %4417 = vmatprep.subr.mxu0 0.0
        %4418 = vmatpush2.msra.mxu0 0.0
        %4419 = vmatprep.subr.mxu0 0.0
        %4420 = vmatpush2.msra.mxu0 0.0
        %4421 = vmatprep.subr.mxu0 0.0
        %4422 = vmatpush2.msra.mxu0 0.0
        %4423 = vmatprep.subr.mxu0 0.0
        %4424 = vmatpush2.msra.mxu0 0.0
        %4425 = vmatprep.subr.mxu0 0.0
        %4426 = vmatpush2.msra.mxu0 0.0
        %4427 = vmatprep.subr.mxu0 0.0
        %4428 = vmatpush2.msra.mxu0 0.0
        %4429 = vmatprep.mubr.f32.mxu0 0.0
        %v4430 = vand.u32 %v737, 4294901760
        %v4431 = vsub.f32 %v737, %v4430
        %v4432 = vand.u32 %v4431, 4294901760
        %4433 = vmatmul.mubr.f32.gmra.mxu0 %v4432
        %v4434 = vpop.f32.mrf.mxu0
        %v4435 = vadd.f32 %v4339, %v4434
        %v4436 = vpop.f32.mrf.mxu0
        %4437 = vmatprep.mubr.f32.mxu0 0.0
        %v4438 = vand.u32 %v740, 4294901760
        %v4439 = vsub.f32 %v740, %v4438
        %v4440 = vand.u32 %v4439, 4294901760
        %4441 = vmatmul.mubr.f32.gmra.mxu0 %v4440
        %v4442 = vpop.f32.mrf.mxu0
        %v4443 = vadd.f32 %v4346, %v4442
        %v4444 = vpop.f32.mrf.mxu0
        %4445 = vmatprep.mubr.f32.mxu0 0.0
        %v4446 = vand.u32 %v743, 4294901760
        %v4447 = vsub.f32 %v743, %v4446
        %v4448 = vand.u32 %v4447, 4294901760
        %4449 = vmatmul.mubr.f32.gmra.mxu0 %v4448
        %v4450 = vpop.f32.mrf.mxu0
        %v4451 = vadd.f32 %v4353, %v4450
        %v4452 = vpop.f32.mrf.mxu0
        %4453 = vmatprep.mubr.f32.mxu0 0.0
        %v4454 = vand.u32 %v746, 4294901760
        %v4455 = vsub.f32 %v746, %v4454
        %v4456 = vand.u32 %v4455, 4294901760
        %4457 = vmatmul.mubr.f32.gmra.mxu0 %v4456
        %v4458 = vpop.f32.mrf.mxu0
        %v4459 = vadd.f32 %v4360, %v4458
        %v4460 = vpop.f32.mrf.mxu0
        %4461 = vdwg.mxu0
        %4462 = vmatprep.subr.mxu0 0.0
        %4463 = vmatpush1.msra.mxu0 0.0
        %4464 = vmatprep.subr.mxu0 0.0
        %4465 = vmatpush1.msra.mxu0 0.0
        %4466 = vmatprep.subr.mxu0 0.0
        %4467 = vmatpush1.msra.mxu0 0.0
        %4468 = vmatprep.subr.mxu0 0.0
        %4469 = vmatpush1.msra.mxu0 0.0
        %4470 = vmatprep.subr.mxu0 0.0
        %4471 = vmatpush1.msra.mxu0 0.0
        %4472 = vmatprep.subr.mxu0 0.0
        %4473 = vmatpush1.msra.mxu0 0.0
        %4474 = vmatprep.subr.mxu0 0.0
        %4475 = vmatpush1.msra.mxu0 0.0
        %4476 = vmatprep.subr.mxu0 0.0
        %4477 = vmatpush1.msra.mxu0 0.0
        %4478 = vmatprep.subr.mxu0 0.0
        %4479 = vmatpush1.msra.mxu0 0.0
        %4480 = vmatprep.subr.mxu0 0.0
        %4481 = vmatpush1.msra.mxu0 0.0
        %4482 = vmatprep.subr.mxu0 0.0
        %4483 = vmatpush1.msra.mxu0 0.0
        %4484 = vmatprep.subr.mxu0 0.0
        %4485 = vmatpush1.msra.mxu0 0.0
        %4486 = vmatprep.subr.mxu0 0.0
        %4487 = vmatpush1.msra.mxu0 0.0
        %4488 = vmatprep.subr.mxu0 0.0
        %4489 = vmatpush1.msra.mxu0 0.0
        %4490 = vmatprep.subr.mxu0 0.0
        %v4491 = vand.u32 %v4057, 4294901760
        %v4492 = vsub.f32 %v4057, %v4491
        %v4493 = vand.u32 %v4492, 4294901760
        %4494 = vmatpush1.msra.mxu0 %v4493
        %4495 = vmatprep.subr.mxu0 0.0
        %v4496 = vand.u32 %v4051, 4294901760
        %v4497 = vsub.f32 %v4051, %v4496
        %v4498 = vand.u32 %v4497, 4294901760
        %4499 = vmatpush1.msra.mxu0 %v4498
        %4500 = vmatprep.subr.mxu0 0.0
        %4501 = vmatpush2.msra.mxu0 0.0
        %4502 = vmatprep.subr.mxu0 0.0
        %4503 = vmatpush2.msra.mxu0 0.0
        %4504 = vmatprep.subr.mxu0 0.0
        %4505 = vmatpush2.msra.mxu0 0.0
        %4506 = vmatprep.subr.mxu0 0.0
        %4507 = vmatpush2.msra.mxu0 0.0
        %4508 = vmatprep.subr.mxu0 0.0
        %4509 = vmatpush2.msra.mxu0 0.0
        %4510 = vmatprep.subr.mxu0 0.0
        %4511 = vmatpush2.msra.mxu0 0.0
        %4512 = vmatprep.subr.mxu0 0.0
        %4513 = vmatpush2.msra.mxu0 0.0
        %4514 = vmatprep.subr.mxu0 0.0
        %4515 = vmatpush2.msra.mxu0 0.0
        %4516 = vmatprep.subr.mxu0 0.0
        %4517 = vmatpush2.msra.mxu0 0.0
        %4518 = vmatprep.subr.mxu0 0.0
        %4519 = vmatpush2.msra.mxu0 0.0
        %4520 = vmatprep.subr.mxu0 0.0
        %4521 = vmatpush2.msra.mxu0 0.0
        %4522 = vmatprep.subr.mxu0 0.0
        %4523 = vmatpush2.msra.mxu0 0.0
        %4524 = vmatprep.subr.mxu0 0.0
        %4525 = vmatpush2.msra.mxu0 0.0
        %4526 = vmatprep.subr.mxu0 0.0
        %4527 = vmatpush2.msra.mxu0 0.0
        %4528 = vmatprep.subr.mxu0 0.0
        %4529 = vmatpush2.msra.mxu0 0.0
        %4530 = vmatprep.subr.mxu0 0.0
        %4531 = vmatpush2.msra.mxu0 0.0
        %4532 = vmatprep.mubr.f32.mxu0 0.0
        %v4533 = vand.u32 %v737, 4294901760
        %4534 = vmatmul.mubr.f32.gmra.mxu0 %v4533
        %v4535 = vpop.f32.mrf.mxu0
        %v4536 = vadd.f32 %v4435, %v4535
        %v4537 = vpop.f32.mrf.mxu0
        %4538 = vmatprep.mubr.f32.mxu0 0.0
        %v4539 = vand.u32 %v740, 4294901760
        %4540 = vmatmul.mubr.f32.gmra.mxu0 %v4539
        %v4541 = vpop.f32.mrf.mxu0
        %v4542 = vadd.f32 %v4443, %v4541
        %v4543 = vpop.f32.mrf.mxu0
        %4544 = vmatprep.mubr.f32.mxu0 0.0
        %v4545 = vand.u32 %v743, 4294901760
        %4546 = vmatmul.mubr.f32.gmra.mxu0 %v4545
        %v4547 = vpop.f32.mrf.mxu0
        %v4548 = vadd.f32 %v4451, %v4547
        %v4549 = vpop.f32.mrf.mxu0
        %4550 = vmatprep.mubr.f32.mxu0 0.0
        %v4551 = vand.u32 %v746, 4294901760
        %4552 = vmatmul.mubr.f32.gmra.mxu0 %v4551
        %v4553 = vpop.f32.mrf.mxu0
        %v4554 = vadd.f32 %v4459, %v4553
        %v4555 = vpop.f32.mrf.mxu0
        %4556 = vdwg.mxu0
        %4557 = vmatprep.subr.mxu0 0.0
        %4558 = vmatpush1.msra.mxu0 0.0
        %4559 = vmatprep.subr.mxu0 0.0
        %4560 = vmatpush1.msra.mxu0 0.0
        %4561 = vmatprep.subr.mxu0 0.0
        %4562 = vmatpush1.msra.mxu0 0.0
        %4563 = vmatprep.subr.mxu0 0.0
        %4564 = vmatpush1.msra.mxu0 0.0
        %4565 = vmatprep.subr.mxu0 0.0
        %4566 = vmatpush1.msra.mxu0 0.0
        %4567 = vmatprep.subr.mxu0 0.0
        %4568 = vmatpush1.msra.mxu0 0.0
        %4569 = vmatprep.subr.mxu0 0.0
        %4570 = vmatpush1.msra.mxu0 0.0
        %4571 = vmatprep.subr.mxu0 0.0
        %4572 = vmatpush1.msra.mxu0 0.0
        %4573 = vmatprep.subr.mxu0 0.0
        %4574 = vmatpush1.msra.mxu0 0.0
        %4575 = vmatprep.subr.mxu0 0.0
        %4576 = vmatpush1.msra.mxu0 0.0
        %4577 = vmatprep.subr.mxu0 0.0
        %4578 = vmatpush1.msra.mxu0 0.0
        %4579 = vmatprep.subr.mxu0 0.0
        %4580 = vmatpush1.msra.mxu0 0.0
        %4581 = vmatprep.subr.mxu0 0.0
        %4582 = vmatpush1.msra.mxu0 0.0
        %4583 = vmatprep.subr.mxu0 0.0
        %4584 = vmatpush1.msra.mxu0 0.0
        %4585 = vmatprep.subr.mxu0 0.0
        %v4586 = vand.u32 %v4057, 4294901760
        %4587 = vmatpush1.msra.mxu0 %v4586
        %4588 = vmatprep.subr.mxu0 0.0
        %v4589 = vand.u32 %v4051, 4294901760
        %4590 = vmatpush1.msra.mxu0 %v4589
        %4591 = vmatprep.subr.mxu0 0.0
        %4592 = vmatpush2.msra.mxu0 0.0
        %4593 = vmatprep.subr.mxu0 0.0
        %4594 = vmatpush2.msra.mxu0 0.0
        %4595 = vmatprep.subr.mxu0 0.0
        %4596 = vmatpush2.msra.mxu0 0.0
        %4597 = vmatprep.subr.mxu0 0.0
        %4598 = vmatpush2.msra.mxu0 0.0
        %4599 = vmatprep.subr.mxu0 0.0
        %4600 = vmatpush2.msra.mxu0 0.0
        %4601 = vmatprep.subr.mxu0 0.0
        %4602 = vmatpush2.msra.mxu0 0.0
        %4603 = vmatprep.subr.mxu0 0.0
        %4604 = vmatpush2.msra.mxu0 0.0
        %4605 = vmatprep.subr.mxu0 0.0
        %4606 = vmatpush2.msra.mxu0 0.0
        %4607 = vmatprep.subr.mxu0 0.0
        %4608 = vmatpush2.msra.mxu0 0.0
        %4609 = vmatprep.subr.mxu0 0.0
        %4610 = vmatpush2.msra.mxu0 0.0
        %4611 = vmatprep.subr.mxu0 0.0
        %4612 = vmatpush2.msra.mxu0 0.0
        %4613 = vmatprep.subr.mxu0 0.0
        %4614 = vmatpush2.msra.mxu0 0.0
        %4615 = vmatprep.subr.mxu0 0.0
        %4616 = vmatpush2.msra.mxu0 0.0
        %4617 = vmatprep.subr.mxu0 0.0
        %4618 = vmatpush2.msra.mxu0 0.0
        %4619 = vmatprep.subr.mxu0 0.0
        %4620 = vmatpush2.msra.mxu0 0.0
        %4621 = vmatprep.subr.mxu0 0.0
        %4622 = vmatpush2.msra.mxu0 0.0
        %4623 = vmatprep.mubr.f32.mxu0 0.0
        %v4624 = vand.u32 %v737, 4294901760
        %4625 = vmatmul.mubr.f32.gmra.mxu0 %v4624
        %v4626 = vpop.f32.mrf.mxu0
        %v4627 = vadd.f32 %v4536, %v4626
        %v4628 = vpop.f32.mrf.mxu0
        %4629 = vmatprep.mubr.f32.mxu0 0.0
        %v4630 = vand.u32 %v740, 4294901760
        %4631 = vmatmul.mubr.f32.gmra.mxu0 %v4630
        %v4632 = vpop.f32.mrf.mxu0
        %v4633 = vadd.f32 %v4542, %v4632
        %v4634 = vpop.f32.mrf.mxu0
        %4635 = vmatprep.mubr.f32.mxu0 0.0
        %v4636 = vand.u32 %v743, 4294901760
        %4637 = vmatmul.mubr.f32.gmra.mxu0 %v4636
        %v4638 = vpop.f32.mrf.mxu0
        %v4639 = vadd.f32 %v4548, %v4638
        %v4640 = vpop.f32.mrf.mxu0
        %4641 = vmatprep.mubr.f32.mxu0 0.0
        %v4642 = vand.u32 %v746, 4294901760
        %4643 = vmatmul.mubr.f32.gmra.mxu0 %v4642
        %v4644 = vpop.f32.mrf.mxu0
        %v4645 = vadd.f32 %v4554, %v4644
        %v4646 = vpop.f32.mrf.mxu0
        %4647 = vdwg.mxu0
        %s4648 = scalar_lea.vmem %s216, 96 [#allocation8]
        %4649 = vst.msk [vmem:[%s4648] sm:$0xff] %vm1336, %v4627
        %4650 = vst.msk [vmem:[%s4648 + $0x8] sm:$0xff] %vm1336, %v4633
        %4651 = vst.msk [vmem:[%s4648 + $0x10] sm:$0xff] %vm1336, %v4639
        %4652 = vst.msk [vmem:[%s4648 + $0x18] sm:$0xff] %vm1336, %v4645
        %s4653 = sand.u32 %s95, 1
        %s4654 = scalar_lea.sflag [#allocation4], %s4653
        %s4655 = sand.u32 %s95, 1
        %s4656 = smul.addr %s4655, 128
        %s4657 = scalar_lea.vmem [#allocation8], %s4656
        // Predicated region
        $region45: #{interpolate_bilinear_x2.1} parent=31 // pred_check
          %p4658 = pneg %p105
        $region46: #{interpolate_bilinear_x2.1} parent=31 // pred_check_branch
          %4660 = sbr.rel (%p4658) target = $region48
        $region47: #{interpolate_bilinear_x2.1} parent=31 // pred_region
          %s4661 = smul.u32 4, %s19
          %s4663 = ssub.s32 2048, 2048
          %4664 = vsyncadd %s4654, %s4663
          %s4665 = smul.addr %s4661, 4
          %s4666 = smul.addr %s4665, 128
          %s4667 = scalar_lea.hbm %s3, %s4666
          %s4668 = sshll.u32 %s4657, 4
          %s4669 = int_to_ptr.vmem [resolvable:$true] %s4668
          %4674 = dma.vmem_to_hbm [thread:$0]  %s4669, 2048, %s4667, %s4654, 128, 128, 8
        $region48: #{interpolate_bilinear_x2.1} parent=31 // pred_fallthru
          _
      $region32: #{interpolate_bilinear_x2.1} parent=5 // pred_fallthru
        _
      %p4675 = scmp.le.s32.totalorder 2, %s14
      // Predicated region
      $region49: #{interpolate_bilinear_x2.1} parent=5 // pred_check
        %p4676 = pneg %p4675
      $region50: #{interpolate_bilinear_x2.1} parent=5 // pred_check_branch
        %4678 = sbr.rel (%p4676) target = $region52
      $region51: #{interpolate_bilinear_x2.1} parent=5 // pred_region
        %s4679 = ssub.s32 %s14, 2
        // Predicated region
        $region53: #{interpolate_bilinear_x2.1} parent=51 // pred_check
          %p4680 = pneg %p111
        $region54: #{interpolate_bilinear_x2.1} parent=51 // pred_check_branch
          %4682 = sbr.rel (%p4680) target = $region56
        $region55: #{interpolate_bilinear_x2.1} parent=51 // pred_region
          %s4683 = sand.u32 %s96, 1
          %s4684 = scalar_lea.sflag [#allocation4], %s4683
          %s4685 = sand.u32 %s96, 1
          %s4686 = smul.addr %s4685, 128
          %s4687 = scalar_lea.vmem [#allocation8], %s4686
          %4688 = dma.done %s4684, 2048
        $region56: #{interpolate_bilinear_x2.1} parent=51 // pred_fallthru
          _
      $region52: #{interpolate_bilinear_x2.1} parent=5 // pred_fallthru
        _
    $region6: #{interpolate_bilinear_x2.1} parent=1 // loop_footer
      %s18 = sadd.s32 1, %s14
    $region7: #{interpolate_bilinear_x2.1} parent=1 // loop_footer_branch
      %13 = sbr.rel target = $region3
    $region8: #{interpolate_bilinear_x2.1} parent=1 // loop_exit
      _
    %4689 = vsyncpa [#allocation3], 1
    %s4690 = scalar_lea.sflag [#allocation3], 1
    %4691 = vsyncpa %s4690, 1
    %4692 = vsyncpa [#allocation6], 1
    %4693 = vsyncpa [#allocation4], 1
    %s4694 = scalar_lea.sflag [#allocation4], 1
    %4695 = vsyncpa %s4694, 1

</llo_original>
